<compile_context>
chip_gen: v7x
topology: tpu7x:2x2x1
jax: 0.10.0
libtpu: 0.0.40
codegen_flags: <defaults>
</compile_context>

<pallas_src>
import functools

import jax
import jax.numpy as jnp
from jax.experimental import pallas as pl
from jax.experimental.pallas import tpu as pltpu

LANES = 128
CHANNELS = (3, 12, 24, 48)          # Cin -> 12 -> 24 -> 48, as in the PyTorch module
_BN_TARGETS = (8, 32, 64)           # images per grid step target, per layer (small layers: more)


def _divisor_leq(n, cap):
    d = max(1, min(n, cap))
    while n % d:
        d -= 1
    return d


# ------------------------------- Pallas kernel --------------------------------
def _conv_s2d_kernel(b_ref, w_ref, bias_ref, o_ref, *, oh, whp, ch, gn, bn):
    """2x2-tap conv (= 4x4/s2 conv on the space-to-depth input) + bias + ReLU.

    b_ref:    (bn, oh+1, whp, 128)   s2d input (width padded to whp, channels zero-padded)
    w_ref:    (4, 128, 128)          per-tap weight matrices, tap q = 2*qi + qj
    bias_ref: (1, 128)
    o_ref:    (bn, oh, whp, 128)     out[n,i,j,:] = relu(b + sum_q b[n,i+qi,j+qj,:] @ w[q])
                                     (columns j >= ow are padding, sliced off by the wrapper)
    """
    bias = bias_ref[...]                       # (1, 128) -> broadcast over rows
    mrows = gn * ch * whp                      # M rows per matmul / per store (multiple of 8)

    for g in range(bn // gn):                  # image groups handled per grid step
        n0 = g * gn
        for c in range(oh // ch):              # output-row chunks per image
            i0 = c * ch
            # Two contiguous, sublane-aligned slabs; each is shared by two taps.
            slab0 = b_ref[n0:n0 + gn, i0:i0 + ch, :, :].reshape(mrows, LANES)          # qi = 0
            slab1 = b_ref[n0:n0 + gn, i0 + 1:i0 + 1 + ch, :, :].reshape(mrows, LANES)  # qi = 1
            # Register accumulation of the 4 taps (MXU); no intermediate stores.
            aligned = (jnp.dot(slab0, w_ref[0], preferred_element_type=jnp.float32) +
                       jnp.dot(slab1, w_ref[2], preferred_element_type=jnp.float32))
            shifted = (jnp.dot(slab0, w_ref[1], preferred_element_type=jnp.float32) +
                       jnp.dot(slab1, w_ref[3], preferred_element_type=jnp.float32))
            # Odd-column taps need result[r] += shifted[r + 1]; one XLU roll per chunk.
            acc = aligned + pltpu.roll(shifted, mrows - 1, axis=0)
            out = jnp.maximum(acc + bias, 0.0)
            # Single unmasked, lane/sublane-dense store per chunk.
            o_ref[n0:n0 + gn, i0:i0 + ch, :, :] = out.reshape(gn, ch, whp, LANES)


# ------------------------------ layer wrappers ---------------------------------
def _space_to_depth_input(a, whp):
    """(B, H, W, C) -> (B, H/2+1, whp, 128): spatial pad=1, 2x2 space-to-depth, then zero-pad
    the width to `whp` sublanes and the channels to 128 lanes."""
    B, H, W, C = a.shape
    Hh, Wh = H // 2 + 1, W // 2 + 1
    ap = jnp.pad(a, ((0, 0), (1, 1), (1, 1), (0, 0)))
    s = ap.reshape(B, Hh, 2, Wh, 2, C).transpose(0, 1, 3, 2, 4, 5).reshape(B, Hh, Wh, 4 * C)
    return jnp.pad(s, ((0, 0), (0, 0), (0, whp - Wh), (0, LANES - 4 * C)))


def pack_conv_weights(w_oihw, bias):
    """PyTorch OIHW (Cout, Cin, 4, 4) + (Cout,) -> ((4,128,128) per-tap matrices, (1,128) bias).

    packed[2*qi+qj][(ri*2+rj)*Cin + ci, co] = w[co, ci, 2*qi+ri, 2*qj+rj]
    """
    Cout, Cin, KH, KW = w_oihw.shape
    assert KH == 4 and KW == 4 and 4 * Cin <= LANES and Cout <= LANES
    hwio = jnp.transpose(w_oihw, (2, 3, 1, 0)).astype(jnp.float32)
    packed = jnp.zeros((4, LANES, LANES), jnp.float32)
    for qi in range(2):
        for qj in range(2):
            blk = hwio[2 * qi:2 * qi + 2, 2 * qj:2 * qj + 2].reshape(4 * Cin, Cout)
            packed = packed.at[2 * qi + qj, :4 * Cin, :Cout].set(blk)
    brow = jnp.zeros((1, LANES), jnp.float32).at[0, :Cout].set(bias.astype(jnp.float32))
    return packed, brow


def conv4x4s2_relu(x_nhwc, w_packed, bias_row, cout, bn_target):
    """Conv2d(k=4, s=2, p=1) + bias + ReLU on an NHWC activation via one pallas_call."""
    B, H, W, C = x_nhwc.shape
    assert H % 2 == 0 and W % 2 == 0 and 4 * C <= LANES
    OH, OW = H // 2, W // 2
    Hh, Wh = OH + 1, OW + 1
    Whp = -(-Wh // 8) * 8                                   # width padded to a sublane multiple

    s = _space_to_depth_input(x_nhwc, Whp)

    # Tiling: keep each matmul/accumulator at <= ~128 rows (<= 16 vregs, no spills),
    # >= 2 grid steps when B >= 2 (both v7x TensorCores), bn images per step to amortize
    # per-step pipeline overhead, and (for tiny spatial extents) gn images per matmul.
    ch = _divisor_leq(OH, max(1, 128 // Whp))               # output rows per chunk
    bn = _divisor_leq(B, min(bn_target, B if B < 2 else B // 2))
    gn = _divisor_leq(bn, max(1, 128 // (ch * Whp)))        # images stacked per matmul

    kernel = functools.partial(_conv_s2d_kernel, oh=OH, whp=Whp, ch=ch, gn=gn, bn=bn)
    y = pl.pallas_call(
        kernel,
        out_shape=jax.ShapeDtypeStruct((B, OH, Whp, LANES), jnp.float32),
        grid=(B // bn,),
        in_specs=[
            pl.BlockSpec((bn, Hh, Whp, LANES), lambda i: (i, 0, 0, 0)),
            pl.BlockSpec((4, LANES, LANES), lambda i: (0, 0, 0)),
            pl.BlockSpec((1, LANES), lambda i: (0, 0)),
        ],
        out_specs=pl.BlockSpec((bn, OH, Whp, LANES), lambda i: (i, 0, 0, 0)),
        compiler_params=pltpu.CompilerParams(dimension_semantics=("parallel",)),
    )(s, w_packed, bias_row)
    return y[:, :, :OW, :cout]                              # drop width/lane padding (zeros)


# ------------------------------ model definition -------------------------------
def init_params(key, input_dim=(3, 32, 32)):
    """Deterministic init matching nn.Conv2d shapes: 3 layers, k=4, s=2, p=1."""
    chans = (input_dim[0],) + CHANNELS[1:]
    params = []
    for l in range(3):
        key, kw_, kb_ = jax.random.split(key, 3)
        fan_in = chans[l] * 4 * 4
        bound = 1.0 / float(jnp.sqrt(fan_in))
        w = jax.random.uniform(kw_, (chans[l + 1], chans[l], 4, 4),
                               jnp.float32, -bound, bound)
        b = jax.random.uniform(kb_, (chans[l + 1],), jnp.float32, -bound, bound)
        params.append((w, b))
    return params


def prepare_params(params):
    """Pack conv weights/bias once, outside the jitted forward."""
    return tuple(pack_conv_weights(w, b) for w, b in params)


@functools.partial(jax.jit, static_argnames=("couts",))
def random_projection_forward(x_nchw, packed_params, *, couts):
    x = jnp.transpose(x_nchw, (0, 2, 3, 1))                 # NCHW -> NHWC
    for l, (w4, brow) in enumerate(packed_params):
        x = conv4x4s2_relu(x, w4, brow, couts[l], _BN_TARGETS[l])
    # PyTorch flattens the NCHW output as (C, H, W) -> restore that ordering.
    x = jnp.transpose(x, (0, 3, 1, 2))
    return x.reshape(x.shape[0], -1)


# ----------------------------- pure-JAX reference ------------------------------
def reference_forward(x_nchw, params):
    x = x_nchw
    for w, b in params:
        x = jax.lax.conv_general_dilated(
            x, w, window_strides=(2, 2), padding=((1, 1), (1, 1)),
            dimension_numbers=('NCHW', 'OIHW', 'NCHW'))
        x = jax.nn.relu(x + b.reshape(1, -1, 1, 1))
    return x.reshape(x.shape[0], -1)


if __name__ == "__main__":
    key = jax.random.PRNGKey(0)
    k_params, k_x = jax.random.split(key)
    input_dim = (3, 32, 32)                                 # CIFAR-like, as in the module
    params = init_params(k_params, input_dim)
    packed = prepare_params(params)
    couts = tuple(int(w.shape[0]) for w, _ in params)
    x = jax.random.normal(k_x, (2,) + input_dim, jnp.float32)   # NCHW

    out = jax.block_until_ready(random_projection_forward(x, packed, couts=couts))
    assert out.shape == (2, 48 * 4 * 4), out.shape

    ref = jax.block_until_ready(reference_forward(x, params))
    assert jnp.allclose(out, ref, atol=2e-4, rtol=2e-4), \
        float(jnp.max(jnp.abs(out - ref)))

    print("KERNEL_OK")
</pallas_src>

<mosaic_0001>
module attributes {stable_mosaic.version = 11 : i64} {
  func.func @_conv_s2d_kernel(%arg0: i32, %arg1: memref<1x17x24x128xf32, #tpu.memory_space<vmem>>, %arg2: memref<4x128x128xf32, #tpu.memory_space<vmem>>, %arg3: memref<1x128xf32, #tpu.memory_space<vmem>>, %arg4: memref<1x16x24x128xf32, #tpu.memory_space<vmem>>) attributes {dimension_semantics = [#tpu.dimension_semantics<parallel>], iteration_bounds = array<i64: 2>, scalar_prefetch = 0 : i64, scratch_operands = 0 : i64, tpu.core_type = #tpu.core_type<tc>, window_params = [{transform_indices = @transform_0, window_bounds = array<i64: 1, 17, 24, 128>}, {pipeline_mode = #tpu.pipeline_mode<synchronous>, transform_indices = @transform_1, window_bounds = array<i64: 4, 128, 128>}, {pipeline_mode = #tpu.pipeline_mode<synchronous>, transform_indices = @transform_2, window_bounds = array<i64: 1, 128>}, {transform_indices = @transform_3, window_bounds = array<i64: 1, 16, 24, 128>}]} {
    %c0 = arith.constant 0 : index
    %c0_0 = arith.constant 0 : index
    %0 = vector.load %arg3[%c0, %c0_0] : memref<1x128xf32, #tpu.memory_space<vmem>>, vector<1x128xf32>
    %c0_1 = arith.constant 0 : index
    %c0_2 = arith.constant 0 : index
    %c0_3 = arith.constant 0 : index
    %c0_4 = arith.constant 0 : index
    %1 = vector.load %arg1[%c0_1, %c0_2, %c0_3, %c0_4] : memref<1x17x24x128xf32, #tpu.memory_space<vmem>>, vector<1x4x24x128xf32>
    %2 = vector.shape_cast %1 : vector<1x4x24x128xf32> to vector<96x128xf32>
    %c0_5 = arith.constant 0 : index
    %c1 = arith.constant 1 : index
    %c0_6 = arith.constant 0 : index
    %c0_7 = arith.constant 0 : index
    %3 = vector.load %arg1[%c0_5, %c1, %c0_6, %c0_7] : memref<1x17x24x128xf32, #tpu.memory_space<vmem>>, vector<1x4x24x128xf32>
    %4 = vector.shape_cast %3 : vector<1x4x24x128xf32> to vector<96x128xf32>
    %c0_8 = arith.constant 0 : index
    %c0_9 = arith.constant 0 : index
    %c0_10 = arith.constant 0 : index
    %5 = vector.load %arg2[%c0_8, %c0_9, %c0_10] : memref<4x128x128xf32, #tpu.memory_space<vmem>>, vector<1x128x128xf32>
    %6 = vector.shape_cast %5 : vector<1x128x128xf32> to vector<128x128xf32>
    %cst = arith.constant dense<0.000000e+00> : vector<96x128xf32>
    %7 = tpu.matmul %2, %6, %cst {dimension_numbers = #tpu.dot_dimension_numbers<[1], [0], [0], [1], [0, 0, 1, 1], [], []>} : vector<96x128xf32>, vector<128x128xf32>, vector<96x128xf32> -> vector<96x128xf32>
    %c2 = arith.constant 2 : index
    %c0_11 = arith.constant 0 : index
    %c0_12 = arith.constant 0 : index
    %8 = vector.load %arg2[%c2, %c0_11, %c0_12] : memref<4x128x128xf32, #tpu.memory_space<vmem>>, vector<1x128x128xf32>
    %9 = vector.shape_cast %8 : vector<1x128x128xf32> to vector<128x128xf32>
    %cst_13 = arith.constant dense<0.000000e+00> : vector<96x128xf32>
    %10 = tpu.matmul %4, %9, %cst_13 {dimension_numbers = #tpu.dot_dimension_numbers<[1], [0], [0], [1], [0, 0, 1, 1], [], []>} : vector<96x128xf32>, vector<128x128xf32>, vector<96x128xf32> -> vector<96x128xf32>
    %11 = arith.addf %7, %10 : vector<96x128xf32>
    %c1_14 = arith.constant 1 : index
    %c0_15 = arith.constant 0 : index
    %c0_16 = arith.constant 0 : index
    %12 = vector.load %arg2[%c1_14, %c0_15, %c0_16] : memref<4x128x128xf32, #tpu.memory_space<vmem>>, vector<1x128x128xf32>
    %13 = vector.shape_cast %12 : vector<1x128x128xf32> to vector<128x128xf32>
    %cst_17 = arith.constant dense<0.000000e+00> : vector<96x128xf32>
    %14 = tpu.matmul %2, %13, %cst_17 {dimension_numbers = #tpu.dot_dimension_numbers<[1], [0], [0], [1], [0, 0, 1, 1], [], []>} : vector<96x128xf32>, vector<128x128xf32>, vector<96x128xf32> -> vector<96x128xf32>
    %c3 = arith.constant 3 : index
    %c0_18 = arith.constant 0 : index
    %c0_19 = arith.constant 0 : index
    %15 = vector.load %arg2[%c3, %c0_18, %c0_19] : memref<4x128x128xf32, #tpu.memory_space<vmem>>, vector<1x128x128xf32>
    %16 = vector.shape_cast %15 : vector<1x128x128xf32> to vector<128x128xf32>
    %cst_20 = arith.constant dense<0.000000e+00> : vector<96x128xf32>
    %17 = tpu.matmul %4, %16, %cst_20 {dimension_numbers = #tpu.dot_dimension_numbers<[1], [0], [0], [1], [0, 0, 1, 1], [], []>} : vector<96x128xf32>, vector<128x128xf32>, vector<96x128xf32> -> vector<96x128xf32>
    %18 = arith.addf %14, %17 : vector<96x128xf32>
    %c95_i32 = arith.constant 95 : i32
    %19 = tpu.dynamic_rotate %18 by %c95_i32 dim 0 : vector<96x128xf32>, i32 -> vector<96x128xf32>
    %20 = arith.addf %11, %19 : vector<96x128xf32>
    %21 = vector.broadcast %0 : vector<1x128xf32> to vector<96x128xf32>
    %22 = arith.addf %20, %21 : vector<96x128xf32>
    %cst_21 = arith.constant 0.000000e+00 : f32
    %23 = vector.broadcast %cst_21 : f32 to vector<96x128xf32>
    %24 = arith.maximumf %22, %23 : vector<96x128xf32>
    %25 = vector.shape_cast %24 : vector<96x128xf32> to vector<1x4x24x128xf32>
    %c0_22 = arith.constant 0 : index
    %c0_23 = arith.constant 0 : index
    %c0_24 = arith.constant 0 : index
    %c0_25 = arith.constant 0 : index
    %26 = vector.load %arg4[%c0_22, %c0_23, %c0_24, %c0_25] : memref<1x16x24x128xf32, #tpu.memory_space<vmem>>, vector<1x4x24x128xf32>
    tpu.vector_store %arg4[%c0_22, %c0_23, %c0_24, %c0_25], %25 {strides = array<i32>} : memref<1x16x24x128xf32, #tpu.memory_space<vmem>>, vector<1x4x24x128xf32>,
    %c0_26 = arith.constant 0 : index
    %c4 = arith.constant 4 : index
    %c0_27 = arith.constant 0 : index
    %c0_28 = arith.constant 0 : index
    %27 = vector.load %arg1[%c0_26, %c4, %c0_27, %c0_28] : memref<1x17x24x128xf32, #tpu.memory_space<vmem>>, vector<1x4x24x128xf32>
    %28 = vector.shape_cast %27 : vector<1x4x24x128xf32> to vector<96x128xf32>
    %c0_29 = arith.constant 0 : index
    %c5 = arith.constant 5 : index
    %c0_30 = arith.constant 0 : index
    %c0_31 = arith.constant 0 : index
    %29 = vector.load %arg1[%c0_29, %c5, %c0_30, %c0_31] : memref<1x17x24x128xf32, #tpu.memory_space<vmem>>, vector<1x4x24x128xf32>
    %30 = vector.shape_cast %29 : vector<1x4x24x128xf32> to vector<96x128xf32>
    %c0_32 = arith.constant 0 : index
    %c0_33 = arith.constant 0 : index
    %c0_34 = arith.constant 0 : index
    %31 = vector.load %arg2[%c0_32, %c0_33, %c0_34] : memref<4x128x128xf32, #tpu.memory_space<vmem>>, vector<1x128x128xf32>
    %32 = vector.shape_cast %31 : vector<1x128x128xf32> to vector<128x128xf32>
    %cst_35 = arith.constant dense<0.000000e+00> : vector<96x128xf32>
    %33 = tpu.matmul %28, %32, %cst_35 {dimension_numbers = #tpu.dot_dimension_numbers<[1], [0], [0], [1], [0, 0, 1, 1], [], []>} : vector<96x128xf32>, vector<128x128xf32>, vector<96x128xf32> -> vector<96x128xf32>
    %c2_36 = arith.constant 2 : index
    %c0_37 = arith.constant 0 : index
    %c0_38 = arith.constant 0 : index
    %34 = vector.load %arg2[%c2_36, %c0_37, %c0_38] : memref<4x128x128xf32, #tpu.memory_space<vmem>>, vector<1x128x128xf32>
    %35 = vector.shape_cast %34 : vector<1x128x128xf32> to vector<128x128xf32>
    %cst_39 = arith.constant dense<0.000000e+00> : vector<96x128xf32>
    %36 = tpu.matmul %30, %35, %cst_39 {dimension_numbers = #tpu.dot_dimension_numbers<[1], [0], [0], [1], [0, 0, 1, 1], [], []>} : vector<96x128xf32>, vector<128x128xf32>, vector<96x128xf32> -> vector<96x128xf32>
    %37 = arith.addf %33, %36 : vector<96x128xf32>
    %c1_40 = arith.constant 1 : index
    %c0_41 = arith.constant 0 : index
    %c0_42 = arith.constant 0 : index
    %38 = vector.load %arg2[%c1_40, %c0_41, %c0_42] : memref<4x128x128xf32, #tpu.memory_space<vmem>>, vector<1x128x128xf32>
    %39 = vector.shape_cast %38 : vector<1x128x128xf32> to vector<128x128xf32>
    %cst_43 = arith.constant dense<0.000000e+00> : vector<96x128xf32>
    %40 = tpu.matmul %28, %39, %cst_43 {dimension_numbers = #tpu.dot_dimension_numbers<[1], [0], [0], [1], [0, 0, 1, 1], [], []>} : vector<96x128xf32>, vector<128x128xf32>, vector<96x128xf32> -> vector<96x128xf32>
    %c3_44 = arith.constant 3 : index
    %c0_45 = arith.constant 0 : index
    %c0_46 = arith.constant 0 : index
    %41 = vector.load %arg2[%c3_44, %c0_45, %c0_46] : memref<4x128x128xf32, #tpu.memory_space<vmem>>, vector<1x128x128xf32>
    %42 = vector.shape_cast %41 : vector<1x128x128xf32> to vector<128x128xf32>
    %cst_47 = arith.constant dense<0.000000e+00> : vector<96x128xf32>
    %43 = tpu.matmul %30, %42, %cst_47 {dimension_numbers = #tpu.dot_dimension_numbers<[1], [0], [0], [1], [0, 0, 1, 1], [], []>} : vector<96x128xf32>, vector<128x128xf32>, vector<96x128xf32> -> vector<96x128xf32>
    %44 = arith.addf %40, %43 : vector<96x128xf32>
    %c95_i32_48 = arith.constant 95 : i32
    %45 = tpu.dynamic_rotate %44 by %c95_i32_48 dim 0 : vector<96x128xf32>, i32 -> vector<96x128xf32>
    %46 = arith.addf %37, %45 : vector<96x128xf32>
    %47 = vector.broadcast %0 : vector<1x128xf32> to vector<96x128xf32>
    %48 = arith.addf %46, %47 : vector<96x128xf32>
    %cst_49 = arith.constant 0.000000e+00 : f32
    %49 = vector.broadcast %cst_49 : f32 to vector<96x128xf32>
    %50 = arith.maximumf %48, %49 : vector<96x128xf32>
    %51 = vector.shape_cast %50 : vector<96x128xf32> to vector<1x4x24x128xf32>
    %c0_50 = arith.constant 0 : index
    %c4_51 = arith.constant 4 : index
    %c0_52 = arith.constant 0 : index
    %c0_53 = arith.constant 0 : index
    %52 = vector.load %arg4[%c0_50, %c4_51, %c0_52, %c0_53] : memref<1x16x24x128xf32, #tpu.memory_space<vmem>>, vector<1x4x24x128xf32>
    tpu.vector_store %arg4[%c0_50, %c4_51, %c0_52, %c0_53], %51 {strides = array<i32>} : memref<1x16x24x128xf32, #tpu.memory_space<vmem>>, vector<1x4x24x128xf32>,
    %c0_54 = arith.constant 0 : index
    %c8 = arith.constant 8 : index
    %c0_55 = arith.constant 0 : index
    %c0_56 = arith.constant 0 : index
    %53 = vector.load %arg1[%c0_54, %c8, %c0_55, %c0_56] : memref<1x17x24x128xf32, #tpu.memory_space<vmem>>, vector<1x4x24x128xf32>
    %54 = vector.shape_cast %53 : vector<1x4x24x128xf32> to vector<96x128xf32>
    %c0_57 = arith.constant 0 : index
    %c9 = arith.constant 9 : index
    %c0_58 = arith.constant 0 : index
    %c0_59 = arith.constant 0 : index
    %55 = vector.load %arg1[%c0_57, %c9, %c0_58, %c0_59] : memref<1x17x24x128xf32, #tpu.memory_space<vmem>>, vector<1x4x24x128xf32>
    %56 = vector.shape_cast %55 : vector<1x4x24x128xf32> to vector<96x128xf32>
    %c0_60 = arith.constant 0 : index
    %c0_61 = arith.constant 0 : index
    %c0_62 = arith.constant 0 : index
    %57 = vector.load %arg2[%c0_60, %c0_61, %c0_62] : memref<4x128x128xf32, #tpu.memory_space<vmem>>, vector<1x128x128xf32>
    %58 = vector.shape_cast %57 : vector<1x128x128xf32> to vector<128x128xf32>
    %cst_63 = arith.constant dense<0.000000e+00> : vector<96x128xf32>
    %59 = tpu.matmul %54, %58, %cst_63 {dimension_numbers = #tpu.dot_dimension_numbers<[1], [0], [0], [1], [0, 0, 1, 1], [], []>} : vector<96x128xf32>, vector<128x128xf32>, vector<96x128xf32> -> vector<96x128xf32>
    %c2_64 = arith.constant 2 : index
    %c0_65 = arith.constant 0 : index
    %c0_66 = arith.constant 0 : index
    %60 = vector.load %arg2[%c2_64, %c0_65, %c0_66] : memref<4x128x128xf32, #tpu.memory_space<vmem>>, vector<1x128x128xf32>
    %61 = vector.shape_cast %60 : vector<1x128x128xf32> to vector<128x128xf32>
    %cst_67 = arith.constant dense<0.000000e+00> : vector<96x128xf32>
    %62 = tpu.matmul %56, %61, %cst_67 {dimension_numbers = #tpu.dot_dimension_numbers<[1], [0], [0], [1], [0, 0, 1, 1], [], []>} : vector<96x128xf32>, vector<128x128xf32>, vector<96x128xf32> -> vector<96x128xf32>
    %63 = arith.addf %59, %62 : vector<96x128xf32>
    %c1_68 = arith.constant 1 : index
    %c0_69 = arith.constant 0 : index
    %c0_70 = arith.constant 0 : index
    %64 = vector.load %arg2[%c1_68, %c0_69, %c0_70] : memref<4x128x128xf32, #tpu.memory_space<vmem>>, vector<1x128x128xf32>
    %65 = vector.shape_cast %64 : vector<1x128x128xf32> to vector<128x128xf32>
    %cst_71 = arith.constant dense<0.000000e+00> : vector<96x128xf32>
    %66 = tpu.matmul %54, %65, %cst_71 {dimension_numbers = #tpu.dot_dimension_numbers<[1], [0], [0], [1], [0, 0, 1, 1], [], []>} : vector<96x128xf32>, vector<128x128xf32>, vector<96x128xf32> -> vector<96x128xf32>
    %c3_72 = arith.constant 3 : index
    %c0_73 = arith.constant 0 : index
    %c0_74 = arith.constant 0 : index
    %67 = vector.load %arg2[%c3_72, %c0_73, %c0_74] : memref<4x128x128xf32, #tpu.memory_space<vmem>>, vector<1x128x128xf32>
    %68 = vector.shape_cast %67 : vector<1x128x128xf32> to vector<128x128xf32>
    %cst_75 = arith.constant dense<0.000000e+00> : vector<96x128xf32>
    %69 = tpu.matmul %56, %68, %cst_75 {dimension_numbers = #tpu.dot_dimension_numbers<[1], [0], [0], [1], [0, 0, 1, 1], [], []>} : vector<96x128xf32>, vector<128x128xf32>, vector<96x128xf32> -> vector<96x128xf32>
    %70 = arith.addf %66, %69 : vector<96x128xf32>
    %c95_i32_76 = arith.constant 95 : i32
    %71 = tpu.dynamic_rotate %70 by %c95_i32_76 dim 0 : vector<96x128xf32>, i32 -> vector<96x128xf32>
    %72 = arith.addf %63, %71 : vector<96x128xf32>
    %73 = vector.broadcast %0 : vector<1x128xf32> to vector<96x128xf32>
    %74 = arith.addf %72, %73 : vector<96x128xf32>
    %cst_77 = arith.constant 0.000000e+00 : f32
    %75 = vector.broadcast %cst_77 : f32 to vector<96x128xf32>
    %76 = arith.maximumf %74, %75 : vector<96x128xf32>
    %77 = vector.shape_cast %76 : vector<96x128xf32> to vector<1x4x24x128xf32>
    %c0_78 = arith.constant 0 : index
    %c8_79 = arith.constant 8 : index
    %c0_80 = arith.constant 0 : index
    %c0_81 = arith.constant 0 : index
    %78 = vector.load %arg4[%c0_78, %c8_79, %c0_80, %c0_81] : memref<1x16x24x128xf32, #tpu.memory_space<vmem>>, vector<1x4x24x128xf32>
    tpu.vector_store %arg4[%c0_78, %c8_79, %c0_80, %c0_81], %77 {strides = array<i32>} : memref<1x16x24x128xf32, #tpu.memory_space<vmem>>, vector<1x4x24x128xf32>,
    %c0_82 = arith.constant 0 : index
    %c12 = arith.constant 12 : index
    %c0_83 = arith.constant 0 : index
    %c0_84 = arith.constant 0 : index
    %79 = vector.load %arg1[%c0_82, %c12, %c0_83, %c0_84] : memref<1x17x24x128xf32, #tpu.memory_space<vmem>>, vector<1x4x24x128xf32>
    %80 = vector.shape_cast %79 : vector<1x4x24x128xf32> to vector<96x128xf32>
    %c0_85 = arith.constant 0 : index
    %c13 = arith.constant 13 : index
    %c0_86 = arith.constant 0 : index
    %c0_87 = arith.constant 0 : index
    %81 = vector.load %arg1[%c0_85, %c13, %c0_86, %c0_87] : memref<1x17x24x128xf32, #tpu.memory_space<vmem>>, vector<1x4x24x128xf32>
    %82 = vector.shape_cast %81 : vector<1x4x24x128xf32> to vector<96x128xf32>
    %c0_88 = arith.constant 0 : index
    %c0_89 = arith.constant 0 : index
    %c0_90 = arith.constant 0 : index
    %83 = vector.load %arg2[%c0_88, %c0_89, %c0_90] : memref<4x128x128xf32, #tpu.memory_space<vmem>>, vector<1x128x128xf32>
    %84 = vector.shape_cast %83 : vector<1x128x128xf32> to vector<128x128xf32>
    %cst_91 = arith.constant dense<0.000000e+00> : vector<96x128xf32>
    %85 = tpu.matmul %80, %84, %cst_91 {dimension_numbers = #tpu.dot_dimension_numbers<[1], [0], [0], [1], [0, 0, 1, 1], [], []>} : vector<96x128xf32>, vector<128x128xf32>, vector<96x128xf32> -> vector<96x128xf32>
    %c2_92 = arith.constant 2 : index
    %c0_93 = arith.constant 0 : index
    %c0_94 = arith.constant 0 : index
    %86 = vector.load %arg2[%c2_92, %c0_93, %c0_94] : memref<4x128x128xf32, #tpu.memory_space<vmem>>, vector<1x128x128xf32>
    %87 = vector.shape_cast %86 : vector<1x128x128xf32> to vector<128x128xf32>
    %cst_95 = arith.constant dense<0.000000e+00> : vector<96x128xf32>
    %88 = tpu.matmul %82, %87, %cst_95 {dimension_numbers = #tpu.dot_dimension_numbers<[1], [0], [0], [1], [0, 0, 1, 1], [], []>} : vector<96x128xf32>, vector<128x128xf32>, vector<96x128xf32> -> vector<96x128xf32>
    %89 = arith.addf %85, %88 : vector<96x128xf32>
    %c1_96 = arith.constant 1 : index
    %c0_97 = arith.constant 0 : index
    %c0_98 = arith.constant 0 : index
    %90 = vector.load %arg2[%c1_96, %c0_97, %c0_98] : memref<4x128x128xf32, #tpu.memory_space<vmem>>, vector<1x128x128xf32>
    %91 = vector.shape_cast %90 : vector<1x128x128xf32> to vector<128x128xf32>
    %cst_99 = arith.constant dense<0.000000e+00> : vector<96x128xf32>
    %92 = tpu.matmul %80, %91, %cst_99 {dimension_numbers = #tpu.dot_dimension_numbers<[1], [0], [0], [1], [0, 0, 1, 1], [], []>} : vector<96x128xf32>, vector<128x128xf32>, vector<96x128xf32> -> vector<96x128xf32>
    %c3_100 = arith.constant 3 : index
    %c0_101 = arith.constant 0 : index
    %c0_102 = arith.constant 0 : index
    %93 = vector.load %arg2[%c3_100, %c0_101, %c0_102] : memref<4x128x128xf32, #tpu.memory_space<vmem>>, vector<1x128x128xf32>
    %94 = vector.shape_cast %93 : vector<1x128x128xf32> to vector<128x128xf32>
    %cst_103 = arith.constant dense<0.000000e+00> : vector<96x128xf32>
    %95 = tpu.matmul %82, %94, %cst_103 {dimension_numbers = #tpu.dot_dimension_numbers<[1], [0], [0], [1], [0, 0, 1, 1], [], []>} : vector<96x128xf32>, vector<128x128xf32>, vector<96x128xf32> -> vector<96x128xf32>
    %96 = arith.addf %92, %95 : vector<96x128xf32>
    %c95_i32_104 = arith.constant 95 : i32
    %97 = tpu.dynamic_rotate %96 by %c95_i32_104 dim 0 : vector<96x128xf32>, i32 -> vector<96x128xf32>
    %98 = arith.addf %89, %97 : vector<96x128xf32>
    %99 = vector.broadcast %0 : vector<1x128xf32> to vector<96x128xf32>
    %100 = arith.addf %98, %99 : vector<96x128xf32>
    %cst_105 = arith.constant 0.000000e+00 : f32
    %101 = vector.broadcast %cst_105 : f32 to vector<96x128xf32>
    %102 = arith.maximumf %100, %101 : vector<96x128xf32>
    %103 = vector.shape_cast %102 : vector<96x128xf32> to vector<1x4x24x128xf32>
    %c0_106 = arith.constant 0 : index
    %c12_107 = arith.constant 12 : index
    %c0_108 = arith.constant 0 : index
    %c0_109 = arith.constant 0 : index
    %104 = vector.load %arg4[%c0_106, %c12_107, %c0_108, %c0_109] : memref<1x16x24x128xf32, #tpu.memory_space<vmem>>, vector<1x4x24x128xf32>
    tpu.vector_store %arg4[%c0_106, %c12_107, %c0_108, %c0_109], %103 {strides = array<i32>} : memref<1x16x24x128xf32, #tpu.memory_space<vmem>>, vector<1x4x24x128xf32>,
    return
  }
  func.func @transform_0(%arg0: i32) -> (i32, i32, i32, i32) {
    %c0_i32 = arith.constant 0 : i32
    %c0_i32_0 = arith.constant 0 : i32
    %c0_i32_1 = arith.constant 0 : i32
    %c0_i32_2 = arith.constant 0 : i32
    return %arg0, %c0_i32, %c0_i32_0, %c0_i32_1 : i32, i32, i32, i32
  }
  func.func @transform_1(%arg0: i32) -> (i32, i32, i32) {
    %c0_i32 = arith.constant 0 : i32
    %c0_i32_0 = arith.constant 0 : i32
    %c0_i32_1 = arith.constant 0 : i32
    %c0_i32_2 = arith.constant 0 : i32
    return %c0_i32, %c0_i32_0, %c0_i32_1 : i32, i32, i32
  }
  func.func @transform_2(%arg0: i32) -> (i32, i32) {
    %c0_i32 = arith.constant 0 : i32
    %c0_i32_0 = arith.constant 0 : i32
    %c0_i32_1 = arith.constant 0 : i32
    return %c0_i32, %c0_i32_0 : i32, i32
  }
  func.func @transform_3(%arg0: i32) -> (i32, i32, i32, i32) {
    %c0_i32 = arith.constant 0 : i32
    %c0_i32_0 = arith.constant 0 : i32
    %c0_i32_1 = arith.constant 0 : i32
    %c0_i32_2 = arith.constant 0 : i32
    return %arg0, %c0_i32, %c0_i32_0, %c0_i32_1 : i32, i32, i32, i32
  }
}

module attributes {stable_mosaic.version = 11 : i64} {
  func.func @_conv_s2d_kernel(%arg0: i32, %arg1: memref<1x9x16x128xf32, #tpu.memory_space<vmem>>, %arg2: memref<4x128x128xf32, #tpu.memory_space<vmem>>, %arg3: memref<1x128xf32, #tpu.memory_space<vmem>>, %arg4: memref<1x8x16x128xf32, #tpu.memory_space<vmem>>) attributes {dimension_semantics = [#tpu.dimension_semantics<parallel>], iteration_bounds = array<i64: 2>, scalar_prefetch = 0 : i64, scratch_operands = 0 : i64, tpu.core_type = #tpu.core_type<tc>, window_params = [{transform_indices = @transform_0, window_bounds = array<i64: 1, 9, 16, 128>}, {pipeline_mode = #tpu.pipeline_mode<synchronous>, transform_indices = @transform_1, window_bounds = array<i64: 4, 128, 128>}, {pipeline_mode = #tpu.pipeline_mode<synchronous>, transform_indices = @transform_2, window_bounds = array<i64: 1, 128>}, {transform_indices = @transform_3, window_bounds = array<i64: 1, 8, 16, 128>}]} {
    %c0 = arith.constant 0 : index
    %c0_0 = arith.constant 0 : index
    %0 = vector.load %arg3[%c0, %c0_0] : memref<1x128xf32, #tpu.memory_space<vmem>>, vector<1x128xf32>
    %c0_1 = arith.constant 0 : index
    %c0_2 = arith.constant 0 : index
    %c0_3 = arith.constant 0 : index
    %c0_4 = arith.constant 0 : index
    %1 = vector.load %arg1[%c0_1, %c0_2, %c0_3, %c0_4] : memref<1x9x16x128xf32, #tpu.memory_space<vmem>>, vector<1x8x16x128xf32>
    %2 = vector.shape_cast %1 : vector<1x8x16x128xf32> to vector<128x128xf32>
    %c0_5 = arith.constant 0 : index
    %c1 = arith.constant 1 : index
    %c0_6 = arith.constant 0 : index
    %c0_7 = arith.constant 0 : index
    %3 = vector.load %arg1[%c0_5, %c1, %c0_6, %c0_7] : memref<1x9x16x128xf32, #tpu.memory_space<vmem>>, vector<1x8x16x128xf32>
    %4 = vector.shape_cast %3 : vector<1x8x16x128xf32> to vector<128x128xf32>
    %c0_8 = arith.constant 0 : index
    %c0_9 = arith.constant 0 : index
    %c0_10 = arith.constant 0 : index
    %5 = vector.load %arg2[%c0_8, %c0_9, %c0_10] : memref<4x128x128xf32, #tpu.memory_space<vmem>>, vector<1x128x128xf32>
    %6 = vector.shape_cast %5 : vector<1x128x128xf32> to vector<128x128xf32>
    %cst = arith.constant dense<0.000000e+00> : vector<128x128xf32>
    %7 = tpu.matmul %2, %6, %cst {dimension_numbers = #tpu.dot_dimension_numbers<[1], [0], [0], [1], [0, 0, 1, 1], [], []>} : vector<128x128xf32>, vector<128x128xf32>, vector<128x128xf32> -> vector<128x128xf32>
    %c2 = arith.constant 2 : index
    %c0_11 = arith.constant 0 : index
    %c0_12 = arith.constant 0 : index
    %8 = vector.load %arg2[%c2, %c0_11, %c0_12] : memref<4x128x128xf32, #tpu.memory_space<vmem>>, vector<1x128x128xf32>
    %9 = vector.shape_cast %8 : vector<1x128x128xf32> to vector<128x128xf32>
    %cst_13 = arith.constant dense<0.000000e+00> : vector<128x128xf32>
    %10 = tpu.matmul %4, %9, %cst_13 {dimension_numbers = #tpu.dot_dimension_numbers<[1], [0], [0], [1], [0, 0, 1, 1], [], []>} : vector<128x128xf32>, vector<128x128xf32>, vector<128x128xf32> -> vector<128x128xf32>
    %11 = arith.addf %7, %10 : vector<128x128xf32>
    %c1_14 = arith.constant 1 : index
    %c0_15 = arith.constant 0 : index
    %c0_16 = arith.constant 0 : index
    %12 = vector.load %arg2[%c1_14, %c0_15, %c0_16] : memref<4x128x128xf32, #tpu.memory_space<vmem>>, vector<1x128x128xf32>
    %13 = vector.shape_cast %12 : vector<1x128x128xf32> to vector<128x128xf32>
    %cst_17 = arith.constant dense<0.000000e+00> : vector<128x128xf32>
    %14 = tpu.matmul %2, %13, %cst_17 {dimension_numbers = #tpu.dot_dimension_numbers<[1], [0], [0], [1], [0, 0, 1, 1], [], []>} : vector<128x128xf32>, vector<128x128xf32>, vector<128x128xf32> -> vector<128x128xf32>
    %c3 = arith.constant 3 : index
    %c0_18 = arith.constant 0 : index
    %c0_19 = arith.constant 0 : index
    %15 = vector.load %arg2[%c3, %c0_18, %c0_19] : memref<4x128x128xf32, #tpu.memory_space<vmem>>, vector<1x128x128xf32>
    %16 = vector.shape_cast %15 : vector<1x128x128xf32> to vector<128x128xf32>
    %cst_20 = arith.constant dense<0.000000e+00> : vector<128x128xf32>
    %17 = tpu.matmul %4, %16, %cst_20 {dimension_numbers = #tpu.dot_dimension_numbers<[1], [0], [0], [1], [0, 0, 1, 1], [], []>} : vector<128x128xf32>, vector<128x128xf32>, vector<128x128xf32> -> vector<128x128xf32>
    %18 = arith.addf %14, %17 : vector<128x128xf32>
    %c127_i32 = arith.constant 127 : i32
    %19 = tpu.dynamic_rotate %18 by %c127_i32 dim 0 : vector<128x128xf32>, i32 -> vector<128x128xf32>
    %20 = arith.addf %11, %19 : vector<128x128xf32>
    %21 = vector.broadcast %0 : vector<1x128xf32> to vector<128x128xf32>
    %22 = arith.addf %20, %21 : vector<128x128xf32>
    %cst_21 = arith.constant 0.000000e+00 : f32
    %23 = vector.broadcast %cst_21 : f32 to vector<128x128xf32>
    %24 = arith.maximumf %22, %23 : vector<128x128xf32>
    %25 = vector.shape_cast %24 : vector<128x128xf32> to vector<1x8x16x128xf32>
    %c0_22 = arith.constant 0 : index
    %c0_23 = arith.constant 0 : index
    %c0_24 = arith.constant 0 : index
    %c0_25 = arith.constant 0 : index
    %26 = vector.load %arg4[%c0_22, %c0_23, %c0_24, %c0_25] : memref<1x8x16x128xf32, #tpu.memory_space<vmem>>, vector<1x8x16x128xf32>
    tpu.vector_store %arg4[%c0_22, %c0_23, %c0_24, %c0_25], %25 {strides = array<i32>} : memref<1x8x16x128xf32, #tpu.memory_space<vmem>>, vector<1x8x16x128xf32>,
    return
  }
  func.func @transform_0(%arg0: i32) -> (i32, i32, i32, i32) {
    %c0_i32 = arith.constant 0 : i32
    %c0_i32_0 = arith.constant 0 : i32
    %c0_i32_1 = arith.constant 0 : i32
    %c0_i32_2 = arith.constant 0 : i32
    return %arg0, %c0_i32, %c0_i32_0, %c0_i32_1 : i32, i32, i32, i32
  }
  func.func @transform_1(%arg0: i32) -> (i32, i32, i32) {
    %c0_i32 = arith.constant 0 : i32
    %c0_i32_0 = arith.constant 0 : i32
    %c0_i32_1 = arith.constant 0 : i32
    %c0_i32_2 = arith.constant 0 : i32
    return %c0_i32, %c0_i32_0, %c0_i32_1 : i32, i32, i32
  }
  func.func @transform_2(%arg0: i32) -> (i32, i32) {
    %c0_i32 = arith.constant 0 : i32
    %c0_i32_0 = arith.constant 0 : i32
    %c0_i32_1 = arith.constant 0 : i32
    return %c0_i32, %c0_i32_0 : i32, i32
  }
  func.func @transform_3(%arg0: i32) -> (i32, i32, i32, i32) {
    %c0_i32 = arith.constant 0 : i32
    %c0_i32_0 = arith.constant 0 : i32
    %c0_i32_1 = arith.constant 0 : i32
    %c0_i32_2 = arith.constant 0 : i32
    return %arg0, %c0_i32, %c0_i32_0, %c0_i32_1 : i32, i32, i32, i32
  }
}

module attributes {stable_mosaic.version = 11 : i64} {
  func.func @_conv_s2d_kernel(%arg0: i32, %arg1: memref<1x5x8x128xf32, #tpu.memory_space<vmem>>, %arg2: memref<4x128x128xf32, #tpu.memory_space<vmem>>, %arg3: memref<1x128xf32, #tpu.memory_space<vmem>>, %arg4: memref<1x4x8x128xf32, #tpu.memory_space<vmem>>) attributes {dimension_semantics = [#tpu.dimension_semantics<parallel>], iteration_bounds = array<i64: 2>, scalar_prefetch = 0 : i64, scratch_operands = 0 : i64, tpu.core_type = #tpu.core_type<tc>, window_params = [{transform_indices = @transform_0, window_bounds = array<i64: 1, 5, 8, 128>}, {pipeline_mode = #tpu.pipeline_mode<synchronous>, transform_indices = @transform_1, window_bounds = array<i64: 4, 128, 128>}, {pipeline_mode = #tpu.pipeline_mode<synchronous>, transform_indices = @transform_2, window_bounds = array<i64: 1, 128>}, {transform_indices = @transform_3, window_bounds = array<i64: 1, 4, 8, 128>}]} {
    %c0 = arith.constant 0 : index
    %c0_0 = arith.constant 0 : index
    %0 = vector.load %arg3[%c0, %c0_0] : memref<1x128xf32, #tpu.memory_space<vmem>>, vector<1x128xf32>
    %c0_1 = arith.constant 0 : index
    %c0_2 = arith.constant 0 : index
    %c0_3 = arith.constant 0 : index
    %c0_4 = arith.constant 0 : index
    %1 = vector.load %arg1[%c0_1, %c0_2, %c0_3, %c0_4] : memref<1x5x8x128xf32, #tpu.memory_space<vmem>>, vector<1x4x8x128xf32>
    %2 = vector.shape_cast %1 : vector<1x4x8x128xf32> to vector<32x128xf32>
    %c0_5 = arith.constant 0 : index
    %c1 = arith.constant 1 : index
    %c0_6 = arith.constant 0 : index
    %c0_7 = arith.constant 0 : index
    %3 = vector.load %arg1[%c0_5, %c1, %c0_6, %c0_7] : memref<1x5x8x128xf32, #tpu.memory_space<vmem>>, vector<1x4x8x128xf32>
    %4 = vector.shape_cast %3 : vector<1x4x8x128xf32> to vector<32x128xf32>
    %c0_8 = arith.constant 0 : index
    %c0_9 = arith.constant 0 : index
    %c0_10 = arith.constant 0 : index
    %5 = vector.load %arg2[%c0_8, %c0_9, %c0_10] : memref<4x128x128xf32, #tpu.memory_space<vmem>>, vector<1x128x128xf32>
    %6 = vector.shape_cast %5 : vector<1x128x128xf32> to vector<128x128xf32>
    %cst = arith.constant dense<0.000000e+00> : vector<32x128xf32>
    %7 = tpu.matmul %2, %6, %cst {dimension_numbers = #tpu.dot_dimension_numbers<[1], [0], [0], [1], [0, 0, 1, 1], [], []>} : vector<32x128xf32>, vector<128x128xf32>, vector<32x128xf32> -> vector<32x128xf32>
    %c2 = arith.constant 2 : index
    %c0_11 = arith.constant 0 : index
    %c0_12 = arith.constant 0 : index
    %8 = vector.load %arg2[%c2, %c0_11, %c0_12] : memref<4x128x128xf32, #tpu.memory_space<vmem>>, vector<1x128x128xf32>
    %9 = vector.shape_cast %8 : vector<1x128x128xf32> to vector<128x128xf32>
    %cst_13 = arith.constant dense<0.000000e+00> : vector<32x128xf32>
    %10 = tpu.matmul %4, %9, %cst_13 {dimension_numbers = #tpu.dot_dimension_numbers<[1], [0], [0], [1], [0, 0, 1, 1], [], []>} : vector<32x128xf32>, vector<128x128xf32>, vector<32x128xf32> -> vector<32x128xf32>
    %11 = arith.addf %7, %10 : vector<32x128xf32>
    %c1_14 = arith.constant 1 : index
    %c0_15 = arith.constant 0 : index
    %c0_16 = arith.constant 0 : index
    %12 = vector.load %arg2[%c1_14, %c0_15, %c0_16] : memref<4x128x128xf32, #tpu.memory_space<vmem>>, vector<1x128x128xf32>
    %13 = vector.shape_cast %12 : vector<1x128x128xf32> to vector<128x128xf32>
    %cst_17 = arith.constant dense<0.000000e+00> : vector<32x128xf32>
    %14 = tpu.matmul %2, %13, %cst_17 {dimension_numbers = #tpu.dot_dimension_numbers<[1], [0], [0], [1], [0, 0, 1, 1], [], []>} : vector<32x128xf32>, vector<128x128xf32>, vector<32x128xf32> -> vector<32x128xf32>
    %c3 = arith.constant 3 : index
    %c0_18 = arith.constant 0 : index
    %c0_19 = arith.constant 0 : index
    %15 = vector.load %arg2[%c3, %c0_18, %c0_19] : memref<4x128x128xf32, #tpu.memory_space<vmem>>, vector<1x128x128xf32>
    %16 = vector.shape_cast %15 : vector<1x128x128xf32> to vector<128x128xf32>
    %cst_20 = arith.constant dense<0.000000e+00> : vector<32x128xf32>
    %17 = tpu.matmul %4, %16, %cst_20 {dimension_numbers = #tpu.dot_dimension_numbers<[1], [0], [0], [1], [0, 0, 1, 1], [], []>} : vector<32x128xf32>, vector<128x128xf32>, vector<32x128xf32> -> vector<32x128xf32>
    %18 = arith.addf %14, %17 : vector<32x128xf32>
    %c31_i32 = arith.constant 31 : i32
    %19 = tpu.dynamic_rotate %18 by %c31_i32 dim 0 : vector<32x128xf32>, i32 -> vector<32x128xf32>
    %20 = arith.addf %11, %19 : vector<32x128xf32>
    %21 = vector.broadcast %0 : vector<1x128xf32> to vector<32x128xf32>
    %22 = arith.addf %20, %21 : vector<32x128xf32>
    %cst_21 = arith.constant 0.000000e+00 : f32
    %23 = vector.broadcast %cst_21 : f32 to vector<32x128xf32>
    %24 = arith.maximumf %22, %23 : vector<32x128xf32>
    %25 = vector.shape_cast %24 : vector<32x128xf32> to vector<1x4x8x128xf32>
    %c0_22 = arith.constant 0 : index
    %c0_23 = arith.constant 0 : index
    %c0_24 = arith.constant 0 : index
    %c0_25 = arith.constant 0 : index
    %26 = vector.load %arg4[%c0_22, %c0_23, %c0_24, %c0_25] : memref<1x4x8x128xf32, #tpu.memory_space<vmem>>, vector<1x4x8x128xf32>
    tpu.vector_store %arg4[%c0_22, %c0_23, %c0_24, %c0_25], %25 {strides = array<i32>} : memref<1x4x8x128xf32, #tpu.memory_space<vmem>>, vector<1x4x8x128xf32>,
    return
  }
  func.func @transform_0(%arg0: i32) -> (i32, i32, i32, i32) {
    %c0_i32 = arith.constant 0 : i32
    %c0_i32_0 = arith.constant 0 : i32
    %c0_i32_1 = arith.constant 0 : i32
    %c0_i32_2 = arith.constant 0 : i32
    return %arg0, %c0_i32, %c0_i32_0, %c0_i32_1 : i32, i32, i32, i32
  }
  func.func @transform_1(%arg0: i32) -> (i32, i32, i32) {
    %c0_i32 = arith.constant 0 : i32
    %c0_i32_0 = arith.constant 0 : i32
    %c0_i32_1 = arith.constant 0 : i32
    %c0_i32_2 = arith.constant 0 : i32
    return %c0_i32, %c0_i32_0, %c0_i32_1 : i32, i32, i32
  }
  func.func @transform_2(%arg0: i32) -> (i32, i32) {
    %c0_i32 = arith.constant 0 : i32
    %c0_i32_0 = arith.constant 0 : i32
    %c0_i32_1 = arith.constant 0 : i32
    return %c0_i32, %c0_i32_0 : i32, i32
  }
  func.func @transform_3(%arg0: i32) -> (i32, i32, i32, i32) {
    %c0_i32 = arith.constant 0 : i32
    %c0_i32_0 = arith.constant 0 : i32
    %c0_i32_1 = arith.constant 0 : i32
    %c0_i32_2 = arith.constant 0 : i32
    return %arg0, %c0_i32, %c0_i32_0, %c0_i32_1 : i32, i32, i32, i32
  }
}

</mosaic_0001>

<llo_original>
// kernel: random_projection_forward.3
$region0: #{random_projection_forward.3}
  #allocation0 [shape = 'u32[]', space=smem, size = 0x4, offset = 0x4, fixed_abs, tag = 'smem constant byte address 0x4 - core index']
  #allocation1 [shape = 'u32[144,128]{1,0:T(1,128)}', space=vmem, size = 0x12000, scoped, tag = 'internal scratch']
  %s0 = inlined_call_operand.vmem [shape: f32[2,17,24,128], index: 0, kind: input, shape index: {}]
  %s1 = inlined_call_operand.vmem [shape: f32[4,128,128], index: 1, kind: input, shape index: {}]
  %s2 = inlined_call_operand.vmem [shape: f32[1,128], index: 2, kind: input, shape index: {}]
  %s3 = inlined_call_operand.vmem [shape: f32[2,16,24,128], index: 3, kind: output, shape index: {}]
  %s4 = sld [smem:[#allocation0]]
  $region45: #{random_projection_forward.3} parent=0
    _
  %s6 = ssub.s32 1, %s4
  %s7 = scalar_select 0, %s6, %s4
  loop: start=0, step=1, limit=4
  $region2: #{random_projection_forward.3} parent=0 // loop_pre_header
    _
  $region3: #{random_projection_forward.3} parent=0 // loop_header
    %s9 = sphi 0, %s13
    %p10 = scmp.ge.s32.totalorder %s9, 4
    %s19 = sphi 0, %s21
    %s22 = sphi 0, %s19
    %s23 = sphi 0, %s22
    %s39 = sphi 0, %s23
    %s43 = sphi 0, %s43
    %s45 = sphi 0, %s43
    %s46 = sphi 0, %s45
    %s60 = sphi 0, %s46
    %s64 = sphi 0, %s64
    %s66 = sphi 0, %s64
    %s67 = sphi 0, %s66
    %s81 = sphi 0, %s67
    %s87 = sphi 0, %s89
    %s90 = sphi 0, %s87
    %s91 = sphi 0, %s90
    %s107 = sphi 0, %s91
  $region4: #{random_projection_forward.3} parent=0 // loop_header_branch
    %12 = sbr.rel (%p10) target = $region8
  $region5: #{random_projection_forward.3} parent=0 // loop_body
    %s14 = ssub.s32 %s9, 1
    %s15 = ssub.s32 %s9, 2
    %s16 = sadd.s32 %s9, 1
    %s17 = ssub.s32 %s9, %s16
    %p18 = scmp.eq.s32.totalorder %s17, 0
    %s20 = sadd.s32 %s19, 1
    %s21 = scalar_select %p18, %s19, %s20
    %p24 = pneg %p18
    %p25 = scmp.eq.s32.totalorder %s9, 1
    %p26 = por %p24, %p25
    %p27 = scmp.ne.s32.totalorder %s19, %s22
    %p28 = scmp.eq.s32.totalorder %s9, 0
    %p29 = por %p27, %p28
    %p30 = scmp.ne.s32.totalorder %s19, %s22
    %p31 = scmp.eq.s32.totalorder %s14, 1
    %p32 = por %p30, %p31
    %p33 = scmp.ne.s32.totalorder %s22, %s23
    %p34 = scmp.eq.s32.totalorder %s14, 0
    %p35 = por %p33, %p34
    %p36 = scmp.ne.s32.totalorder %s22, %s23
    %p37 = scmp.eq.s32.totalorder %s15, 1
    %p38 = por %p36, %p37
    %p40 = scmp.ne.s32.totalorder %s23, %s39
    %p41 = scmp.eq.s32.totalorder %s15, 0
    %p42 = por %p40, %p41
    %s44 = sadd.s32 %s43, 1
    %p47 = scmp.eq.s32.totalorder %s9, 1
    %p48 = scmp.ne.s32.totalorder %s43, %s45
    %p49 = scmp.eq.s32.totalorder %s9, 0
    %p50 = por %p48, %p49
    %p51 = scmp.ne.s32.totalorder %s43, %s45
    %p52 = scmp.eq.s32.totalorder %s14, 1
    %p53 = por %p51, %p52
    %p54 = scmp.ne.s32.totalorder %s45, %s46
    %p55 = scmp.eq.s32.totalorder %s14, 0
    %p56 = por %p54, %p55
    %p57 = scmp.ne.s32.totalorder %s45, %s46
    %p58 = scmp.eq.s32.totalorder %s15, 1
    %p59 = por %p57, %p58
    %p61 = scmp.ne.s32.totalorder %s46, %s60
    %p62 = scmp.eq.s32.totalorder %s15, 0
    %p63 = por %p61, %p62
    %s65 = sadd.s32 %s64, 1
    %p68 = scmp.eq.s32.totalorder %s9, 1
    %p69 = scmp.ne.s32.totalorder %s64, %s66
    %p70 = scmp.eq.s32.totalorder %s9, 0
    %p71 = por %p69, %p70
    %p72 = scmp.ne.s32.totalorder %s64, %s66
    %p73 = scmp.eq.s32.totalorder %s14, 1
    %p74 = por %p72, %p73
    %p75 = scmp.ne.s32.totalorder %s66, %s67
    %p76 = scmp.eq.s32.totalorder %s14, 0
    %p77 = por %p75, %p76
    %p78 = scmp.ne.s32.totalorder %s66, %s67
    %p79 = scmp.eq.s32.totalorder %s15, 1
    %p80 = por %p78, %p79
    %p82 = scmp.ne.s32.totalorder %s67, %s81
    %p83 = scmp.eq.s32.totalorder %s15, 0
    %p84 = por %p82, %p83
    %s85 = ssub.s32 %s9, %s16
    %p86 = scmp.eq.s32.totalorder %s85, 0
    %s88 = sadd.s32 %s87, 1
    %s89 = scalar_select %p86, %s87, %s88
    %p92 = pneg %p86
    %p93 = scmp.eq.s32.totalorder %s9, 1
    %p94 = por %p92, %p93
    %p95 = scmp.ne.s32.totalorder %s87, %s90
    %p96 = scmp.eq.s32.totalorder %s9, 0
    %p97 = por %p95, %p96
    %p98 = scmp.ne.s32.totalorder %s87, %s90
    %p99 = scmp.eq.s32.totalorder %s14, 1
    %p100 = por %p98, %p99
    %p101 = scmp.ne.s32.totalorder %s90, %s91
    %p102 = scmp.eq.s32.totalorder %s14, 0
    %p103 = por %p101, %p102
    %p104 = scmp.ne.s32.totalorder %s90, %s91
    %p105 = scmp.eq.s32.totalorder %s15, 1
    %p106 = por %p104, %p105
    %p108 = scmp.ne.s32.totalorder %s91, %s107
    %p109 = scmp.eq.s32.totalorder %s15, 0
    %p110 = por %p108, %p109
    %p111 = scmp.le.s32.totalorder 1, %s9
    %p112 = scmp.lt.s32.totalorder %s9, 3
    %p113 = pnand %p111, %p112
    %p114 = pneg %p113
    // Predicated region
    $region9: #{random_projection_forward.3} parent=5 // pred_check
      _
    $region10: #{random_projection_forward.3} parent=5 // pred_check_branch
      %116 = sbr.rel (%p113) target = $region12
    $region11: #{random_projection_forward.3} parent=5 // pred_region
      %s117 = ssub.s32 %s9, 1
      // Predicated region
      $region13: #{random_projection_forward.3} parent=11 // pred_check
        %p118 = pneg %p56
      $region14: #{random_projection_forward.3} parent=11 // pred_check_branch
        %120 = sbr.rel (%p118) target = $region16
      $region15: #{random_projection_forward.3} parent=11 // pred_region
        _
      $region16: #{random_projection_forward.3} parent=11 // pred_fallthru
        _
      // Predicated region
      $region17: #{random_projection_forward.3} parent=11 // pred_check
        %p121 = pneg %p77
      $region18: #{random_projection_forward.3} parent=11 // pred_check_branch
        %123 = sbr.rel (%p121) target = $region20
      $region19: #{random_projection_forward.3} parent=11 // pred_region
        _
      $region20: #{random_projection_forward.3} parent=11 // pred_fallthru
        _
    $region12: #{random_projection_forward.3} parent=5 // pred_fallthru
      _
    %p124 = scmp.lt.s32.totalorder %s9, 2
    // Predicated region
    $region21: #{random_projection_forward.3} parent=5 // pred_check
      %p125 = pneg %p124
    $region22: #{random_projection_forward.3} parent=5 // pred_check_branch
      %127 = sbr.rel (%p125) target = $region24
    $region23: #{random_projection_forward.3} parent=5 // pred_region
      // Predicated region
      $region25: #{random_projection_forward.3} parent=23 // pred_check
        %p128 = pneg %p29
      $region26: #{random_projection_forward.3} parent=23 // pred_check_branch
        %130 = sbr.rel (%p128) target = $region28
      $region27: #{random_projection_forward.3} parent=23 // pred_region
        %p131 = scmp.lt.s32.totalorder %s9, 1
        %s132 = scalar_select %p131, %s9, 1
        %s133 = smul.addr %s132, 51
        %s134 = smul.addr %s133, 8
        %s135 = scalar_lea.vmem %s0, %s134
      $region28: #{random_projection_forward.3} parent=23 // pred_fallthru
        _
    $region24: #{random_projection_forward.3} parent=5 // pred_fallthru
      _
    %p136 = scmp.le.s32.totalorder 1, %s9
    %p137 = scmp.lt.s32.totalorder %s9, 3
    %p138 = pnand %p136, %p137
    %p139 = pneg %p138
    // Predicated region
    $region29: #{random_projection_forward.3} parent=5 // pred_check
      _
    $region30: #{random_projection_forward.3} parent=5 // pred_check_branch
      %141 = sbr.rel (%p138) target = $region32
    $region31: #{random_projection_forward.3} parent=5 // pred_region
      %s142 = ssub.s32 %s9, 1
      %p143 = scmp.lt.s32.totalorder %s14, 1
      %s144 = scalar_select %p143, %s14, 1
      %s145 = smul.addr %s144, 51
      %s146 = smul.addr %s145, 8
      %s147 = scalar_lea.vmem %s0, %s146
      %p148 = pneg %p35
      %p149 = pneg %p32
      %p150 = pneg %p56
      %p151 = pneg %p53
      %p152 = pneg %p77
      %p153 = pneg %p74
      %p154 = pneg %p103
      %p155 = pneg %p100
      %p156 = scmp.lt.s32.totalorder %s14, 1
      %s157 = scalar_select %p156, %s14, 1
      %s158 = smul.addr %s157, 48
      %s159 = smul.addr %s158, 8
      %s160 = scalar_lea.vmem %s3, %s159
      %p161 = scmp.lt.s32.totalorder %s14, 1
      %s162 = scalar_select %p161, %s14, 1
      %s163 = smul.addr %s162, 51
      %s164 = smul.addr %s163, 8
      %s165 = scalar_lea.vmem %s0, %s164
      %p166 = scmp.lt.s32.totalorder %s14, 1
      %s167 = scalar_select %p166, %s14, 1
      %s168 = smul.addr %s167, 48
      %s169 = smul.addr %s168, 8
      %s170 = scalar_lea.vmem %s3, %s169
      %v171 = vld [vmem:[%s2] sm:$0x1]
      %v172 = vld [vmem:[%s165] sm:$0xff]
      %v173 = vld [vmem:[%s165 + $0x8] sm:$0xff]
      %v174 = vld [vmem:[%s165 + $0x10] sm:$0xff]
      %v175 = vld [vmem:[%s165 + $0x18] sm:$0xff]
      %v176 = vld [vmem:[%s165 + $0x20] sm:$0xff]
      %v177 = vld [vmem:[%s165 + $0x28] sm:$0xff]
      %v178 = vld [vmem:[%s165 + $0x30] sm:$0xff]
      %v179 = vld [vmem:[%s165 + $0x38] sm:$0xff]
      %v180 = vld [vmem:[%s165 + $0x40] sm:$0xff]
      %v181 = vld [vmem:[%s165 + $0x48] sm:$0xff]
      %v182 = vld [vmem:[%s165 + $0x50] sm:$0xff]
      %v183 = vld [vmem:[%s165 + $0x58] sm:$0xff]
      %s184 = scalar_lea.vmem %s165, 24
      %v185 = vld [vmem:[%s184] sm:$0xff]
      %v186 = vld [vmem:[%s184 + $0x8] sm:$0xff]
      %v187 = vld [vmem:[%s184 + $0x10] sm:$0xff]
      %v188 = vld [vmem:[%s184 + $0x18] sm:$0xff]
      %v189 = vld [vmem:[%s184 + $0x20] sm:$0xff]
      %v190 = vld [vmem:[%s184 + $0x28] sm:$0xff]
      %v191 = vld [vmem:[%s184 + $0x30] sm:$0xff]
      %v192 = vld [vmem:[%s184 + $0x38] sm:$0xff]
      %v193 = vld [vmem:[%s184 + $0x40] sm:$0xff]
      %v194 = vld [vmem:[%s184 + $0x48] sm:$0xff]
      %v195 = vld [vmem:[%s184 + $0x50] sm:$0xff]
      %v196 = vld [vmem:[%s184 + $0x58] sm:$0xff]
      %v197 = vld [vmem:[%s1] sm:$0xff]
      %v198 = vld [vmem:[%s1 + $0x8] sm:$0xff]
      %v199 = vld [vmem:[%s1 + $0x10] sm:$0xff]
      %v200 = vld [vmem:[%s1 + $0x18] sm:$0xff]
      %v201 = vld [vmem:[%s1 + $0x20] sm:$0xff]
      %v202 = vld [vmem:[%s1 + $0x28] sm:$0xff]
      %v203 = vld [vmem:[%s1 + $0x30] sm:$0xff]
      %v204 = vld [vmem:[%s1 + $0x38] sm:$0xff]
      %v205 = vld [vmem:[%s1 + $0x40] sm:$0xff]
      %v206 = vld [vmem:[%s1 + $0x48] sm:$0xff]
      %v207 = vld [vmem:[%s1 + $0x50] sm:$0xff]
      %v208 = vld [vmem:[%s1 + $0x58] sm:$0xff]
      %v209 = vld [vmem:[%s1 + $0x60] sm:$0xff]
      %v210 = vld [vmem:[%s1 + $0x68] sm:$0xff]
      %v211 = vld [vmem:[%s1 + $0x70] sm:$0xff]
      %v212 = vld [vmem:[%s1 + $0x78] sm:$0xff]
      %s213 = scalar_lea.vmem %s1, 256
      %v214 = vld [vmem:[%s213] sm:$0xff]
      %v215 = vld [vmem:[%s213 + $0x8] sm:$0xff]
      %v216 = vld [vmem:[%s213 + $0x10] sm:$0xff]
      %v217 = vld [vmem:[%s213 + $0x18] sm:$0xff]
      %v218 = vld [vmem:[%s213 + $0x20] sm:$0xff]
      %v219 = vld [vmem:[%s213 + $0x28] sm:$0xff]
      %v220 = vld [vmem:[%s213 + $0x30] sm:$0xff]
      %v221 = vld [vmem:[%s213 + $0x38] sm:$0xff]
      %v222 = vld [vmem:[%s213 + $0x40] sm:$0xff]
      %v223 = vld [vmem:[%s213 + $0x48] sm:$0xff]
      %v224 = vld [vmem:[%s213 + $0x50] sm:$0xff]
      %v225 = vld [vmem:[%s213 + $0x58] sm:$0xff]
      %v226 = vld [vmem:[%s213 + $0x60] sm:$0xff]
      %v227 = vld [vmem:[%s213 + $0x68] sm:$0xff]
      %v228 = vld [vmem:[%s213 + $0x70] sm:$0xff]
      %v229 = vld [vmem:[%s213 + $0x78] sm:$0xff]
      %230 = vmatprep.subr.mxu0 0.0
      %231 = vmatpush1.msra.mxu0 %v214
      %232 = vmatprep.subr.mxu0 0.0
      %233 = vmatpush1.msra.mxu0 %v215
      %234 = vmatprep.subr.mxu0 0.0
      %235 = vmatpush1.msra.mxu0 %v216
      %236 = vmatprep.subr.mxu0 0.0
      %237 = vmatpush1.msra.mxu0 %v217
      %238 = vmatprep.subr.mxu0 0.0
      %239 = vmatpush1.msra.mxu0 %v218
      %240 = vmatprep.subr.mxu0 0.0
      %241 = vmatpush1.msra.mxu0 %v219
      %242 = vmatprep.subr.mxu0 0.0
      %243 = vmatpush1.msra.mxu0 %v220
      %244 = vmatprep.subr.mxu0 0.0
      %245 = vmatpush1.msra.mxu0 %v221
      %246 = vmatprep.subr.mxu0 0.0
      %247 = vmatpush1.msra.mxu0 %v222
      %248 = vmatprep.subr.mxu0 0.0
      %249 = vmatpush1.msra.mxu0 %v223
      %250 = vmatprep.subr.mxu0 0.0
      %251 = vmatpush1.msra.mxu0 %v224
      %252 = vmatprep.subr.mxu0 0.0
      %253 = vmatpush1.msra.mxu0 %v225
      %254 = vmatprep.subr.mxu0 0.0
      %255 = vmatpush1.msra.mxu0 %v226
      %256 = vmatprep.subr.mxu0 0.0
      %257 = vmatpush1.msra.mxu0 %v227
      %258 = vmatprep.subr.mxu0 0.0
      %259 = vmatpush1.msra.mxu0 %v228
      %260 = vmatprep.subr.mxu0 0.0
      %261 = vmatpush1.msra.mxu0 %v229
      %262 = vmatprep.subr.mxu0 0.0
      %263 = vmatpush1.msra.mxu0 0.0
      %264 = vmatprep.subr.mxu0 0.0
      %265 = vmatpush1.msra.mxu0 0.0
      %266 = vmatprep.subr.mxu0 0.0
      %267 = vmatpush1.msra.mxu0 0.0
      %268 = vmatprep.subr.mxu0 0.0
      %269 = vmatpush1.msra.mxu0 0.0
      %270 = vmatprep.subr.mxu0 0.0
      %271 = vmatpush1.msra.mxu0 0.0
      %272 = vmatprep.subr.mxu0 0.0
      %273 = vmatpush1.msra.mxu0 0.0
      %274 = vmatprep.subr.mxu0 0.0
      %275 = vmatpush1.msra.mxu0 0.0
      %276 = vmatprep.subr.mxu0 0.0
      %277 = vmatpush1.msra.mxu0 0.0
      %278 = vmatprep.subr.mxu0 0.0
      %279 = vmatpush1.msra.mxu0 0.0
      %280 = vmatprep.subr.mxu0 0.0
      %281 = vmatpush1.msra.mxu0 0.0
      %282 = vmatprep.subr.mxu0 0.0
      %283 = vmatpush1.msra.mxu0 0.0
      %284 = vmatprep.subr.mxu0 0.0
      %285 = vmatpush1.msra.mxu0 0.0
      %286 = vmatprep.subr.mxu0 0.0
      %287 = vmatpush1.msra.mxu0 0.0
      %288 = vmatprep.subr.mxu0 0.0
      %289 = vmatpush1.msra.mxu0 0.0
      %290 = vmatprep.subr.mxu0 0.0
      %291 = vmatpush1.msra.mxu0 0.0
      %292 = vmatprep.subr.mxu0 0.0
      %293 = vmatpush1.msra.mxu0 0.0
      %294 = vmatprep.mubr.f32.mxu0 0.0
      %295 = vmatmul.mubr.f32.gmra.mrb[0].mxu0 %v185
      %v296 = vpop.f32.mrb[0].mxu0
      %v297 = vadd.f32 0.0, %v296
      %v298 = vpop.f32.mrb[0].mxu0
      %299 = vmatprep.mubr.f32.mxu0 0.0
      %300 = vmatmul.mubr.f32.gmra.mrb[0].mxu0 %v186
      %v301 = vpop.f32.mrb[0].mxu0
      %v302 = vadd.f32 0.0, %v301
      %v303 = vpop.f32.mrb[0].mxu0
      %304 = vmatprep.mubr.f32.mxu0 0.0
      %305 = vmatmul.mubr.f32.gmra.mrb[0].mxu0 %v187
      %v306 = vpop.f32.mrb[0].mxu0
      %v307 = vadd.f32 0.0, %v306
      %v308 = vpop.f32.mrb[0].mxu0
      %309 = vmatprep.mubr.f32.mxu0 0.0
      %310 = vmatmul.mubr.f32.gmra.mrb[0].mxu0 %v188
      %v311 = vpop.f32.mrb[0].mxu0
      %v312 = vadd.f32 0.0, %v311
      %v313 = vpop.f32.mrb[0].mxu0
      %314 = vmatprep.mubr.f32.mxu0 0.0
      %315 = vmatmul.mubr.f32.gmra.mrb[0].mxu0 %v189
      %v316 = vpop.f32.mrb[0].mxu0
      %v317 = vadd.f32 0.0, %v316
      %v318 = vpop.f32.mrb[0].mxu0
      %319 = vmatprep.mubr.f32.mxu0 0.0
      %320 = vmatmul.mubr.f32.gmra.mrb[0].mxu0 %v190
      %v321 = vpop.f32.mrb[0].mxu0
      %v322 = vadd.f32 0.0, %v321
      %v323 = vpop.f32.mrb[0].mxu0
      %324 = vmatprep.mubr.f32.mxu0 0.0
      %325 = vmatmul.mubr.f32.gmra.mrb[0].mxu0 %v191
      %v326 = vpop.f32.mrb[0].mxu0
      %v327 = vadd.f32 0.0, %v326
      %v328 = vpop.f32.mrb[0].mxu0
      %329 = vmatprep.mubr.f32.mxu0 0.0
      %330 = vmatmul.mubr.f32.gmra.mrb[0].mxu0 %v192
      %v331 = vpop.f32.mrb[0].mxu0
      %v332 = vadd.f32 0.0, %v331
      %v333 = vpop.f32.mrb[0].mxu0
      %334 = vmatprep.mubr.f32.mxu0 0.0
      %335 = vmatmul.mubr.f32.gmra.mrb[0].mxu0 %v193
      %v336 = vpop.f32.mrb[0].mxu0
      %v337 = vadd.f32 0.0, %v336
      %v338 = vpop.f32.mrb[0].mxu0
      %339 = vmatprep.mubr.f32.mxu0 0.0
      %340 = vmatmul.mubr.f32.gmra.mrb[0].mxu0 %v194
      %v341 = vpop.f32.mrb[0].mxu0
      %v342 = vadd.f32 0.0, %v341
      %v343 = vpop.f32.mrb[0].mxu0
      %344 = vmatprep.mubr.f32.mxu0 0.0
      %345 = vmatmul.mubr.f32.gmra.mrb[0].mxu0 %v195
      %v346 = vpop.f32.mrb[0].mxu0
      %v347 = vadd.f32 0.0, %v346
      %v348 = vpop.f32.mrb[0].mxu0
      %349 = vmatprep.mubr.f32.mxu0 0.0
      %350 = vmatmul.mubr.f32.gmra.mrb[0].mxu0 %v196
      %v351 = vpop.f32.mrb[0].mxu0
      %v352 = vadd.f32 0.0, %v351
      %v353 = vpop.f32.mrb[0].mxu0
      %354 = vdwg.mxu0
      %355 = vmatprep.subr.mxu0 0.0
      %356 = vmatpush1.msra.mxu0 %v197
      %357 = vmatprep.subr.mxu0 0.0
      %358 = vmatpush1.msra.mxu0 %v198
      %359 = vmatprep.subr.mxu0 0.0
      %360 = vmatpush1.msra.mxu0 %v199
      %361 = vmatprep.subr.mxu0 0.0
      %362 = vmatpush1.msra.mxu0 %v200
      %363 = vmatprep.subr.mxu0 0.0
      %364 = vmatpush1.msra.mxu0 %v201
      %365 = vmatprep.subr.mxu0 0.0
      %366 = vmatpush1.msra.mxu0 %v202
      %367 = vmatprep.subr.mxu0 0.0
      %368 = vmatpush1.msra.mxu0 %v203
      %369 = vmatprep.subr.mxu0 0.0
      %370 = vmatpush1.msra.mxu0 %v204
      %371 = vmatprep.subr.mxu0 0.0
      %372 = vmatpush1.msra.mxu0 %v205
      %373 = vmatprep.subr.mxu0 0.0
      %374 = vmatpush1.msra.mxu0 %v206
      %375 = vmatprep.subr.mxu0 0.0
      %376 = vmatpush1.msra.mxu0 %v207
      %377 = vmatprep.subr.mxu0 0.0
      %378 = vmatpush1.msra.mxu0 %v208
      %379 = vmatprep.subr.mxu0 0.0
      %380 = vmatpush1.msra.mxu0 %v209
      %381 = vmatprep.subr.mxu0 0.0
      %382 = vmatpush1.msra.mxu0 %v210
      %383 = vmatprep.subr.mxu0 0.0
      %384 = vmatpush1.msra.mxu0 %v211
      %385 = vmatprep.subr.mxu0 0.0
      %386 = vmatpush1.msra.mxu0 %v212
      %387 = vmatprep.subr.mxu0 0.0
      %388 = vmatpush1.msra.mxu0 0.0
      %389 = vmatprep.subr.mxu0 0.0
      %390 = vmatpush1.msra.mxu0 0.0
      %391 = vmatprep.subr.mxu0 0.0
      %392 = vmatpush1.msra.mxu0 0.0
      %393 = vmatprep.subr.mxu0 0.0
      %394 = vmatpush1.msra.mxu0 0.0
      %395 = vmatprep.subr.mxu0 0.0
      %396 = vmatpush1.msra.mxu0 0.0
      %397 = vmatprep.subr.mxu0 0.0
      %398 = vmatpush1.msra.mxu0 0.0
      %399 = vmatprep.subr.mxu0 0.0
      %400 = vmatpush1.msra.mxu0 0.0
      %401 = vmatprep.subr.mxu0 0.0
      %402 = vmatpush1.msra.mxu0 0.0
      %403 = vmatprep.subr.mxu0 0.0
      %404 = vmatpush1.msra.mxu0 0.0
      %405 = vmatprep.subr.mxu0 0.0
      %406 = vmatpush1.msra.mxu0 0.0
      %407 = vmatprep.subr.mxu0 0.0
      %408 = vmatpush1.msra.mxu0 0.0
      %409 = vmatprep.subr.mxu0 0.0
      %410 = vmatpush1.msra.mxu0 0.0
      %411 = vmatprep.subr.mxu0 0.0
      %412 = vmatpush1.msra.mxu0 0.0
      %413 = vmatprep.subr.mxu0 0.0
      %414 = vmatpush1.msra.mxu0 0.0
      %415 = vmatprep.subr.mxu0 0.0
      %416 = vmatpush1.msra.mxu0 0.0
      %417 = vmatprep.subr.mxu0 0.0
      %418 = vmatpush1.msra.mxu0 0.0
      %419 = vmatprep.mubr.f32.mxu0 0.0
      %420 = vmatmul.mubr.f32.gmra.mrb[0].mxu0 %v172
      %v421 = vpop.f32.mrb[0].mxu0
      %v422 = vadd.f32 %v297, %v421
      %v423 = vpop.f32.mrb[0].mxu0
      %424 = vmatprep.mubr.f32.mxu0 0.0
      %425 = vmatmul.mubr.f32.gmra.mrb[0].mxu0 %v173
      %v426 = vpop.f32.mrb[0].mxu0
      %v427 = vadd.f32 %v302, %v426
      %v428 = vpop.f32.mrb[0].mxu0
      %429 = vmatprep.mubr.f32.mxu0 0.0
      %430 = vmatmul.mubr.f32.gmra.mrb[0].mxu0 %v174
      %v431 = vpop.f32.mrb[0].mxu0
      %v432 = vadd.f32 %v307, %v431
      %v433 = vpop.f32.mrb[0].mxu0
      %434 = vmatprep.mubr.f32.mxu0 0.0
      %435 = vmatmul.mubr.f32.gmra.mrb[0].mxu0 %v175
      %v436 = vpop.f32.mrb[0].mxu0
      %v437 = vadd.f32 %v312, %v436
      %v438 = vpop.f32.mrb[0].mxu0
      %439 = vmatprep.mubr.f32.mxu0 0.0
      %440 = vmatmul.mubr.f32.gmra.mrb[0].mxu0 %v176
      %v441 = vpop.f32.mrb[0].mxu0
      %v442 = vadd.f32 %v317, %v441
      %v443 = vpop.f32.mrb[0].mxu0
      %444 = vmatprep.mubr.f32.mxu0 0.0
      %445 = vmatmul.mubr.f32.gmra.mrb[0].mxu0 %v177
      %v446 = vpop.f32.mrb[0].mxu0
      %v447 = vadd.f32 %v322, %v446
      %v448 = vpop.f32.mrb[0].mxu0
      %449 = vmatprep.mubr.f32.mxu0 0.0
      %450 = vmatmul.mubr.f32.gmra.mrb[0].mxu0 %v178
      %v451 = vpop.f32.mrb[0].mxu0
      %v452 = vadd.f32 %v327, %v451
      %v453 = vpop.f32.mrb[0].mxu0
      %454 = vmatprep.mubr.f32.mxu0 0.0
      %455 = vmatmul.mubr.f32.gmra.mrb[0].mxu0 %v179
      %v456 = vpop.f32.mrb[0].mxu0
      %v457 = vadd.f32 %v332, %v456
      %v458 = vpop.f32.mrb[0].mxu0
      %459 = vmatprep.mubr.f32.mxu0 0.0
      %460 = vmatmul.mubr.f32.gmra.mrb[0].mxu0 %v180
      %v461 = vpop.f32.mrb[0].mxu0
      %v462 = vadd.f32 %v337, %v461
      %v463 = vpop.f32.mrb[0].mxu0
      %464 = vmatprep.mubr.f32.mxu0 0.0
      %465 = vmatmul.mubr.f32.gmra.mrb[0].mxu0 %v181
      %v466 = vpop.f32.mrb[0].mxu0
      %v467 = vadd.f32 %v342, %v466
      %v468 = vpop.f32.mrb[0].mxu0
      %469 = vmatprep.mubr.f32.mxu0 0.0
      %470 = vmatmul.mubr.f32.gmra.mrb[0].mxu0 %v182
      %v471 = vpop.f32.mrb[0].mxu0
      %v472 = vadd.f32 %v347, %v471
      %v473 = vpop.f32.mrb[0].mxu0
      %474 = vmatprep.mubr.f32.mxu0 0.0
      %475 = vmatmul.mubr.f32.gmra.mrb[0].mxu0 %v183
      %v476 = vpop.f32.mrb[0].mxu0
      %v477 = vadd.f32 %v352, %v476
      %v478 = vpop.f32.mrb[0].mxu0
      %479 = vdwg.mxu0
      %s480 = scalar_lea.vmem %s1, 128
      %v481 = vld [vmem:[%s480] sm:$0xff]
      %v482 = vld [vmem:[%s480 + $0x8] sm:$0xff]
      %v483 = vld [vmem:[%s480 + $0x10] sm:$0xff]
      %v484 = vld [vmem:[%s480 + $0x18] sm:$0xff]
      %v485 = vld [vmem:[%s480 + $0x20] sm:$0xff]
      %v486 = vld [vmem:[%s480 + $0x28] sm:$0xff]
      %v487 = vld [vmem:[%s480 + $0x30] sm:$0xff]
      %v488 = vld [vmem:[%s480 + $0x38] sm:$0xff]
      %v489 = vld [vmem:[%s480 + $0x40] sm:$0xff]
      %v490 = vld [vmem:[%s480 + $0x48] sm:$0xff]
      %v491 = vld [vmem:[%s480 + $0x50] sm:$0xff]
      %v492 = vld [vmem:[%s480 + $0x58] sm:$0xff]
      %v493 = vld [vmem:[%s480 + $0x60] sm:$0xff]
      %v494 = vld [vmem:[%s480 + $0x68] sm:$0xff]
      %v495 = vld [vmem:[%s480 + $0x70] sm:$0xff]
      %v496 = vld [vmem:[%s480 + $0x78] sm:$0xff]
      %s497 = scalar_lea.vmem %s1, 384
      %v498 = vld [vmem:[%s497] sm:$0xff]
      %v499 = vld [vmem:[%s497 + $0x8] sm:$0xff]
      %v500 = vld [vmem:[%s497 + $0x10] sm:$0xff]
      %v501 = vld [vmem:[%s497 + $0x18] sm:$0xff]
      %v502 = vld [vmem:[%s497 + $0x20] sm:$0xff]
      %v503 = vld [vmem:[%s497 + $0x28] sm:$0xff]
      %v504 = vld [vmem:[%s497 + $0x30] sm:$0xff]
      %v505 = vld [vmem:[%s497 + $0x38] sm:$0xff]
      %v506 = vld [vmem:[%s497 + $0x40] sm:$0xff]
      %v507 = vld [vmem:[%s497 + $0x48] sm:$0xff]
      %v508 = vld [vmem:[%s497 + $0x50] sm:$0xff]
      %v509 = vld [vmem:[%s497 + $0x58] sm:$0xff]
      %v510 = vld [vmem:[%s497 + $0x60] sm:$0xff]
      %v511 = vld [vmem:[%s497 + $0x68] sm:$0xff]
      %v512 = vld [vmem:[%s497 + $0x70] sm:$0xff]
      %v513 = vld [vmem:[%s497 + $0x78] sm:$0xff]
      %514 = vmatprep.subr.mxu0 0.0
      %515 = vmatpush1.msra.mxu0 %v498
      %516 = vmatprep.subr.mxu0 0.0
      %517 = vmatpush1.msra.mxu0 %v499
      %518 = vmatprep.subr.mxu0 0.0
      %519 = vmatpush1.msra.mxu0 %v500
      %520 = vmatprep.subr.mxu0 0.0
      %521 = vmatpush1.msra.mxu0 %v501
      %522 = vmatprep.subr.mxu0 0.0
      %523 = vmatpush1.msra.mxu0 %v502
      %524 = vmatprep.subr.mxu0 0.0
      %525 = vmatpush1.msra.mxu0 %v503
      %526 = vmatprep.subr.mxu0 0.0
      %527 = vmatpush1.msra.mxu0 %v504
      %528 = vmatprep.subr.mxu0 0.0
      %529 = vmatpush1.msra.mxu0 %v505
      %530 = vmatprep.subr.mxu0 0.0
      %531 = vmatpush1.msra.mxu0 %v506
      %532 = vmatprep.subr.mxu0 0.0
      %533 = vmatpush1.msra.mxu0 %v507
      %534 = vmatprep.subr.mxu0 0.0
      %535 = vmatpush1.msra.mxu0 %v508
      %536 = vmatprep.subr.mxu0 0.0
      %537 = vmatpush1.msra.mxu0 %v509
      %538 = vmatprep.subr.mxu0 0.0
      %539 = vmatpush1.msra.mxu0 %v510
      %540 = vmatprep.subr.mxu0 0.0
      %541 = vmatpush1.msra.mxu0 %v511
      %542 = vmatprep.subr.mxu0 0.0
      %543 = vmatpush1.msra.mxu0 %v512
      %544 = vmatprep.subr.mxu0 0.0
      %545 = vmatpush1.msra.mxu0 %v513
      %546 = vmatprep.subr.mxu0 0.0
      %547 = vmatpush1.msra.mxu0 0.0
      %548 = vmatprep.subr.mxu0 0.0
      %549 = vmatpush1.msra.mxu0 0.0
      %550 = vmatprep.subr.mxu0 0.0
      %551 = vmatpush1.msra.mxu0 0.0
      %552 = vmatprep.subr.mxu0 0.0
      %553 = vmatpush1.msra.mxu0 0.0
      %554 = vmatprep.subr.mxu0 0.0
      %555 = vmatpush1.msra.mxu0 0.0
      %556 = vmatprep.subr.mxu0 0.0
      %557 = vmatpush1.msra.mxu0 0.0
      %558 = vmatprep.subr.mxu0 0.0
      %559 = vmatpush1.msra.mxu0 0.0
      %560 = vmatprep.subr.mxu0 0.0
      %561 = vmatpush1.msra.mxu0 0.0
      %562 = vmatprep.subr.mxu0 0.0
      %563 = vmatpush1.msra.mxu0 0.0
      %564 = vmatprep.subr.mxu0 0.0
      %565 = vmatpush1.msra.mxu0 0.0
      %566 = vmatprep.subr.mxu0 0.0
      %567 = vmatpush1.msra.mxu0 0.0
      %568 = vmatprep.subr.mxu0 0.0
      %569 = vmatpush1.msra.mxu0 0.0
      %570 = vmatprep.subr.mxu0 0.0
      %571 = vmatpush1.msra.mxu0 0.0
      %572 = vmatprep.subr.mxu0 0.0
      %573 = vmatpush1.msra.mxu0 0.0
      %574 = vmatprep.subr.mxu0 0.0
      %575 = vmatpush1.msra.mxu0 0.0
      %576 = vmatprep.subr.mxu0 0.0
      %577 = vmatpush1.msra.mxu0 0.0
      %578 = vmatprep.mubr.f32.mxu0 0.0
      %579 = vmatmul.mubr.f32.gmra.mrb[0].mxu0 %v185
      %v580 = vpop.f32.mrb[0].mxu0
      %v581 = vadd.f32 0.0, %v580
      %v582 = vpop.f32.mrb[0].mxu0
      %583 = vmatprep.mubr.f32.mxu0 0.0
      %584 = vmatmul.mubr.f32.gmra.mrb[0].mxu0 %v186
      %v585 = vpop.f32.mrb[0].mxu0
      %v586 = vadd.f32 0.0, %v585
      %v587 = vpop.f32.mrb[0].mxu0
      %588 = vmatprep.mubr.f32.mxu0 0.0
      %589 = vmatmul.mubr.f32.gmra.mrb[0].mxu0 %v187
      %v590 = vpop.f32.mrb[0].mxu0
      %v591 = vadd.f32 0.0, %v590
      %v592 = vpop.f32.mrb[0].mxu0
      %593 = vmatprep.mubr.f32.mxu0 0.0
      %594 = vmatmul.mubr.f32.gmra.mrb[0].mxu0 %v188
      %v595 = vpop.f32.mrb[0].mxu0
      %v596 = vadd.f32 0.0, %v595
      %v597 = vpop.f32.mrb[0].mxu0
      %598 = vmatprep.mubr.f32.mxu0 0.0
      %599 = vmatmul.mubr.f32.gmra.mrb[0].mxu0 %v189
      %v600 = vpop.f32.mrb[0].mxu0
      %v601 = vadd.f32 0.0, %v600
      %v602 = vpop.f32.mrb[0].mxu0
      %603 = vmatprep.mubr.f32.mxu0 0.0
      %604 = vmatmul.mubr.f32.gmra.mrb[0].mxu0 %v190
      %v605 = vpop.f32.mrb[0].mxu0
      %v606 = vadd.f32 0.0, %v605
      %v607 = vpop.f32.mrb[0].mxu0
      %608 = vmatprep.mubr.f32.mxu0 0.0
      %609 = vmatmul.mubr.f32.gmra.mrb[0].mxu0 %v191
      %v610 = vpop.f32.mrb[0].mxu0
      %v611 = vadd.f32 0.0, %v610
      %v612 = vpop.f32.mrb[0].mxu0
      %613 = vmatprep.mubr.f32.mxu0 0.0
      %614 = vmatmul.mubr.f32.gmra.mrb[0].mxu0 %v192
      %v615 = vpop.f32.mrb[0].mxu0
      %v616 = vadd.f32 0.0, %v615
      %v617 = vpop.f32.mrb[0].mxu0
      %618 = vmatprep.mubr.f32.mxu0 0.0
      %619 = vmatmul.mubr.f32.gmra.mrb[0].mxu0 %v193
      %v620 = vpop.f32.mrb[0].mxu0
      %v621 = vadd.f32 0.0, %v620
      %v622 = vpop.f32.mrb[0].mxu0
      %623 = vmatprep.mubr.f32.mxu0 0.0
      %624 = vmatmul.mubr.f32.gmra.mrb[0].mxu0 %v194
      %v625 = vpop.f32.mrb[0].mxu0
      %v626 = vadd.f32 0.0, %v625
      %v627 = vpop.f32.mrb[0].mxu0
      %628 = vmatprep.mubr.f32.mxu0 0.0
      %629 = vmatmul.mubr.f32.gmra.mrb[0].mxu0 %v195
      %v630 = vpop.f32.mrb[0].mxu0
      %v631 = vadd.f32 0.0, %v630
      %v632 = vpop.f32.mrb[0].mxu0
      %633 = vmatprep.mubr.f32.mxu0 0.0
      %634 = vmatmul.mubr.f32.gmra.mrb[0].mxu0 %v196
      %v635 = vpop.f32.mrb[0].mxu0
      %v636 = vadd.f32 0.0, %v635
      %v637 = vpop.f32.mrb[0].mxu0
      %638 = vdwg.mxu0
      %639 = vmatprep.subr.mxu0 0.0
      %640 = vmatpush1.msra.mxu0 %v481
      %641 = vmatprep.subr.mxu0 0.0
      %642 = vmatpush1.msra.mxu0 %v482
      %643 = vmatprep.subr.mxu0 0.0
      %644 = vmatpush1.msra.mxu0 %v483
      %645 = vmatprep.subr.mxu0 0.0
      %646 = vmatpush1.msra.mxu0 %v484
      %647 = vmatprep.subr.mxu0 0.0
      %648 = vmatpush1.msra.mxu0 %v485
      %649 = vmatprep.subr.mxu0 0.0
      %650 = vmatpush1.msra.mxu0 %v486
      %651 = vmatprep.subr.mxu0 0.0
      %652 = vmatpush1.msra.mxu0 %v487
      %653 = vmatprep.subr.mxu0 0.0
      %654 = vmatpush1.msra.mxu0 %v488
      %655 = vmatprep.subr.mxu0 0.0
      %656 = vmatpush1.msra.mxu0 %v489
      %657 = vmatprep.subr.mxu0 0.0
      %658 = vmatpush1.msra.mxu0 %v490
      %659 = vmatprep.subr.mxu0 0.0
      %660 = vmatpush1.msra.mxu0 %v491
      %661 = vmatprep.subr.mxu0 0.0
      %662 = vmatpush1.msra.mxu0 %v492
      %663 = vmatprep.subr.mxu0 0.0
      %664 = vmatpush1.msra.mxu0 %v493
      %665 = vmatprep.subr.mxu0 0.0
      %666 = vmatpush1.msra.mxu0 %v494
      %667 = vmatprep.subr.mxu0 0.0
      %668 = vmatpush1.msra.mxu0 %v495
      %669 = vmatprep.subr.mxu0 0.0
      %670 = vmatpush1.msra.mxu0 %v496
      %671 = vmatprep.subr.mxu0 0.0
      %672 = vmatpush1.msra.mxu0 0.0
      %673 = vmatprep.subr.mxu0 0.0
      %674 = vmatpush1.msra.mxu0 0.0
      %675 = vmatprep.subr.mxu0 0.0
      %676 = vmatpush1.msra.mxu0 0.0
      %677 = vmatprep.subr.mxu0 0.0
      %678 = vmatpush1.msra.mxu0 0.0
      %679 = vmatprep.subr.mxu0 0.0
      %680 = vmatpush1.msra.mxu0 0.0
      %681 = vmatprep.subr.mxu0 0.0
      %682 = vmatpush1.msra.mxu0 0.0
      %683 = vmatprep.subr.mxu0 0.0
      %684 = vmatpush1.msra.mxu0 0.0
      %685 = vmatprep.subr.mxu0 0.0
      %686 = vmatpush1.msra.mxu0 0.0
      %687 = vmatprep.subr.mxu0 0.0
      %688 = vmatpush1.msra.mxu0 0.0
      %689 = vmatprep.subr.mxu0 0.0
      %690 = vmatpush1.msra.mxu0 0.0
      %691 = vmatprep.subr.mxu0 0.0
      %692 = vmatpush1.msra.mxu0 0.0
      %693 = vmatprep.subr.mxu0 0.0
      %694 = vmatpush1.msra.mxu0 0.0
      %695 = vmatprep.subr.mxu0 0.0
      %696 = vmatpush1.msra.mxu0 0.0
      %697 = vmatprep.subr.mxu0 0.0
      %698 = vmatpush1.msra.mxu0 0.0
      %699 = vmatprep.subr.mxu0 0.0
      %700 = vmatpush1.msra.mxu0 0.0
      %701 = vmatprep.subr.mxu0 0.0
      %702 = vmatpush1.msra.mxu0 0.0
      %703 = vmatprep.mubr.f32.mxu0 0.0
      %704 = vmatmul.mubr.f32.gmra.mrb[0].mxu0 %v172
      %v705 = vpop.f32.mrb[0].mxu0
      %v706 = vadd.f32 %v581, %v705
      %v707 = vpop.f32.mrb[0].mxu0
      %708 = vmatprep.mubr.f32.mxu0 0.0
      %709 = vmatmul.mubr.f32.gmra.mrb[0].mxu0 %v173
      %v710 = vpop.f32.mrb[0].mxu0
      %v711 = vadd.f32 %v586, %v710
      %v712 = vpop.f32.mrb[0].mxu0
      %713 = vmatprep.mubr.f32.mxu0 0.0
      %714 = vmatmul.mubr.f32.gmra.mrb[0].mxu0 %v174
      %v715 = vpop.f32.mrb[0].mxu0
      %v716 = vadd.f32 %v591, %v715
      %v717 = vpop.f32.mrb[0].mxu0
      %718 = vmatprep.mubr.f32.mxu0 0.0
      %719 = vmatmul.mubr.f32.gmra.mrb[0].mxu0 %v175
      %v720 = vpop.f32.mrb[0].mxu0
      %v721 = vadd.f32 %v596, %v720
      %v722 = vpop.f32.mrb[0].mxu0
      %723 = vmatprep.mubr.f32.mxu0 0.0
      %724 = vmatmul.mubr.f32.gmra.mrb[0].mxu0 %v176
      %v725 = vpop.f32.mrb[0].mxu0
      %v726 = vadd.f32 %v601, %v725
      %v727 = vpop.f32.mrb[0].mxu0
      %728 = vmatprep.mubr.f32.mxu0 0.0
      %729 = vmatmul.mubr.f32.gmra.mrb[0].mxu0 %v177
      %v730 = vpop.f32.mrb[0].mxu0
      %v731 = vadd.f32 %v606, %v730
      %v732 = vpop.f32.mrb[0].mxu0
      %733 = vmatprep.mubr.f32.mxu0 0.0
      %734 = vmatmul.mubr.f32.gmra.mrb[0].mxu0 %v178
      %v735 = vpop.f32.mrb[0].mxu0
      %v736 = vadd.f32 %v611, %v735
      %v737 = vpop.f32.mrb[0].mxu0
      %738 = vmatprep.mubr.f32.mxu0 0.0
      %739 = vmatmul.mubr.f32.gmra.mrb[0].mxu0 %v179
      %v740 = vpop.f32.mrb[0].mxu0
      %v741 = vadd.f32 %v616, %v740
      %v742 = vpop.f32.mrb[0].mxu0
      %743 = vmatprep.mubr.f32.mxu0 0.0
      %744 = vmatmul.mubr.f32.gmra.mrb[0].mxu0 %v180
      %v745 = vpop.f32.mrb[0].mxu0
      %v746 = vadd.f32 %v621, %v745
      %v747 = vpop.f32.mrb[0].mxu0
      %748 = vmatprep.mubr.f32.mxu0 0.0
      %749 = vmatmul.mubr.f32.gmra.mrb[0].mxu0 %v181
      %v750 = vpop.f32.mrb[0].mxu0
      %v751 = vadd.f32 %v626, %v750
      %v752 = vpop.f32.mrb[0].mxu0
      %753 = vmatprep.mubr.f32.mxu0 0.0
      %754 = vmatmul.mubr.f32.gmra.mrb[0].mxu0 %v182
      %v755 = vpop.f32.mrb[0].mxu0
      %v756 = vadd.f32 %v631, %v755
      %v757 = vpop.f32.mrb[0].mxu0
      %758 = vmatprep.mubr.f32.mxu0 0.0
      %759 = vmatmul.mubr.f32.gmra.mrb[0].mxu0 %v183
      %v760 = vpop.f32.mrb[0].mxu0
      %v761 = vadd.f32 %v636, %v760
      %v762 = vpop.f32.mrb[0].mxu0
      %763 = vdwg.mxu0
      %v764 = vrot.slane %v706, 1
      %v765 = vrot.slane %v711, 1
      %v766 = vrot.slane %v716, 1
      %v767 = vrot.slane %v721, 1
      %v768 = vrot.slane %v726, 1
      %v769 = vrot.slane %v731, 1
      %v770 = vrot.slane %v736, 1
      %v771 = vrot.slane %v741, 1
      %v772 = vrot.slane %v746, 1
      %v773 = vrot.slane %v751, 1
      %v774 = vrot.slane %v756, 1
      %v775 = vrot.slane %v761, 1
      %v776 = vlaneseq
      %v777 = vshrl.u32 %v776, 7
      %vm778 = vcmp.lt.s32.totalorder %v777, 7
      %v779 = vsel %vm778, %v774, %v775
      %v780 = vsel %vm778, %v773, %v774
      %v781 = vsel %vm778, %v772, %v773
      %v782 = vsel %vm778, %v771, %v772
      %v783 = vsel %vm778, %v770, %v771
      %v784 = vsel %vm778, %v769, %v770
      %v785 = vsel %vm778, %v768, %v769
      %v786 = vsel %vm778, %v767, %v768
      %v787 = vsel %vm778, %v766, %v767
      %v788 = vsel %vm778, %v765, %v766
      %v789 = vsel %vm778, %v764, %v765
      %v790 = vsel %vm778, %v775, %v764
      %v791 = vadd.f32 %v422, %v789
      %v792 = vadd.f32 %v427, %v788
      %v793 = vadd.f32 %v432, %v787
      %v794 = vadd.f32 %v437, %v786
      %v795 = vadd.f32 %v442, %v785
      %v796 = vadd.f32 %v447, %v784
      %v797 = vadd.f32 %v452, %v783
      %v798 = vadd.f32 %v457, %v782
      %v799 = vadd.f32 %v462, %v781
      %v800 = vadd.f32 %v467, %v780
      %v801 = vadd.f32 %v472, %v779
      %v802 = vadd.f32 %v477, %v790
      %v804 = vlaneseq
      %v805 = vshrl.u32 %v804, 7
      %v806 = vsub.s32 0, %v805
      %v807 = vrot.slane %v171, %v806
      %v809 = vadd.f32 %v791, %v807
      %v810 = vadd.f32 %v792, %v807
      %v811 = vadd.f32 %v793, %v807
      %v812 = vadd.f32 %v794, %v807
      %v813 = vadd.f32 %v795, %v807
      %v814 = vadd.f32 %v796, %v807
      %v815 = vadd.f32 %v797, %v807
      %v816 = vadd.f32 %v798, %v807
      %v817 = vadd.f32 %v799, %v807
      %v818 = vadd.f32 %v800, %v807
      %v819 = vadd.f32 %v801, %v807
      %v820 = vadd.f32 %v802, %v807
      %v821 = vmax.f32 %v809, 0.0
      %v822 = vmax.f32 %v810, 0.0
      %v823 = vmax.f32 %v811, 0.0
      %v824 = vmax.f32 %v812, 0.0
      %v825 = vmax.f32 %v813, 0.0
      %v826 = vmax.f32 %v814, 0.0
      %v827 = vmax.f32 %v815, 0.0
      %v828 = vmax.f32 %v816, 0.0
      %v829 = vmax.f32 %v817, 0.0
      %v830 = vmax.f32 %v818, 0.0
      %v831 = vmax.f32 %v819, 0.0
      %v832 = vmax.f32 %v820, 0.0
      %833 = vst [vmem:[%s170] sm:$0xff] %v821
      %834 = vst [vmem:[%s170 + $0x8] sm:$0xff] %v822
      %835 = vst [vmem:[%s170 + $0x10] sm:$0xff] %v823
      %836 = vst [vmem:[%s170 + $0x18] sm:$0xff] %v824
      %837 = vst [vmem:[%s170 + $0x20] sm:$0xff] %v825
      %838 = vst [vmem:[%s170 + $0x28] sm:$0xff] %v826
      %839 = vst [vmem:[%s170 + $0x30] sm:$0xff] %v827
      %840 = vst [vmem:[%s170 + $0x38] sm:$0xff] %v828
      %841 = vst [vmem:[%s170 + $0x40] sm:$0xff] %v829
      %842 = vst [vmem:[%s170 + $0x48] sm:$0xff] %v830
      %843 = vst [vmem:[%s170 + $0x50] sm:$0xff] %v831
      %844 = vst [vmem:[%s170 + $0x58] sm:$0xff] %v832
      %s845 = scalar_lea.vmem %s165, 96
      %v846 = vld [vmem:[%s845] sm:$0xff]
      %v847 = vld [vmem:[%s845 + $0x8] sm:$0xff]
      %v848 = vld [vmem:[%s845 + $0x10] sm:$0xff]
      %v849 = vld [vmem:[%s845 + $0x18] sm:$0xff]
      %v850 = vld [vmem:[%s845 + $0x20] sm:$0xff]
      %v851 = vld [vmem:[%s845 + $0x28] sm:$0xff]
      %v852 = vld [vmem:[%s845 + $0x30] sm:$0xff]
      %v853 = vld [vmem:[%s845 + $0x38] sm:$0xff]
      %v854 = vld [vmem:[%s845 + $0x40] sm:$0xff]
      %v855 = vld [vmem:[%s845 + $0x48] sm:$0xff]
      %v856 = vld [vmem:[%s845 + $0x50] sm:$0xff]
      %v857 = vld [vmem:[%s845 + $0x58] sm:$0xff]
      %s858 = scalar_lea.vmem %s165, 120
      %v859 = vld [vmem:[%s858] sm:$0xff]
      %v860 = vld [vmem:[%s858 + $0x8] sm:$0xff]
      %v861 = vld [vmem:[%s858 + $0x10] sm:$0xff]
      %v862 = vld [vmem:[%s858 + $0x18] sm:$0xff]
      %v863 = vld [vmem:[%s858 + $0x20] sm:$0xff]
      %v864 = vld [vmem:[%s858 + $0x28] sm:$0xff]
      %v865 = vld [vmem:[%s858 + $0x30] sm:$0xff]
      %v866 = vld [vmem:[%s858 + $0x38] sm:$0xff]
      %v867 = vld [vmem:[%s858 + $0x40] sm:$0xff]
      %v868 = vld [vmem:[%s858 + $0x48] sm:$0xff]
      %v869 = vld [vmem:[%s858 + $0x50] sm:$0xff]
      %v870 = vld [vmem:[%s858 + $0x58] sm:$0xff]
      %v871 = vld [vmem:[%s1] sm:$0xff]
      %v872 = vld [vmem:[%s1 + $0x8] sm:$0xff]
      %v873 = vld [vmem:[%s1 + $0x10] sm:$0xff]
      %v874 = vld [vmem:[%s1 + $0x18] sm:$0xff]
      %v875 = vld [vmem:[%s1 + $0x20] sm:$0xff]
      %v876 = vld [vmem:[%s1 + $0x28] sm:$0xff]
      %v877 = vld [vmem:[%s1 + $0x30] sm:$0xff]
      %v878 = vld [vmem:[%s1 + $0x38] sm:$0xff]
      %v879 = vld [vmem:[%s1 + $0x40] sm:$0xff]
      %v880 = vld [vmem:[%s1 + $0x48] sm:$0xff]
      %v881 = vld [vmem:[%s1 + $0x50] sm:$0xff]
      %v882 = vld [vmem:[%s1 + $0x58] sm:$0xff]
      %v883 = vld [vmem:[%s1 + $0x60] sm:$0xff]
      %v884 = vld [vmem:[%s1 + $0x68] sm:$0xff]
      %v885 = vld [vmem:[%s1 + $0x70] sm:$0xff]
      %v886 = vld [vmem:[%s1 + $0x78] sm:$0xff]
      %v887 = vld [vmem:[%s213] sm:$0xff]
      %v888 = vld [vmem:[%s213 + $0x8] sm:$0xff]
      %v889 = vld [vmem:[%s213 + $0x10] sm:$0xff]
      %v890 = vld [vmem:[%s213 + $0x18] sm:$0xff]
      %v891 = vld [vmem:[%s213 + $0x20] sm:$0xff]
      %v892 = vld [vmem:[%s213 + $0x28] sm:$0xff]
      %v893 = vld [vmem:[%s213 + $0x30] sm:$0xff]
      %v894 = vld [vmem:[%s213 + $0x38] sm:$0xff]
      %v895 = vld [vmem:[%s213 + $0x40] sm:$0xff]
      %v896 = vld [vmem:[%s213 + $0x48] sm:$0xff]
      %v897 = vld [vmem:[%s213 + $0x50] sm:$0xff]
      %v898 = vld [vmem:[%s213 + $0x58] sm:$0xff]
      %v899 = vld [vmem:[%s213 + $0x60] sm:$0xff]
      %v900 = vld [vmem:[%s213 + $0x68] sm:$0xff]
      %v901 = vld [vmem:[%s213 + $0x70] sm:$0xff]
      %v902 = vld [vmem:[%s213 + $0x78] sm:$0xff]
      %903 = vmatprep.subr.mxu0 0.0
      %904 = vmatpush1.msra.mxu0 %v887
      %905 = vmatprep.subr.mxu0 0.0
      %906 = vmatpush1.msra.mxu0 %v888
      %907 = vmatprep.subr.mxu0 0.0
      %908 = vmatpush1.msra.mxu0 %v889
      %909 = vmatprep.subr.mxu0 0.0
      %910 = vmatpush1.msra.mxu0 %v890
      %911 = vmatprep.subr.mxu0 0.0
      %912 = vmatpush1.msra.mxu0 %v891
      %913 = vmatprep.subr.mxu0 0.0
      %914 = vmatpush1.msra.mxu0 %v892
      %915 = vmatprep.subr.mxu0 0.0
      %916 = vmatpush1.msra.mxu0 %v893
      %917 = vmatprep.subr.mxu0 0.0
      %918 = vmatpush1.msra.mxu0 %v894
      %919 = vmatprep.subr.mxu0 0.0
      %920 = vmatpush1.msra.mxu0 %v895
      %921 = vmatprep.subr.mxu0 0.0
      %922 = vmatpush1.msra.mxu0 %v896
      %923 = vmatprep.subr.mxu0 0.0
      %924 = vmatpush1.msra.mxu0 %v897
      %925 = vmatprep.subr.mxu0 0.0
      %926 = vmatpush1.msra.mxu0 %v898
      %927 = vmatprep.subr.mxu0 0.0
      %928 = vmatpush1.msra.mxu0 %v899
      %929 = vmatprep.subr.mxu0 0.0
      %930 = vmatpush1.msra.mxu0 %v900
      %931 = vmatprep.subr.mxu0 0.0
      %932 = vmatpush1.msra.mxu0 %v901
      %933 = vmatprep.subr.mxu0 0.0
      %934 = vmatpush1.msra.mxu0 %v902
      %935 = vmatprep.subr.mxu0 0.0
      %936 = vmatpush1.msra.mxu0 0.0
      %937 = vmatprep.subr.mxu0 0.0
      %938 = vmatpush1.msra.mxu0 0.0
      %939 = vmatprep.subr.mxu0 0.0
      %940 = vmatpush1.msra.mxu0 0.0
      %941 = vmatprep.subr.mxu0 0.0
      %942 = vmatpush1.msra.mxu0 0.0
      %943 = vmatprep.subr.mxu0 0.0
      %944 = vmatpush1.msra.mxu0 0.0
      %945 = vmatprep.subr.mxu0 0.0
      %946 = vmatpush1.msra.mxu0 0.0
      %947 = vmatprep.subr.mxu0 0.0
      %948 = vmatpush1.msra.mxu0 0.0
      %949 = vmatprep.subr.mxu0 0.0
      %950 = vmatpush1.msra.mxu0 0.0
      %951 = vmatprep.subr.mxu0 0.0
      %952 = vmatpush1.msra.mxu0 0.0
      %953 = vmatprep.subr.mxu0 0.0
      %954 = vmatpush1.msra.mxu0 0.0
      %955 = vmatprep.subr.mxu0 0.0
      %956 = vmatpush1.msra.mxu0 0.0
      %957 = vmatprep.subr.mxu0 0.0
      %958 = vmatpush1.msra.mxu0 0.0
      %959 = vmatprep.subr.mxu0 0.0
      %960 = vmatpush1.msra.mxu0 0.0
      %961 = vmatprep.subr.mxu0 0.0
      %962 = vmatpush1.msra.mxu0 0.0
      %963 = vmatprep.subr.mxu0 0.0
      %964 = vmatpush1.msra.mxu0 0.0
      %965 = vmatprep.subr.mxu0 0.0
      %966 = vmatpush1.msra.mxu0 0.0
      %967 = vmatprep.mubr.f32.mxu0 0.0
      %968 = vmatmul.mubr.f32.gmra.mrb[0].mxu0 %v859
      %v969 = vpop.f32.mrb[0].mxu0
      %v970 = vadd.f32 0.0, %v969
      %v971 = vpop.f32.mrb[0].mxu0
      %972 = vmatprep.mubr.f32.mxu0 0.0
      %973 = vmatmul.mubr.f32.gmra.mrb[0].mxu0 %v860
      %v974 = vpop.f32.mrb[0].mxu0
      %v975 = vadd.f32 0.0, %v974
      %v976 = vpop.f32.mrb[0].mxu0
      %977 = vmatprep.mubr.f32.mxu0 0.0
      %978 = vmatmul.mubr.f32.gmra.mrb[0].mxu0 %v861
      %v979 = vpop.f32.mrb[0].mxu0
      %v980 = vadd.f32 0.0, %v979
      %v981 = vpop.f32.mrb[0].mxu0
      %982 = vmatprep.mubr.f32.mxu0 0.0
      %983 = vmatmul.mubr.f32.gmra.mrb[0].mxu0 %v862
      %v984 = vpop.f32.mrb[0].mxu0
      %v985 = vadd.f32 0.0, %v984
      %v986 = vpop.f32.mrb[0].mxu0
      %987 = vmatprep.mubr.f32.mxu0 0.0
      %988 = vmatmul.mubr.f32.gmra.mrb[0].mxu0 %v863
      %v989 = vpop.f32.mrb[0].mxu0
      %v990 = vadd.f32 0.0, %v989
      %v991 = vpop.f32.mrb[0].mxu0
      %992 = vmatprep.mubr.f32.mxu0 0.0
      %993 = vmatmul.mubr.f32.gmra.mrb[0].mxu0 %v864
      %v994 = vpop.f32.mrb[0].mxu0
      %v995 = vadd.f32 0.0, %v994
      %v996 = vpop.f32.mrb[0].mxu0
      %997 = vmatprep.mubr.f32.mxu0 0.0
      %998 = vmatmul.mubr.f32.gmra.mrb[0].mxu0 %v865
      %v999 = vpop.f32.mrb[0].mxu0
      %v1000 = vadd.f32 0.0, %v999
      %v1001 = vpop.f32.mrb[0].mxu0
      %1002 = vmatprep.mubr.f32.mxu0 0.0
      %1003 = vmatmul.mubr.f32.gmra.mrb[0].mxu0 %v866
      %v1004 = vpop.f32.mrb[0].mxu0
      %v1005 = vadd.f32 0.0, %v1004
      %v1006 = vpop.f32.mrb[0].mxu0
      %1007 = vmatprep.mubr.f32.mxu0 0.0
      %1008 = vmatmul.mubr.f32.gmra.mrb[0].mxu0 %v867
      %v1009 = vpop.f32.mrb[0].mxu0
      %v1010 = vadd.f32 0.0, %v1009
      %v1011 = vpop.f32.mrb[0].mxu0
      %1012 = vmatprep.mubr.f32.mxu0 0.0
      %1013 = vmatmul.mubr.f32.gmra.mrb[0].mxu0 %v868
      %v1014 = vpop.f32.mrb[0].mxu0
      %v1015 = vadd.f32 0.0, %v1014
      %v1016 = vpop.f32.mrb[0].mxu0
      %1017 = vmatprep.mubr.f32.mxu0 0.0
      %1018 = vmatmul.mubr.f32.gmra.mrb[0].mxu0 %v869
      %v1019 = vpop.f32.mrb[0].mxu0
      %v1020 = vadd.f32 0.0, %v1019
      %v1021 = vpop.f32.mrb[0].mxu0
      %1022 = vmatprep.mubr.f32.mxu0 0.0
      %1023 = vmatmul.mubr.f32.gmra.mrb[0].mxu0 %v870
      %v1024 = vpop.f32.mrb[0].mxu0
      %v1025 = vadd.f32 0.0, %v1024
      %v1026 = vpop.f32.mrb[0].mxu0
      %1027 = vdwg.mxu0
      %1028 = vmatprep.subr.mxu0 0.0
      %1029 = vmatpush1.msra.mxu0 %v871
      %1030 = vmatprep.subr.mxu0 0.0
      %1031 = vmatpush1.msra.mxu0 %v872
      %1032 = vmatprep.subr.mxu0 0.0
      %1033 = vmatpush1.msra.mxu0 %v873
      %1034 = vmatprep.subr.mxu0 0.0
      %1035 = vmatpush1.msra.mxu0 %v874
      %1036 = vmatprep.subr.mxu0 0.0
      %1037 = vmatpush1.msra.mxu0 %v875
      %1038 = vmatprep.subr.mxu0 0.0
      %1039 = vmatpush1.msra.mxu0 %v876
      %1040 = vmatprep.subr.mxu0 0.0
      %1041 = vmatpush1.msra.mxu0 %v877
      %1042 = vmatprep.subr.mxu0 0.0
      %1043 = vmatpush1.msra.mxu0 %v878
      %1044 = vmatprep.subr.mxu0 0.0
      %1045 = vmatpush1.msra.mxu0 %v879
      %1046 = vmatprep.subr.mxu0 0.0
      %1047 = vmatpush1.msra.mxu0 %v880
      %1048 = vmatprep.subr.mxu0 0.0
      %1049 = vmatpush1.msra.mxu0 %v881
      %1050 = vmatprep.subr.mxu0 0.0
      %1051 = vmatpush1.msra.mxu0 %v882
      %1052 = vmatprep.subr.mxu0 0.0
      %1053 = vmatpush1.msra.mxu0 %v883
      %1054 = vmatprep.subr.mxu0 0.0
      %1055 = vmatpush1.msra.mxu0 %v884
      %1056 = vmatprep.subr.mxu0 0.0
      %1057 = vmatpush1.msra.mxu0 %v885
      %1058 = vmatprep.subr.mxu0 0.0
      %1059 = vmatpush1.msra.mxu0 %v886
      %1060 = vmatprep.subr.mxu0 0.0
      %1061 = vmatpush1.msra.mxu0 0.0
      %1062 = vmatprep.subr.mxu0 0.0
      %1063 = vmatpush1.msra.mxu0 0.0
      %1064 = vmatprep.subr.mxu0 0.0
      %1065 = vmatpush1.msra.mxu0 0.0
      %1066 = vmatprep.subr.mxu0 0.0
      %1067 = vmatpush1.msra.mxu0 0.0
      %1068 = vmatprep.subr.mxu0 0.0
      %1069 = vmatpush1.msra.mxu0 0.0
      %1070 = vmatprep.subr.mxu0 0.0
      %1071 = vmatpush1.msra.mxu0 0.0
      %1072 = vmatprep.subr.mxu0 0.0
      %1073 = vmatpush1.msra.mxu0 0.0
      %1074 = vmatprep.subr.mxu0 0.0
      %1075 = vmatpush1.msra.mxu0 0.0
      %1076 = vmatprep.subr.mxu0 0.0
      %1077 = vmatpush1.msra.mxu0 0.0
      %1078 = vmatprep.subr.mxu0 0.0
      %1079 = vmatpush1.msra.mxu0 0.0
      %1080 = vmatprep.subr.mxu0 0.0
      %1081 = vmatpush1.msra.mxu0 0.0
      %1082 = vmatprep.subr.mxu0 0.0
      %1083 = vmatpush1.msra.mxu0 0.0
      %1084 = vmatprep.subr.mxu0 0.0
      %1085 = vmatpush1.msra.mxu0 0.0
      %1086 = vmatprep.subr.mxu0 0.0
      %1087 = vmatpush1.msra.mxu0 0.0
      %1088 = vmatprep.subr.mxu0 0.0
      %1089 = vmatpush1.msra.mxu0 0.0
      %1090 = vmatprep.subr.mxu0 0.0
      %1091 = vmatpush1.msra.mxu0 0.0
      %1092 = vmatprep.mubr.f32.mxu0 0.0
      %1093 = vmatmul.mubr.f32.gmra.mrb[0].mxu0 %v846
      %v1094 = vpop.f32.mrb[0].mxu0
      %v1095 = vadd.f32 %v970, %v1094
      %v1096 = vpop.f32.mrb[0].mxu0
      %1097 = vmatprep.mubr.f32.mxu0 0.0
      %1098 = vmatmul.mubr.f32.gmra.mrb[0].mxu0 %v847
      %v1099 = vpop.f32.mrb[0].mxu0
      %v1100 = vadd.f32 %v975, %v1099
      %v1101 = vpop.f32.mrb[0].mxu0
      %1102 = vmatprep.mubr.f32.mxu0 0.0
      %1103 = vmatmul.mubr.f32.gmra.mrb[0].mxu0 %v848
      %v1104 = vpop.f32.mrb[0].mxu0
      %v1105 = vadd.f32 %v980, %v1104
      %v1106 = vpop.f32.mrb[0].mxu0
      %1107 = vmatprep.mubr.f32.mxu0 0.0
      %1108 = vmatmul.mubr.f32.gmra.mrb[0].mxu0 %v849
      %v1109 = vpop.f32.mrb[0].mxu0
      %v1110 = vadd.f32 %v985, %v1109
      %v1111 = vpop.f32.mrb[0].mxu0
      %1112 = vmatprep.mubr.f32.mxu0 0.0
      %1113 = vmatmul.mubr.f32.gmra.mrb[0].mxu0 %v850
      %v1114 = vpop.f32.mrb[0].mxu0
      %v1115 = vadd.f32 %v990, %v1114
      %v1116 = vpop.f32.mrb[0].mxu0
      %1117 = vmatprep.mubr.f32.mxu0 0.0
      %1118 = vmatmul.mubr.f32.gmra.mrb[0].mxu0 %v851
      %v1119 = vpop.f32.mrb[0].mxu0
      %v1120 = vadd.f32 %v995, %v1119
      %v1121 = vpop.f32.mrb[0].mxu0
      %1122 = vmatprep.mubr.f32.mxu0 0.0
      %1123 = vmatmul.mubr.f32.gmra.mrb[0].mxu0 %v852
      %v1124 = vpop.f32.mrb[0].mxu0
      %v1125 = vadd.f32 %v1000, %v1124
      %v1126 = vpop.f32.mrb[0].mxu0
      %1127 = vmatprep.mubr.f32.mxu0 0.0
      %1128 = vmatmul.mubr.f32.gmra.mrb[0].mxu0 %v853
      %v1129 = vpop.f32.mrb[0].mxu0
      %v1130 = vadd.f32 %v1005, %v1129
      %v1131 = vpop.f32.mrb[0].mxu0
      %1132 = vmatprep.mubr.f32.mxu0 0.0
      %1133 = vmatmul.mubr.f32.gmra.mrb[0].mxu0 %v854
      %v1134 = vpop.f32.mrb[0].mxu0
      %v1135 = vadd.f32 %v1010, %v1134
      %v1136 = vpop.f32.mrb[0].mxu0
      %1137 = vmatprep.mubr.f32.mxu0 0.0
      %1138 = vmatmul.mubr.f32.gmra.mrb[0].mxu0 %v855
      %v1139 = vpop.f32.mrb[0].mxu0
      %v1140 = vadd.f32 %v1015, %v1139
      %v1141 = vpop.f32.mrb[0].mxu0
      %1142 = vmatprep.mubr.f32.mxu0 0.0
      %1143 = vmatmul.mubr.f32.gmra.mrb[0].mxu0 %v856
      %v1144 = vpop.f32.mrb[0].mxu0
      %v1145 = vadd.f32 %v1020, %v1144
      %v1146 = vpop.f32.mrb[0].mxu0
      %1147 = vmatprep.mubr.f32.mxu0 0.0
      %1148 = vmatmul.mubr.f32.gmra.mrb[0].mxu0 %v857
      %v1149 = vpop.f32.mrb[0].mxu0
      %v1150 = vadd.f32 %v1025, %v1149
      %v1151 = vpop.f32.mrb[0].mxu0
      %1152 = vdwg.mxu0
      %v1153 = vld [vmem:[%s480] sm:$0xff]
      %v1154 = vld [vmem:[%s480 + $0x8] sm:$0xff]
      %v1155 = vld [vmem:[%s480 + $0x10] sm:$0xff]
      %v1156 = vld [vmem:[%s480 + $0x18] sm:$0xff]
      %v1157 = vld [vmem:[%s480 + $0x20] sm:$0xff]
      %v1158 = vld [vmem:[%s480 + $0x28] sm:$0xff]
      %v1159 = vld [vmem:[%s480 + $0x30] sm:$0xff]
      %v1160 = vld [vmem:[%s480 + $0x38] sm:$0xff]
      %v1161 = vld [vmem:[%s480 + $0x40] sm:$0xff]
      %v1162 = vld [vmem:[%s480 + $0x48] sm:$0xff]
      %v1163 = vld [vmem:[%s480 + $0x50] sm:$0xff]
      %v1164 = vld [vmem:[%s480 + $0x58] sm:$0xff]
      %v1165 = vld [vmem:[%s480 + $0x60] sm:$0xff]
      %v1166 = vld [vmem:[%s480 + $0x68] sm:$0xff]
      %v1167 = vld [vmem:[%s480 + $0x70] sm:$0xff]
      %v1168 = vld [vmem:[%s480 + $0x78] sm:$0xff]
      %v1169 = vld [vmem:[%s497] sm:$0xff]
      %v1170 = vld [vmem:[%s497 + $0x8] sm:$0xff]
      %v1171 = vld [vmem:[%s497 + $0x10] sm:$0xff]
      %v1172 = vld [vmem:[%s497 + $0x18] sm:$0xff]
      %v1173 = vld [vmem:[%s497 + $0x20] sm:$0xff]
      %v1174 = vld [vmem:[%s497 + $0x28] sm:$0xff]
      %v1175 = vld [vmem:[%s497 + $0x30] sm:$0xff]
      %v1176 = vld [vmem:[%s497 + $0x38] sm:$0xff]
      %v1177 = vld [vmem:[%s497 + $0x40] sm:$0xff]
      %v1178 = vld [vmem:[%s497 + $0x48] sm:$0xff]
      %v1179 = vld [vmem:[%s497 + $0x50] sm:$0xff]
      %v1180 = vld [vmem:[%s497 + $0x58] sm:$0xff]
      %v1181 = vld [vmem:[%s497 + $0x60] sm:$0xff]
      %v1182 = vld [vmem:[%s497 + $0x68] sm:$0xff]
      %v1183 = vld [vmem:[%s497 + $0x70] sm:$0xff]
      %v1184 = vld [vmem:[%s497 + $0x78] sm:$0xff]
      %1185 = vmatprep.subr.mxu0 0.0
      %1186 = vmatpush1.msra.mxu0 %v1169
      %1187 = vmatprep.subr.mxu0 0.0
      %1188 = vmatpush1.msra.mxu0 %v1170
      %1189 = vmatprep.subr.mxu0 0.0
      %1190 = vmatpush1.msra.mxu0 %v1171
      %1191 = vmatprep.subr.mxu0 0.0
      %1192 = vmatpush1.msra.mxu0 %v1172
      %1193 = vmatprep.subr.mxu0 0.0
      %1194 = vmatpush1.msra.mxu0 %v1173
      %1195 = vmatprep.subr.mxu0 0.0
      %1196 = vmatpush1.msra.mxu0 %v1174
      %1197 = vmatprep.subr.mxu0 0.0
      %1198 = vmatpush1.msra.mxu0 %v1175
      %1199 = vmatprep.subr.mxu0 0.0
      %1200 = vmatpush1.msra.mxu0 %v1176
      %1201 = vmatprep.subr.mxu0 0.0
      %1202 = vmatpush1.msra.mxu0 %v1177
      %1203 = vmatprep.subr.mxu0 0.0
      %1204 = vmatpush1.msra.mxu0 %v1178
      %1205 = vmatprep.subr.mxu0 0.0
      %1206 = vmatpush1.msra.mxu0 %v1179
      %1207 = vmatprep.subr.mxu0 0.0
      %1208 = vmatpush1.msra.mxu0 %v1180
      %1209 = vmatprep.subr.mxu0 0.0
      %1210 = vmatpush1.msra.mxu0 %v1181
      %1211 = vmatprep.subr.mxu0 0.0
      %1212 = vmatpush1.msra.mxu0 %v1182
      %1213 = vmatprep.subr.mxu0 0.0
      %1214 = vmatpush1.msra.mxu0 %v1183
      %1215 = vmatprep.subr.mxu0 0.0
      %1216 = vmatpush1.msra.mxu0 %v1184
      %1217 = vmatprep.subr.mxu0 0.0
      %1218 = vmatpush1.msra.mxu0 0.0
      %1219 = vmatprep.subr.mxu0 0.0
      %1220 = vmatpush1.msra.mxu0 0.0
      %1221 = vmatprep.subr.mxu0 0.0
      %1222 = vmatpush1.msra.mxu0 0.0
      %1223 = vmatprep.subr.mxu0 0.0
      %1224 = vmatpush1.msra.mxu0 0.0
      %1225 = vmatprep.subr.mxu0 0.0
      %1226 = vmatpush1.msra.mxu0 0.0
      %1227 = vmatprep.subr.mxu0 0.0
      %1228 = vmatpush1.msra.mxu0 0.0
      %1229 = vmatprep.subr.mxu0 0.0
      %1230 = vmatpush1.msra.mxu0 0.0
      %1231 = vmatprep.subr.mxu0 0.0
      %1232 = vmatpush1.msra.mxu0 0.0
      %1233 = vmatprep.subr.mxu0 0.0
      %1234 = vmatpush1.msra.mxu0 0.0
      %1235 = vmatprep.subr.mxu0 0.0
      %1236 = vmatpush1.msra.mxu0 0.0
      %1237 = vmatprep.subr.mxu0 0.0
      %1238 = vmatpush1.msra.mxu0 0.0
      %1239 = vmatprep.subr.mxu0 0.0
      %1240 = vmatpush1.msra.mxu0 0.0
      %1241 = vmatprep.subr.mxu0 0.0
      %1242 = vmatpush1.msra.mxu0 0.0
      %1243 = vmatprep.subr.mxu0 0.0
      %1244 = vmatpush1.msra.mxu0 0.0
      %1245 = vmatprep.subr.mxu0 0.0
      %1246 = vmatpush1.msra.mxu0 0.0
      %1247 = vmatprep.subr.mxu0 0.0
      %1248 = vmatpush1.msra.mxu0 0.0
      %1249 = vmatprep.mubr.f32.mxu0 0.0
      %1250 = vmatmul.mubr.f32.gmra.mrb[0].mxu0 %v859
      %v1251 = vpop.f32.mrb[0].mxu0
      %v1252 = vadd.f32 0.0, %v1251
      %v1253 = vpop.f32.mrb[0].mxu0
      %1254 = vmatprep.mubr.f32.mxu0 0.0
      %1255 = vmatmul.mubr.f32.gmra.mrb[0].mxu0 %v860
      %v1256 = vpop.f32.mrb[0].mxu0
      %v1257 = vadd.f32 0.0, %v1256
      %v1258 = vpop.f32.mrb[0].mxu0
      %1259 = vmatprep.mubr.f32.mxu0 0.0
      %1260 = vmatmul.mubr.f32.gmra.mrb[0].mxu0 %v861
      %v1261 = vpop.f32.mrb[0].mxu0
      %v1262 = vadd.f32 0.0, %v1261
      %v1263 = vpop.f32.mrb[0].mxu0
      %1264 = vmatprep.mubr.f32.mxu0 0.0
      %1265 = vmatmul.mubr.f32.gmra.mrb[0].mxu0 %v862
      %v1266 = vpop.f32.mrb[0].mxu0
      %v1267 = vadd.f32 0.0, %v1266
      %v1268 = vpop.f32.mrb[0].mxu0
      %1269 = vmatprep.mubr.f32.mxu0 0.0
      %1270 = vmatmul.mubr.f32.gmra.mrb[0].mxu0 %v863
      %v1271 = vpop.f32.mrb[0].mxu0
      %v1272 = vadd.f32 0.0, %v1271
      %v1273 = vpop.f32.mrb[0].mxu0
      %1274 = vmatprep.mubr.f32.mxu0 0.0
      %1275 = vmatmul.mubr.f32.gmra.mrb[0].mxu0 %v864
      %v1276 = vpop.f32.mrb[0].mxu0
      %v1277 = vadd.f32 0.0, %v1276
      %v1278 = vpop.f32.mrb[0].mxu0
      %1279 = vmatprep.mubr.f32.mxu0 0.0
      %1280 = vmatmul.mubr.f32.gmra.mrb[0].mxu0 %v865
      %v1281 = vpop.f32.mrb[0].mxu0
      %v1282 = vadd.f32 0.0, %v1281
      %v1283 = vpop.f32.mrb[0].mxu0
      %1284 = vmatprep.mubr.f32.mxu0 0.0
      %1285 = vmatmul.mubr.f32.gmra.mrb[0].mxu0 %v866
      %v1286 = vpop.f32.mrb[0].mxu0
      %v1287 = vadd.f32 0.0, %v1286
      %v1288 = vpop.f32.mrb[0].mxu0
      %1289 = vmatprep.mubr.f32.mxu0 0.0
      %1290 = vmatmul.mubr.f32.gmra.mrb[0].mxu0 %v867
      %v1291 = vpop.f32.mrb[0].mxu0
      %v1292 = vadd.f32 0.0, %v1291
      %v1293 = vpop.f32.mrb[0].mxu0
      %1294 = vmatprep.mubr.f32.mxu0 0.0
      %1295 = vmatmul.mubr.f32.gmra.mrb[0].mxu0 %v868
      %v1296 = vpop.f32.mrb[0].mxu0
      %v1297 = vadd.f32 0.0, %v1296
      %v1298 = vpop.f32.mrb[0].mxu0
      %1299 = vmatprep.mubr.f32.mxu0 0.0
      %1300 = vmatmul.mubr.f32.gmra.mrb[0].mxu0 %v869
      %v1301 = vpop.f32.mrb[0].mxu0
      %v1302 = vadd.f32 0.0, %v1301
      %v1303 = vpop.f32.mrb[0].mxu0
      %1304 = vmatprep.mubr.f32.mxu0 0.0
      %1305 = vmatmul.mubr.f32.gmra.mrb[0].mxu0 %v870
      %v1306 = vpop.f32.mrb[0].mxu0
      %v1307 = vadd.f32 0.0, %v1306
      %v1308 = vpop.f32.mrb[0].mxu0
      %1309 = vdwg.mxu0
      %1310 = vmatprep.subr.mxu0 0.0
      %1311 = vmatpush1.msra.mxu0 %v1153
      %1312 = vmatprep.subr.mxu0 0.0
      %1313 = vmatpush1.msra.mxu0 %v1154
      %1314 = vmatprep.subr.mxu0 0.0
      %1315 = vmatpush1.msra.mxu0 %v1155
      %1316 = vmatprep.subr.mxu0 0.0
      %1317 = vmatpush1.msra.mxu0 %v1156
      %1318 = vmatprep.subr.mxu0 0.0
      %1319 = vmatpush1.msra.mxu0 %v1157
      %1320 = vmatprep.subr.mxu0 0.0
      %1321 = vmatpush1.msra.mxu0 %v1158
      %1322 = vmatprep.subr.mxu0 0.0
      %1323 = vmatpush1.msra.mxu0 %v1159
      %1324 = vmatprep.subr.mxu0 0.0
      %1325 = vmatpush1.msra.mxu0 %v1160
      %1326 = vmatprep.subr.mxu0 0.0
      %1327 = vmatpush1.msra.mxu0 %v1161
      %1328 = vmatprep.subr.mxu0 0.0
      %1329 = vmatpush1.msra.mxu0 %v1162
      %1330 = vmatprep.subr.mxu0 0.0
      %1331 = vmatpush1.msra.mxu0 %v1163
      %1332 = vmatprep.subr.mxu0 0.0
      %1333 = vmatpush1.msra.mxu0 %v1164
      %1334 = vmatprep.subr.mxu0 0.0
      %1335 = vmatpush1.msra.mxu0 %v1165
      %1336 = vmatprep.subr.mxu0 0.0
      %1337 = vmatpush1.msra.mxu0 %v1166
      %1338 = vmatprep.subr.mxu0 0.0
      %1339 = vmatpush1.msra.mxu0 %v1167
      %1340 = vmatprep.subr.mxu0 0.0
      %1341 = vmatpush1.msra.mxu0 %v1168
      %1342 = vmatprep.subr.mxu0 0.0
      %1343 = vmatpush1.msra.mxu0 0.0
      %1344 = vmatprep.subr.mxu0 0.0
      %1345 = vmatpush1.msra.mxu0 0.0
      %1346 = vmatprep.subr.mxu0 0.0
      %1347 = vmatpush1.msra.mxu0 0.0
      %1348 = vmatprep.subr.mxu0 0.0
      %1349 = vmatpush1.msra.mxu0 0.0
      %1350 = vmatprep.subr.mxu0 0.0
      %1351 = vmatpush1.msra.mxu0 0.0
      %1352 = vmatprep.subr.mxu0 0.0
      %1353 = vmatpush1.msra.mxu0 0.0
      %1354 = vmatprep.subr.mxu0 0.0
      %1355 = vmatpush1.msra.mxu0 0.0
      %1356 = vmatprep.subr.mxu0 0.0
      %1357 = vmatpush1.msra.mxu0 0.0
      %1358 = vmatprep.subr.mxu0 0.0
      %1359 = vmatpush1.msra.mxu0 0.0
      %1360 = vmatprep.subr.mxu0 0.0
      %1361 = vmatpush1.msra.mxu0 0.0
      %1362 = vmatprep.subr.mxu0 0.0
      %1363 = vmatpush1.msra.mxu0 0.0
      %1364 = vmatprep.subr.mxu0 0.0
      %1365 = vmatpush1.msra.mxu0 0.0
      %1366 = vmatprep.subr.mxu0 0.0
      %1367 = vmatpush1.msra.mxu0 0.0
      %1368 = vmatprep.subr.mxu0 0.0
      %1369 = vmatpush1.msra.mxu0 0.0
      %1370 = vmatprep.subr.mxu0 0.0
      %1371 = vmatpush1.msra.mxu0 0.0
      %1372 = vmatprep.subr.mxu0 0.0
      %1373 = vmatpush1.msra.mxu0 0.0
      %1374 = vmatprep.mubr.f32.mxu0 0.0
      %1375 = vmatmul.mubr.f32.gmra.mrb[0].mxu0 %v846
      %v1376 = vpop.f32.mrb[0].mxu0
      %v1377 = vadd.f32 %v1252, %v1376
      %v1378 = vpop.f32.mrb[0].mxu0
      %1379 = vmatprep.mubr.f32.mxu0 0.0
      %1380 = vmatmul.mubr.f32.gmra.mrb[0].mxu0 %v847
      %v1381 = vpop.f32.mrb[0].mxu0
      %v1382 = vadd.f32 %v1257, %v1381
      %v1383 = vpop.f32.mrb[0].mxu0
      %1384 = vmatprep.mubr.f32.mxu0 0.0
      %1385 = vmatmul.mubr.f32.gmra.mrb[0].mxu0 %v848
      %v1386 = vpop.f32.mrb[0].mxu0
      %v1387 = vadd.f32 %v1262, %v1386
      %v1388 = vpop.f32.mrb[0].mxu0
      %1389 = vmatprep.mubr.f32.mxu0 0.0
      %1390 = vmatmul.mubr.f32.gmra.mrb[0].mxu0 %v849
      %v1391 = vpop.f32.mrb[0].mxu0
      %v1392 = vadd.f32 %v1267, %v1391
      %v1393 = vpop.f32.mrb[0].mxu0
      %1394 = vmatprep.mubr.f32.mxu0 0.0
      %1395 = vmatmul.mubr.f32.gmra.mrb[0].mxu0 %v850
      %v1396 = vpop.f32.mrb[0].mxu0
      %v1397 = vadd.f32 %v1272, %v1396
      %v1398 = vpop.f32.mrb[0].mxu0
      %1399 = vmatprep.mubr.f32.mxu0 0.0
      %1400 = vmatmul.mubr.f32.gmra.mrb[0].mxu0 %v851
      %v1401 = vpop.f32.mrb[0].mxu0
      %v1402 = vadd.f32 %v1277, %v1401
      %v1403 = vpop.f32.mrb[0].mxu0
      %1404 = vmatprep.mubr.f32.mxu0 0.0
      %1405 = vmatmul.mubr.f32.gmra.mrb[0].mxu0 %v852
      %v1406 = vpop.f32.mrb[0].mxu0
      %v1407 = vadd.f32 %v1282, %v1406
      %v1408 = vpop.f32.mrb[0].mxu0
      %1409 = vmatprep.mubr.f32.mxu0 0.0
      %1410 = vmatmul.mubr.f32.gmra.mrb[0].mxu0 %v853
      %v1411 = vpop.f32.mrb[0].mxu0
      %v1412 = vadd.f32 %v1287, %v1411
      %v1413 = vpop.f32.mrb[0].mxu0
      %1414 = vmatprep.mubr.f32.mxu0 0.0
      %1415 = vmatmul.mubr.f32.gmra.mrb[0].mxu0 %v854
      %v1416 = vpop.f32.mrb[0].mxu0
      %v1417 = vadd.f32 %v1292, %v1416
      %v1418 = vpop.f32.mrb[0].mxu0
      %1419 = vmatprep.mubr.f32.mxu0 0.0
      %1420 = vmatmul.mubr.f32.gmra.mrb[0].mxu0 %v855
      %v1421 = vpop.f32.mrb[0].mxu0
      %v1422 = vadd.f32 %v1297, %v1421
      %v1423 = vpop.f32.mrb[0].mxu0
      %1424 = vmatprep.mubr.f32.mxu0 0.0
      %1425 = vmatmul.mubr.f32.gmra.mrb[0].mxu0 %v856
      %v1426 = vpop.f32.mrb[0].mxu0
      %v1427 = vadd.f32 %v1302, %v1426
      %v1428 = vpop.f32.mrb[0].mxu0
      %1429 = vmatprep.mubr.f32.mxu0 0.0
      %1430 = vmatmul.mubr.f32.gmra.mrb[0].mxu0 %v857
      %v1431 = vpop.f32.mrb[0].mxu0
      %v1432 = vadd.f32 %v1307, %v1431
      %v1433 = vpop.f32.mrb[0].mxu0
      %1434 = vdwg.mxu0
      %v1435 = vrot.slane %v1377, 1
      %v1436 = vrot.slane %v1382, 1
      %v1437 = vrot.slane %v1387, 1
      %v1438 = vrot.slane %v1392, 1
      %v1439 = vrot.slane %v1397, 1
      %v1440 = vrot.slane %v1402, 1
      %v1441 = vrot.slane %v1407, 1
      %v1442 = vrot.slane %v1412, 1
      %v1443 = vrot.slane %v1417, 1
      %v1444 = vrot.slane %v1422, 1
      %v1445 = vrot.slane %v1427, 1
      %v1446 = vrot.slane %v1432, 1
      %v1447 = vsel %vm778, %v1445, %v1446
      %v1448 = vsel %vm778, %v1444, %v1445
      %v1449 = vsel %vm778, %v1443, %v1444
      %v1450 = vsel %vm778, %v1442, %v1443
      %v1451 = vsel %vm778, %v1441, %v1442
      %v1452 = vsel %vm778, %v1440, %v1441
      %v1453 = vsel %vm778, %v1439, %v1440
      %v1454 = vsel %vm778, %v1438, %v1439
      %v1455 = vsel %vm778, %v1437, %v1438
      %v1456 = vsel %vm778, %v1436, %v1437
      %v1457 = vsel %vm778, %v1435, %v1436
      %v1458 = vsel %vm778, %v1446, %v1435
      %v1459 = vadd.f32 %v1095, %v1457
      %v1460 = vadd.f32 %v1100, %v1456
      %v1461 = vadd.f32 %v1105, %v1455
      %v1462 = vadd.f32 %v1110, %v1454
      %v1463 = vadd.f32 %v1115, %v1453
      %v1464 = vadd.f32 %v1120, %v1452
      %v1465 = vadd.f32 %v1125, %v1451
      %v1466 = vadd.f32 %v1130, %v1450
      %v1467 = vadd.f32 %v1135, %v1449
      %v1468 = vadd.f32 %v1140, %v1448
      %v1469 = vadd.f32 %v1145, %v1447
      %v1470 = vadd.f32 %v1150, %v1458
      %v1471 = vadd.f32 %v1459, %v807
      %v1472 = vadd.f32 %v1460, %v807
      %v1473 = vadd.f32 %v1461, %v807
      %v1474 = vadd.f32 %v1462, %v807
      %v1475 = vadd.f32 %v1463, %v807
      %v1476 = vadd.f32 %v1464, %v807
      %v1477 = vadd.f32 %v1465, %v807
      %v1478 = vadd.f32 %v1466, %v807
      %v1479 = vadd.f32 %v1467, %v807
      %v1480 = vadd.f32 %v1468, %v807
      %v1481 = vadd.f32 %v1469, %v807
      %v1482 = vadd.f32 %v1470, %v807
      %v1483 = vmax.f32 %v1471, 0.0
      %v1484 = vmax.f32 %v1472, 0.0
      %v1485 = vmax.f32 %v1473, 0.0
      %v1486 = vmax.f32 %v1474, 0.0
      %v1487 = vmax.f32 %v1475, 0.0
      %v1488 = vmax.f32 %v1476, 0.0
      %v1489 = vmax.f32 %v1477, 0.0
      %v1490 = vmax.f32 %v1478, 0.0
      %v1491 = vmax.f32 %v1479, 0.0
      %v1492 = vmax.f32 %v1480, 0.0
      %v1493 = vmax.f32 %v1481, 0.0
      %v1494 = vmax.f32 %v1482, 0.0
      %s1495 = scalar_lea.vmem %s170, 96
      %1496 = vst [vmem:[%s1495] sm:$0xff] %v1483
      %1497 = vst [vmem:[%s1495 + $0x8] sm:$0xff] %v1484
      %1498 = vst [vmem:[%s1495 + $0x10] sm:$0xff] %v1485
      %1499 = vst [vmem:[%s1495 + $0x18] sm:$0xff] %v1486
      %1500 = vst [vmem:[%s1495 + $0x20] sm:$0xff] %v1487
      %1501 = vst [vmem:[%s1495 + $0x28] sm:$0xff] %v1488
      %1502 = vst [vmem:[%s1495 + $0x30] sm:$0xff] %v1489
      %1503 = vst [vmem:[%s1495 + $0x38] sm:$0xff] %v1490
      %1504 = vst [vmem:[%s1495 + $0x40] sm:$0xff] %v1491
      %1505 = vst [vmem:[%s1495 + $0x48] sm:$0xff] %v1492
      %1506 = vst [vmem:[%s1495 + $0x50] sm:$0xff] %v1493
      %1507 = vst [vmem:[%s1495 + $0x58] sm:$0xff] %v1494
      %s1508 = scalar_lea.vmem %s165, 192
      %v1509 = vld [vmem:[%s1508] sm:$0xff]
      %v1510 = vld [vmem:[%s1508 + $0x8] sm:$0xff]
      %v1511 = vld [vmem:[%s1508 + $0x10] sm:$0xff]
      %v1512 = vld [vmem:[%s1508 + $0x18] sm:$0xff]
      %v1513 = vld [vmem:[%s1508 + $0x20] sm:$0xff]
      %v1514 = vld [vmem:[%s1508 + $0x28] sm:$0xff]
      %v1515 = vld [vmem:[%s1508 + $0x30] sm:$0xff]
      %v1516 = vld [vmem:[%s1508 + $0x38] sm:$0xff]
      %v1517 = vld [vmem:[%s1508 + $0x40] sm:$0xff]
      %v1518 = vld [vmem:[%s1508 + $0x48] sm:$0xff]
      %v1519 = vld [vmem:[%s1508 + $0x50] sm:$0xff]
      %v1520 = vld [vmem:[%s1508 + $0x58] sm:$0xff]
      %s1521 = scalar_lea.vmem %s165, 216
      %v1522 = vld [vmem:[%s1521] sm:$0xff]
      %v1523 = vld [vmem:[%s1521 + $0x8] sm:$0xff]
      %v1524 = vld [vmem:[%s1521 + $0x10] sm:$0xff]
      %v1525 = vld [vmem:[%s1521 + $0x18] sm:$0xff]
      %v1526 = vld [vmem:[%s1521 + $0x20] sm:$0xff]
      %v1527 = vld [vmem:[%s1521 + $0x28] sm:$0xff]
      %v1528 = vld [vmem:[%s1521 + $0x30] sm:$0xff]
      %v1529 = vld [vmem:[%s1521 + $0x38] sm:$0xff]
      %v1530 = vld [vmem:[%s1521 + $0x40] sm:$0xff]
      %v1531 = vld [vmem:[%s1521 + $0x48] sm:$0xff]
      %v1532 = vld [vmem:[%s1521 + $0x50] sm:$0xff]
      %v1533 = vld [vmem:[%s1521 + $0x58] sm:$0xff]
      %v1534 = vld [vmem:[%s1] sm:$0xff]
      %v1535 = vld [vmem:[%s1 + $0x8] sm:$0xff]
      %v1536 = vld [vmem:[%s1 + $0x10] sm:$0xff]
      %v1537 = vld [vmem:[%s1 + $0x18] sm:$0xff]
      %v1538 = vld [vmem:[%s1 + $0x20] sm:$0xff]
      %v1539 = vld [vmem:[%s1 + $0x28] sm:$0xff]
      %v1540 = vld [vmem:[%s1 + $0x30] sm:$0xff]
      %v1541 = vld [vmem:[%s1 + $0x38] sm:$0xff]
      %v1542 = vld [vmem:[%s1 + $0x40] sm:$0xff]
      %v1543 = vld [vmem:[%s1 + $0x48] sm:$0xff]
      %v1544 = vld [vmem:[%s1 + $0x50] sm:$0xff]
      %v1545 = vld [vmem:[%s1 + $0x58] sm:$0xff]
      %v1546 = vld [vmem:[%s1 + $0x60] sm:$0xff]
      %v1547 = vld [vmem:[%s1 + $0x68] sm:$0xff]
      %v1548 = vld [vmem:[%s1 + $0x70] sm:$0xff]
      %v1549 = vld [vmem:[%s1 + $0x78] sm:$0xff]
      %v1550 = vld [vmem:[%s213] sm:$0xff]
      %v1551 = vld [vmem:[%s213 + $0x8] sm:$0xff]
      %v1552 = vld [vmem:[%s213 + $0x10] sm:$0xff]
      %v1553 = vld [vmem:[%s213 + $0x18] sm:$0xff]
      %v1554 = vld [vmem:[%s213 + $0x20] sm:$0xff]
      %v1555 = vld [vmem:[%s213 + $0x28] sm:$0xff]
      %v1556 = vld [vmem:[%s213 + $0x30] sm:$0xff]
      %v1557 = vld [vmem:[%s213 + $0x38] sm:$0xff]
      %v1558 = vld [vmem:[%s213 + $0x40] sm:$0xff]
      %v1559 = vld [vmem:[%s213 + $0x48] sm:$0xff]
      %v1560 = vld [vmem:[%s213 + $0x50] sm:$0xff]
      %v1561 = vld [vmem:[%s213 + $0x58] sm:$0xff]
      %v1562 = vld [vmem:[%s213 + $0x60] sm:$0xff]
      %v1563 = vld [vmem:[%s213 + $0x68] sm:$0xff]
      %v1564 = vld [vmem:[%s213 + $0x70] sm:$0xff]
      %v1565 = vld [vmem:[%s213 + $0x78] sm:$0xff]
      %1566 = vmatprep.subr.mxu0 0.0
      %1567 = vmatpush1.msra.mxu0 %v1550
      %1568 = vmatprep.subr.mxu0 0.0
      %1569 = vmatpush1.msra.mxu0 %v1551
      %1570 = vmatprep.subr.mxu0 0.0
      %1571 = vmatpush1.msra.mxu0 %v1552
      %1572 = vmatprep.subr.mxu0 0.0
      %1573 = vmatpush1.msra.mxu0 %v1553
      %1574 = vmatprep.subr.mxu0 0.0
      %1575 = vmatpush1.msra.mxu0 %v1554
      %1576 = vmatprep.subr.mxu0 0.0
      %1577 = vmatpush1.msra.mxu0 %v1555
      %1578 = vmatprep.subr.mxu0 0.0
      %1579 = vmatpush1.msra.mxu0 %v1556
      %1580 = vmatprep.subr.mxu0 0.0
      %1581 = vmatpush1.msra.mxu0 %v1557
      %1582 = vmatprep.subr.mxu0 0.0
      %1583 = vmatpush1.msra.mxu0 %v1558
      %1584 = vmatprep.subr.mxu0 0.0
      %1585 = vmatpush1.msra.mxu0 %v1559
      %1586 = vmatprep.subr.mxu0 0.0
      %1587 = vmatpush1.msra.mxu0 %v1560
      %1588 = vmatprep.subr.mxu0 0.0
      %1589 = vmatpush1.msra.mxu0 %v1561
      %1590 = vmatprep.subr.mxu0 0.0
      %1591 = vmatpush1.msra.mxu0 %v1562
      %1592 = vmatprep.subr.mxu0 0.0
      %1593 = vmatpush1.msra.mxu0 %v1563
      %1594 = vmatprep.subr.mxu0 0.0
      %1595 = vmatpush1.msra.mxu0 %v1564
      %1596 = vmatprep.subr.mxu0 0.0
      %1597 = vmatpush1.msra.mxu0 %v1565
      %1598 = vmatprep.subr.mxu0 0.0
      %1599 = vmatpush1.msra.mxu0 0.0
      %1600 = vmatprep.subr.mxu0 0.0
      %1601 = vmatpush1.msra.mxu0 0.0
      %1602 = vmatprep.subr.mxu0 0.0
      %1603 = vmatpush1.msra.mxu0 0.0
      %1604 = vmatprep.subr.mxu0 0.0
      %1605 = vmatpush1.msra.mxu0 0.0
      %1606 = vmatprep.subr.mxu0 0.0
      %1607 = vmatpush1.msra.mxu0 0.0
      %1608 = vmatprep.subr.mxu0 0.0
      %1609 = vmatpush1.msra.mxu0 0.0
      %1610 = vmatprep.subr.mxu0 0.0
      %1611 = vmatpush1.msra.mxu0 0.0
      %1612 = vmatprep.subr.mxu0 0.0
      %1613 = vmatpush1.msra.mxu0 0.0
      %1614 = vmatprep.subr.mxu0 0.0
      %1615 = vmatpush1.msra.mxu0 0.0
      %1616 = vmatprep.subr.mxu0 0.0
      %1617 = vmatpush1.msra.mxu0 0.0
      %1618 = vmatprep.subr.mxu0 0.0
      %1619 = vmatpush1.msra.mxu0 0.0
      %1620 = vmatprep.subr.mxu0 0.0
      %1621 = vmatpush1.msra.mxu0 0.0
      %1622 = vmatprep.subr.mxu0 0.0
      %1623 = vmatpush1.msra.mxu0 0.0
      %1624 = vmatprep.subr.mxu0 0.0
      %1625 = vmatpush1.msra.mxu0 0.0
      %1626 = vmatprep.subr.mxu0 0.0
      %1627 = vmatpush1.msra.mxu0 0.0
      %1628 = vmatprep.subr.mxu0 0.0
      %1629 = vmatpush1.msra.mxu0 0.0
      %1630 = vmatprep.mubr.f32.mxu0 0.0
      %1631 = vmatmul.mubr.f32.gmra.mrb[0].mxu0 %v1522
      %v1632 = vpop.f32.mrb[0].mxu0
      %v1633 = vadd.f32 0.0, %v1632
      %v1634 = vpop.f32.mrb[0].mxu0
      %1635 = vmatprep.mubr.f32.mxu0 0.0
      %1636 = vmatmul.mubr.f32.gmra.mrb[0].mxu0 %v1523
      %v1637 = vpop.f32.mrb[0].mxu0
      %v1638 = vadd.f32 0.0, %v1637
      %v1639 = vpop.f32.mrb[0].mxu0
      %1640 = vmatprep.mubr.f32.mxu0 0.0
      %1641 = vmatmul.mubr.f32.gmra.mrb[0].mxu0 %v1524
      %v1642 = vpop.f32.mrb[0].mxu0
      %v1643 = vadd.f32 0.0, %v1642
      %v1644 = vpop.f32.mrb[0].mxu0
      %1645 = vmatprep.mubr.f32.mxu0 0.0
      %1646 = vmatmul.mubr.f32.gmra.mrb[0].mxu0 %v1525
      %v1647 = vpop.f32.mrb[0].mxu0
      %v1648 = vadd.f32 0.0, %v1647
      %v1649 = vpop.f32.mrb[0].mxu0
      %1650 = vmatprep.mubr.f32.mxu0 0.0
      %1651 = vmatmul.mubr.f32.gmra.mrb[0].mxu0 %v1526
      %v1652 = vpop.f32.mrb[0].mxu0
      %v1653 = vadd.f32 0.0, %v1652
      %v1654 = vpop.f32.mrb[0].mxu0
      %1655 = vmatprep.mubr.f32.mxu0 0.0
      %1656 = vmatmul.mubr.f32.gmra.mrb[0].mxu0 %v1527
      %v1657 = vpop.f32.mrb[0].mxu0
      %v1658 = vadd.f32 0.0, %v1657
      %v1659 = vpop.f32.mrb[0].mxu0
      %1660 = vmatprep.mubr.f32.mxu0 0.0
      %1661 = vmatmul.mubr.f32.gmra.mrb[0].mxu0 %v1528
      %v1662 = vpop.f32.mrb[0].mxu0
      %v1663 = vadd.f32 0.0, %v1662
      %v1664 = vpop.f32.mrb[0].mxu0
      %1665 = vmatprep.mubr.f32.mxu0 0.0
      %1666 = vmatmul.mubr.f32.gmra.mrb[0].mxu0 %v1529
      %v1667 = vpop.f32.mrb[0].mxu0
      %v1668 = vadd.f32 0.0, %v1667
      %v1669 = vpop.f32.mrb[0].mxu0
      %1670 = vmatprep.mubr.f32.mxu0 0.0
      %1671 = vmatmul.mubr.f32.gmra.mrb[0].mxu0 %v1530
      %v1672 = vpop.f32.mrb[0].mxu0
      %v1673 = vadd.f32 0.0, %v1672
      %v1674 = vpop.f32.mrb[0].mxu0
      %1675 = vmatprep.mubr.f32.mxu0 0.0
      %1676 = vmatmul.mubr.f32.gmra.mrb[0].mxu0 %v1531
      %v1677 = vpop.f32.mrb[0].mxu0
      %v1678 = vadd.f32 0.0, %v1677
      %v1679 = vpop.f32.mrb[0].mxu0
      %1680 = vmatprep.mubr.f32.mxu0 0.0
      %1681 = vmatmul.mubr.f32.gmra.mrb[0].mxu0 %v1532
      %v1682 = vpop.f32.mrb[0].mxu0
      %v1683 = vadd.f32 0.0, %v1682
      %v1684 = vpop.f32.mrb[0].mxu0
      %1685 = vmatprep.mubr.f32.mxu0 0.0
      %1686 = vmatmul.mubr.f32.gmra.mrb[0].mxu0 %v1533
      %v1687 = vpop.f32.mrb[0].mxu0
      %v1688 = vadd.f32 0.0, %v1687
      %v1689 = vpop.f32.mrb[0].mxu0
      %1690 = vdwg.mxu0
      %1691 = vmatprep.subr.mxu0 0.0
      %1692 = vmatpush1.msra.mxu0 %v1534
      %1693 = vmatprep.subr.mxu0 0.0
      %1694 = vmatpush1.msra.mxu0 %v1535
      %1695 = vmatprep.subr.mxu0 0.0
      %1696 = vmatpush1.msra.mxu0 %v1536
      %1697 = vmatprep.subr.mxu0 0.0
      %1698 = vmatpush1.msra.mxu0 %v1537
      %1699 = vmatprep.subr.mxu0 0.0
      %1700 = vmatpush1.msra.mxu0 %v1538
      %1701 = vmatprep.subr.mxu0 0.0
      %1702 = vmatpush1.msra.mxu0 %v1539
      %1703 = vmatprep.subr.mxu0 0.0
      %1704 = vmatpush1.msra.mxu0 %v1540
      %1705 = vmatprep.subr.mxu0 0.0
      %1706 = vmatpush1.msra.mxu0 %v1541
      %1707 = vmatprep.subr.mxu0 0.0
      %1708 = vmatpush1.msra.mxu0 %v1542
      %1709 = vmatprep.subr.mxu0 0.0
      %1710 = vmatpush1.msra.mxu0 %v1543
      %1711 = vmatprep.subr.mxu0 0.0
      %1712 = vmatpush1.msra.mxu0 %v1544
      %1713 = vmatprep.subr.mxu0 0.0
      %1714 = vmatpush1.msra.mxu0 %v1545
      %1715 = vmatprep.subr.mxu0 0.0
      %1716 = vmatpush1.msra.mxu0 %v1546
      %1717 = vmatprep.subr.mxu0 0.0
      %1718 = vmatpush1.msra.mxu0 %v1547
      %1719 = vmatprep.subr.mxu0 0.0
      %1720 = vmatpush1.msra.mxu0 %v1548
      %1721 = vmatprep.subr.mxu0 0.0
      %1722 = vmatpush1.msra.mxu0 %v1549
      %1723 = vmatprep.subr.mxu0 0.0
      %1724 = vmatpush1.msra.mxu0 0.0
      %1725 = vmatprep.subr.mxu0 0.0
      %1726 = vmatpush1.msra.mxu0 0.0
      %1727 = vmatprep.subr.mxu0 0.0
      %1728 = vmatpush1.msra.mxu0 0.0
      %1729 = vmatprep.subr.mxu0 0.0
      %1730 = vmatpush1.msra.mxu0 0.0
      %1731 = vmatprep.subr.mxu0 0.0
      %1732 = vmatpush1.msra.mxu0 0.0
      %1733 = vmatprep.subr.mxu0 0.0
      %1734 = vmatpush1.msra.mxu0 0.0
      %1735 = vmatprep.subr.mxu0 0.0
      %1736 = vmatpush1.msra.mxu0 0.0
      %1737 = vmatprep.subr.mxu0 0.0
      %1738 = vmatpush1.msra.mxu0 0.0
      %1739 = vmatprep.subr.mxu0 0.0
      %1740 = vmatpush1.msra.mxu0 0.0
      %1741 = vmatprep.subr.mxu0 0.0
      %1742 = vmatpush1.msra.mxu0 0.0
      %1743 = vmatprep.subr.mxu0 0.0
      %1744 = vmatpush1.msra.mxu0 0.0
      %1745 = vmatprep.subr.mxu0 0.0
      %1746 = vmatpush1.msra.mxu0 0.0
      %1747 = vmatprep.subr.mxu0 0.0
      %1748 = vmatpush1.msra.mxu0 0.0
      %1749 = vmatprep.subr.mxu0 0.0
      %1750 = vmatpush1.msra.mxu0 0.0
      %1751 = vmatprep.subr.mxu0 0.0
      %1752 = vmatpush1.msra.mxu0 0.0
      %1753 = vmatprep.subr.mxu0 0.0
      %1754 = vmatpush1.msra.mxu0 0.0
      %1755 = vmatprep.mubr.f32.mxu0 0.0
      %1756 = vmatmul.mubr.f32.gmra.mrb[0].mxu0 %v1509
      %v1757 = vpop.f32.mrb[0].mxu0
      %v1758 = vadd.f32 %v1633, %v1757
      %v1759 = vpop.f32.mrb[0].mxu0
      %1760 = vmatprep.mubr.f32.mxu0 0.0
      %1761 = vmatmul.mubr.f32.gmra.mrb[0].mxu0 %v1510
      %v1762 = vpop.f32.mrb[0].mxu0
      %v1763 = vadd.f32 %v1638, %v1762
      %v1764 = vpop.f32.mrb[0].mxu0
      %1765 = vmatprep.mubr.f32.mxu0 0.0
      %1766 = vmatmul.mubr.f32.gmra.mrb[0].mxu0 %v1511
      %v1767 = vpop.f32.mrb[0].mxu0
      %v1768 = vadd.f32 %v1643, %v1767
      %v1769 = vpop.f32.mrb[0].mxu0
      %1770 = vmatprep.mubr.f32.mxu0 0.0
      %1771 = vmatmul.mubr.f32.gmra.mrb[0].mxu0 %v1512
      %v1772 = vpop.f32.mrb[0].mxu0
      %v1773 = vadd.f32 %v1648, %v1772
      %v1774 = vpop.f32.mrb[0].mxu0
      %1775 = vmatprep.mubr.f32.mxu0 0.0
      %1776 = vmatmul.mubr.f32.gmra.mrb[0].mxu0 %v1513
      %v1777 = vpop.f32.mrb[0].mxu0
      %v1778 = vadd.f32 %v1653, %v1777
      %v1779 = vpop.f32.mrb[0].mxu0
      %1780 = vmatprep.mubr.f32.mxu0 0.0
      %1781 = vmatmul.mubr.f32.gmra.mrb[0].mxu0 %v1514
      %v1782 = vpop.f32.mrb[0].mxu0
      %v1783 = vadd.f32 %v1658, %v1782
      %v1784 = vpop.f32.mrb[0].mxu0
      %1785 = vmatprep.mubr.f32.mxu0 0.0
      %1786 = vmatmul.mubr.f32.gmra.mrb[0].mxu0 %v1515
      %v1787 = vpop.f32.mrb[0].mxu0
      %v1788 = vadd.f32 %v1663, %v1787
      %v1789 = vpop.f32.mrb[0].mxu0
      %1790 = vmatprep.mubr.f32.mxu0 0.0
      %1791 = vmatmul.mubr.f32.gmra.mrb[0].mxu0 %v1516
      %v1792 = vpop.f32.mrb[0].mxu0
      %v1793 = vadd.f32 %v1668, %v1792
      %v1794 = vpop.f32.mrb[0].mxu0
      %1795 = vmatprep.mubr.f32.mxu0 0.0
      %1796 = vmatmul.mubr.f32.gmra.mrb[0].mxu0 %v1517
      %v1797 = vpop.f32.mrb[0].mxu0
      %v1798 = vadd.f32 %v1673, %v1797
      %v1799 = vpop.f32.mrb[0].mxu0
      %1800 = vmatprep.mubr.f32.mxu0 0.0
      %1801 = vmatmul.mubr.f32.gmra.mrb[0].mxu0 %v1518
      %v1802 = vpop.f32.mrb[0].mxu0
      %v1803 = vadd.f32 %v1678, %v1802
      %v1804 = vpop.f32.mrb[0].mxu0
      %1805 = vmatprep.mubr.f32.mxu0 0.0
      %1806 = vmatmul.mubr.f32.gmra.mrb[0].mxu0 %v1519
      %v1807 = vpop.f32.mrb[0].mxu0
      %v1808 = vadd.f32 %v1683, %v1807
      %v1809 = vpop.f32.mrb[0].mxu0
      %1810 = vmatprep.mubr.f32.mxu0 0.0
      %1811 = vmatmul.mubr.f32.gmra.mrb[0].mxu0 %v1520
      %v1812 = vpop.f32.mrb[0].mxu0
      %v1813 = vadd.f32 %v1688, %v1812
      %v1814 = vpop.f32.mrb[0].mxu0
      %1815 = vdwg.mxu0
      %v1816 = vld [vmem:[%s480] sm:$0xff]
      %v1817 = vld [vmem:[%s480 + $0x8] sm:$0xff]
      %v1818 = vld [vmem:[%s480 + $0x10] sm:$0xff]
      %v1819 = vld [vmem:[%s480 + $0x18] sm:$0xff]
      %v1820 = vld [vmem:[%s480 + $0x20] sm:$0xff]
      %v1821 = vld [vmem:[%s480 + $0x28] sm:$0xff]
      %v1822 = vld [vmem:[%s480 + $0x30] sm:$0xff]
      %v1823 = vld [vmem:[%s480 + $0x38] sm:$0xff]
      %v1824 = vld [vmem:[%s480 + $0x40] sm:$0xff]
      %v1825 = vld [vmem:[%s480 + $0x48] sm:$0xff]
      %v1826 = vld [vmem:[%s480 + $0x50] sm:$0xff]
      %v1827 = vld [vmem:[%s480 + $0x58] sm:$0xff]
      %v1828 = vld [vmem:[%s480 + $0x60] sm:$0xff]
      %v1829 = vld [vmem:[%s480 + $0x68] sm:$0xff]
      %v1830 = vld [vmem:[%s480 + $0x70] sm:$0xff]
      %v1831 = vld [vmem:[%s480 + $0x78] sm:$0xff]
      %v1832 = vld [vmem:[%s497] sm:$0xff]
      %v1833 = vld [vmem:[%s497 + $0x8] sm:$0xff]
      %v1834 = vld [vmem:[%s497 + $0x10] sm:$0xff]
      %v1835 = vld [vmem:[%s497 + $0x18] sm:$0xff]
      %v1836 = vld [vmem:[%s497 + $0x20] sm:$0xff]
      %v1837 = vld [vmem:[%s497 + $0x28] sm:$0xff]
      %v1838 = vld [vmem:[%s497 + $0x30] sm:$0xff]
      %v1839 = vld [vmem:[%s497 + $0x38] sm:$0xff]
      %v1840 = vld [vmem:[%s497 + $0x40] sm:$0xff]
      %v1841 = vld [vmem:[%s497 + $0x48] sm:$0xff]
      %v1842 = vld [vmem:[%s497 + $0x50] sm:$0xff]
      %v1843 = vld [vmem:[%s497 + $0x58] sm:$0xff]
      %v1844 = vld [vmem:[%s497 + $0x60] sm:$0xff]
      %v1845 = vld [vmem:[%s497 + $0x68] sm:$0xff]
      %v1846 = vld [vmem:[%s497 + $0x70] sm:$0xff]
      %v1847 = vld [vmem:[%s497 + $0x78] sm:$0xff]
      %1848 = vmatprep.subr.mxu0 0.0
      %1849 = vmatpush1.msra.mxu0 %v1832
      %1850 = vmatprep.subr.mxu0 0.0
      %1851 = vmatpush1.msra.mxu0 %v1833
      %1852 = vmatprep.subr.mxu0 0.0
      %1853 = vmatpush1.msra.mxu0 %v1834
      %1854 = vmatprep.subr.mxu0 0.0
      %1855 = vmatpush1.msra.mxu0 %v1835
      %1856 = vmatprep.subr.mxu0 0.0
      %1857 = vmatpush1.msra.mxu0 %v1836
      %1858 = vmatprep.subr.mxu0 0.0
      %1859 = vmatpush1.msra.mxu0 %v1837
      %1860 = vmatprep.subr.mxu0 0.0
      %1861 = vmatpush1.msra.mxu0 %v1838
      %1862 = vmatprep.subr.mxu0 0.0
      %1863 = vmatpush1.msra.mxu0 %v1839
      %1864 = vmatprep.subr.mxu0 0.0
      %1865 = vmatpush1.msra.mxu0 %v1840
      %1866 = vmatprep.subr.mxu0 0.0
      %1867 = vmatpush1.msra.mxu0 %v1841
      %1868 = vmatprep.subr.mxu0 0.0
      %1869 = vmatpush1.msra.mxu0 %v1842
      %1870 = vmatprep.subr.mxu0 0.0
      %1871 = vmatpush1.msra.mxu0 %v1843
      %1872 = vmatprep.subr.mxu0 0.0
      %1873 = vmatpush1.msra.mxu0 %v1844
      %1874 = vmatprep.subr.mxu0 0.0
      %1875 = vmatpush1.msra.mxu0 %v1845
      %1876 = vmatprep.subr.mxu0 0.0
      %1877 = vmatpush1.msra.mxu0 %v1846
      %1878 = vmatprep.subr.mxu0 0.0
      %1879 = vmatpush1.msra.mxu0 %v1847
      %1880 = vmatprep.subr.mxu0 0.0
      %1881 = vmatpush1.msra.mxu0 0.0
      %1882 = vmatprep.subr.mxu0 0.0
      %1883 = vmatpush1.msra.mxu0 0.0
      %1884 = vmatprep.subr.mxu0 0.0
      %1885 = vmatpush1.msra.mxu0 0.0
      %1886 = vmatprep.subr.mxu0 0.0
      %1887 = vmatpush1.msra.mxu0 0.0
      %1888 = vmatprep.subr.mxu0 0.0
      %1889 = vmatpush1.msra.mxu0 0.0
      %1890 = vmatprep.subr.mxu0 0.0
      %1891 = vmatpush1.msra.mxu0 0.0
      %1892 = vmatprep.subr.mxu0 0.0
      %1893 = vmatpush1.msra.mxu0 0.0
      %1894 = vmatprep.subr.mxu0 0.0
      %1895 = vmatpush1.msra.mxu0 0.0
      %1896 = vmatprep.subr.mxu0 0.0
      %1897 = vmatpush1.msra.mxu0 0.0
      %1898 = vmatprep.subr.mxu0 0.0
      %1899 = vmatpush1.msra.mxu0 0.0
      %1900 = vmatprep.subr.mxu0 0.0
      %1901 = vmatpush1.msra.mxu0 0.0
      %1902 = vmatprep.subr.mxu0 0.0
      %1903 = vmatpush1.msra.mxu0 0.0
      %1904 = vmatprep.subr.mxu0 0.0
      %1905 = vmatpush1.msra.mxu0 0.0
      %1906 = vmatprep.subr.mxu0 0.0
      %1907 = vmatpush1.msra.mxu0 0.0
      %1908 = vmatprep.subr.mxu0 0.0
      %1909 = vmatpush1.msra.mxu0 0.0
      %1910 = vmatprep.subr.mxu0 0.0
      %1911 = vmatpush1.msra.mxu0 0.0
      %1912 = vmatprep.mubr.f32.mxu0 0.0
      %1913 = vmatmul.mubr.f32.gmra.mrb[0].mxu0 %v1522
      %v1914 = vpop.f32.mrb[0].mxu0
      %v1915 = vadd.f32 0.0, %v1914
      %v1916 = vpop.f32.mrb[0].mxu0
      %1917 = vmatprep.mubr.f32.mxu0 0.0
      %1918 = vmatmul.mubr.f32.gmra.mrb[0].mxu0 %v1523
      %v1919 = vpop.f32.mrb[0].mxu0
      %v1920 = vadd.f32 0.0, %v1919
      %v1921 = vpop.f32.mrb[0].mxu0
      %1922 = vmatprep.mubr.f32.mxu0 0.0
      %1923 = vmatmul.mubr.f32.gmra.mrb[0].mxu0 %v1524
      %v1924 = vpop.f32.mrb[0].mxu0
      %v1925 = vadd.f32 0.0, %v1924
      %v1926 = vpop.f32.mrb[0].mxu0
      %1927 = vmatprep.mubr.f32.mxu0 0.0
      %1928 = vmatmul.mubr.f32.gmra.mrb[0].mxu0 %v1525
      %v1929 = vpop.f32.mrb[0].mxu0
      %v1930 = vadd.f32 0.0, %v1929
      %v1931 = vpop.f32.mrb[0].mxu0
      %1932 = vmatprep.mubr.f32.mxu0 0.0
      %1933 = vmatmul.mubr.f32.gmra.mrb[0].mxu0 %v1526
      %v1934 = vpop.f32.mrb[0].mxu0
      %v1935 = vadd.f32 0.0, %v1934
      %v1936 = vpop.f32.mrb[0].mxu0
      %1937 = vmatprep.mubr.f32.mxu0 0.0
      %1938 = vmatmul.mubr.f32.gmra.mrb[0].mxu0 %v1527
      %v1939 = vpop.f32.mrb[0].mxu0
      %v1940 = vadd.f32 0.0, %v1939
      %v1941 = vpop.f32.mrb[0].mxu0
      %1942 = vmatprep.mubr.f32.mxu0 0.0
      %1943 = vmatmul.mubr.f32.gmra.mrb[0].mxu0 %v1528
      %v1944 = vpop.f32.mrb[0].mxu0
      %v1945 = vadd.f32 0.0, %v1944
      %v1946 = vpop.f32.mrb[0].mxu0
      %1947 = vmatprep.mubr.f32.mxu0 0.0
      %1948 = vmatmul.mubr.f32.gmra.mrb[0].mxu0 %v1529
      %v1949 = vpop.f32.mrb[0].mxu0
      %v1950 = vadd.f32 0.0, %v1949
      %v1951 = vpop.f32.mrb[0].mxu0
      %1952 = vmatprep.mubr.f32.mxu0 0.0
      %1953 = vmatmul.mubr.f32.gmra.mrb[0].mxu0 %v1530
      %v1954 = vpop.f32.mrb[0].mxu0
      %v1955 = vadd.f32 0.0, %v1954
      %v1956 = vpop.f32.mrb[0].mxu0
      %1957 = vmatprep.mubr.f32.mxu0 0.0
      %1958 = vmatmul.mubr.f32.gmra.mrb[0].mxu0 %v1531
      %v1959 = vpop.f32.mrb[0].mxu0
      %v1960 = vadd.f32 0.0, %v1959
      %v1961 = vpop.f32.mrb[0].mxu0
      %1962 = vmatprep.mubr.f32.mxu0 0.0
      %1963 = vmatmul.mubr.f32.gmra.mrb[0].mxu0 %v1532
      %v1964 = vpop.f32.mrb[0].mxu0
      %v1965 = vadd.f32 0.0, %v1964
      %v1966 = vpop.f32.mrb[0].mxu0
      %1967 = vmatprep.mubr.f32.mxu0 0.0
      %1968 = vmatmul.mubr.f32.gmra.mrb[0].mxu0 %v1533
      %v1969 = vpop.f32.mrb[0].mxu0
      %v1970 = vadd.f32 0.0, %v1969
      %v1971 = vpop.f32.mrb[0].mxu0
      %1972 = vdwg.mxu0
      %1973 = vmatprep.subr.mxu0 0.0
      %1974 = vmatpush1.msra.mxu0 %v1816
      %1975 = vmatprep.subr.mxu0 0.0
      %1976 = vmatpush1.msra.mxu0 %v1817
      %1977 = vmatprep.subr.mxu0 0.0
      %1978 = vmatpush1.msra.mxu0 %v1818
      %1979 = vmatprep.subr.mxu0 0.0
      %1980 = vmatpush1.msra.mxu0 %v1819
      %1981 = vmatprep.subr.mxu0 0.0
      %1982 = vmatpush1.msra.mxu0 %v1820
      %1983 = vmatprep.subr.mxu0 0.0
      %1984 = vmatpush1.msra.mxu0 %v1821
      %1985 = vmatprep.subr.mxu0 0.0
      %1986 = vmatpush1.msra.mxu0 %v1822
      %1987 = vmatprep.subr.mxu0 0.0
      %1988 = vmatpush1.msra.mxu0 %v1823
      %1989 = vmatprep.subr.mxu0 0.0
      %1990 = vmatpush1.msra.mxu0 %v1824
      %1991 = vmatprep.subr.mxu0 0.0
      %1992 = vmatpush1.msra.mxu0 %v1825
      %1993 = vmatprep.subr.mxu0 0.0
      %1994 = vmatpush1.msra.mxu0 %v1826
      %1995 = vmatprep.subr.mxu0 0.0
      %1996 = vmatpush1.msra.mxu0 %v1827
      %1997 = vmatprep.subr.mxu0 0.0
      %1998 = vmatpush1.msra.mxu0 %v1828
      %1999 = vmatprep.subr.mxu0 0.0
      %2000 = vmatpush1.msra.mxu0 %v1829
      %2001 = vmatprep.subr.mxu0 0.0
      %2002 = vmatpush1.msra.mxu0 %v1830
      %2003 = vmatprep.subr.mxu0 0.0
      %2004 = vmatpush1.msra.mxu0 %v1831
      %2005 = vmatprep.subr.mxu0 0.0
      %2006 = vmatpush1.msra.mxu0 0.0
      %2007 = vmatprep.subr.mxu0 0.0
      %2008 = vmatpush1.msra.mxu0 0.0
      %2009 = vmatprep.subr.mxu0 0.0
      %2010 = vmatpush1.msra.mxu0 0.0
      %2011 = vmatprep.subr.mxu0 0.0
      %2012 = vmatpush1.msra.mxu0 0.0
      %2013 = vmatprep.subr.mxu0 0.0
      %2014 = vmatpush1.msra.mxu0 0.0
      %2015 = vmatprep.subr.mxu0 0.0
      %2016 = vmatpush1.msra.mxu0 0.0
      %2017 = vmatprep.subr.mxu0 0.0
      %2018 = vmatpush1.msra.mxu0 0.0
      %2019 = vmatprep.subr.mxu0 0.0
      %2020 = vmatpush1.msra.mxu0 0.0
      %2021 = vmatprep.subr.mxu0 0.0
      %2022 = vmatpush1.msra.mxu0 0.0
      %2023 = vmatprep.subr.mxu0 0.0
      %2024 = vmatpush1.msra.mxu0 0.0
      %2025 = vmatprep.subr.mxu0 0.0
      %2026 = vmatpush1.msra.mxu0 0.0
      %2027 = vmatprep.subr.mxu0 0.0
      %2028 = vmatpush1.msra.mxu0 0.0
      %2029 = vmatprep.subr.mxu0 0.0
      %2030 = vmatpush1.msra.mxu0 0.0
      %2031 = vmatprep.subr.mxu0 0.0
      %2032 = vmatpush1.msra.mxu0 0.0
      %2033 = vmatprep.subr.mxu0 0.0
      %2034 = vmatpush1.msra.mxu0 0.0
      %2035 = vmatprep.subr.mxu0 0.0
      %2036 = vmatpush1.msra.mxu0 0.0
      %2037 = vmatprep.mubr.f32.mxu0 0.0
      %2038 = vmatmul.mubr.f32.gmra.mrb[0].mxu0 %v1509
      %v2039 = vpop.f32.mrb[0].mxu0
      %v2040 = vadd.f32 %v1915, %v2039
      %v2041 = vpop.f32.mrb[0].mxu0
      %2042 = vmatprep.mubr.f32.mxu0 0.0
      %2043 = vmatmul.mubr.f32.gmra.mrb[0].mxu0 %v1510
      %v2044 = vpop.f32.mrb[0].mxu0
      %v2045 = vadd.f32 %v1920, %v2044
      %v2046 = vpop.f32.mrb[0].mxu0
      %2047 = vmatprep.mubr.f32.mxu0 0.0
      %2048 = vmatmul.mubr.f32.gmra.mrb[0].mxu0 %v1511
      %v2049 = vpop.f32.mrb[0].mxu0
      %v2050 = vadd.f32 %v1925, %v2049
      %v2051 = vpop.f32.mrb[0].mxu0
      %2052 = vmatprep.mubr.f32.mxu0 0.0
      %2053 = vmatmul.mubr.f32.gmra.mrb[0].mxu0 %v1512
      %v2054 = vpop.f32.mrb[0].mxu0
      %v2055 = vadd.f32 %v1930, %v2054
      %v2056 = vpop.f32.mrb[0].mxu0
      %2057 = vmatprep.mubr.f32.mxu0 0.0
      %2058 = vmatmul.mubr.f32.gmra.mrb[0].mxu0 %v1513
      %v2059 = vpop.f32.mrb[0].mxu0
      %v2060 = vadd.f32 %v1935, %v2059
      %v2061 = vpop.f32.mrb[0].mxu0
      %2062 = vmatprep.mubr.f32.mxu0 0.0
      %2063 = vmatmul.mubr.f32.gmra.mrb[0].mxu0 %v1514
      %v2064 = vpop.f32.mrb[0].mxu0
      %v2065 = vadd.f32 %v1940, %v2064
      %v2066 = vpop.f32.mrb[0].mxu0
      %2067 = vmatprep.mubr.f32.mxu0 0.0
      %2068 = vmatmul.mubr.f32.gmra.mrb[0].mxu0 %v1515
      %v2069 = vpop.f32.mrb[0].mxu0
      %v2070 = vadd.f32 %v1945, %v2069
      %v2071 = vpop.f32.mrb[0].mxu0
      %2072 = vmatprep.mubr.f32.mxu0 0.0
      %2073 = vmatmul.mubr.f32.gmra.mrb[0].mxu0 %v1516
      %v2074 = vpop.f32.mrb[0].mxu0
      %v2075 = vadd.f32 %v1950, %v2074
      %v2076 = vpop.f32.mrb[0].mxu0
      %2077 = vmatprep.mubr.f32.mxu0 0.0
      %2078 = vmatmul.mubr.f32.gmra.mrb[0].mxu0 %v1517
      %v2079 = vpop.f32.mrb[0].mxu0
      %v2080 = vadd.f32 %v1955, %v2079
      %v2081 = vpop.f32.mrb[0].mxu0
      %2082 = vmatprep.mubr.f32.mxu0 0.0
      %2083 = vmatmul.mubr.f32.gmra.mrb[0].mxu0 %v1518
      %v2084 = vpop.f32.mrb[0].mxu0
      %v2085 = vadd.f32 %v1960, %v2084
      %v2086 = vpop.f32.mrb[0].mxu0
      %2087 = vmatprep.mubr.f32.mxu0 0.0
      %2088 = vmatmul.mubr.f32.gmra.mrb[0].mxu0 %v1519
      %v2089 = vpop.f32.mrb[0].mxu0
      %v2090 = vadd.f32 %v1965, %v2089
      %v2091 = vpop.f32.mrb[0].mxu0
      %2092 = vmatprep.mubr.f32.mxu0 0.0
      %2093 = vmatmul.mubr.f32.gmra.mrb[0].mxu0 %v1520
      %v2094 = vpop.f32.mrb[0].mxu0
      %v2095 = vadd.f32 %v1970, %v2094
      %v2096 = vpop.f32.mrb[0].mxu0
      %2097 = vdwg.mxu0
      %v2098 = vrot.slane %v2040, 1
      %v2099 = vrot.slane %v2045, 1
      %v2100 = vrot.slane %v2050, 1
      %v2101 = vrot.slane %v2055, 1
      %v2102 = vrot.slane %v2060, 1
      %v2103 = vrot.slane %v2065, 1
      %v2104 = vrot.slane %v2070, 1
      %v2105 = vrot.slane %v2075, 1
      %v2106 = vrot.slane %v2080, 1
      %v2107 = vrot.slane %v2085, 1
      %v2108 = vrot.slane %v2090, 1
      %v2109 = vrot.slane %v2095, 1
      %v2110 = vsel %vm778, %v2108, %v2109
      %v2111 = vsel %vm778, %v2107, %v2108
      %v2112 = vsel %vm778, %v2106, %v2107
      %v2113 = vsel %vm778, %v2105, %v2106
      %v2114 = vsel %vm778, %v2104, %v2105
      %v2115 = vsel %vm778, %v2103, %v2104
      %v2116 = vsel %vm778, %v2102, %v2103
      %v2117 = vsel %vm778, %v2101, %v2102
      %v2118 = vsel %vm778, %v2100, %v2101
      %v2119 = vsel %vm778, %v2099, %v2100
      %v2120 = vsel %vm778, %v2098, %v2099
      %v2121 = vsel %vm778, %v2109, %v2098
      %v2122 = vadd.f32 %v1758, %v2120
      %v2123 = vadd.f32 %v1763, %v2119
      %v2124 = vadd.f32 %v1768, %v2118
      %v2125 = vadd.f32 %v1773, %v2117
      %v2126 = vadd.f32 %v1778, %v2116
      %v2127 = vadd.f32 %v1783, %v2115
      %v2128 = vadd.f32 %v1788, %v2114
      %v2129 = vadd.f32 %v1793, %v2113
      %v2130 = vadd.f32 %v1798, %v2112
      %v2131 = vadd.f32 %v1803, %v2111
      %v2132 = vadd.f32 %v1808, %v2110
      %v2133 = vadd.f32 %v1813, %v2121
      %v2134 = vadd.f32 %v2122, %v807
      %v2135 = vadd.f32 %v2123, %v807
      %v2136 = vadd.f32 %v2124, %v807
      %v2137 = vadd.f32 %v2125, %v807
      %v2138 = vadd.f32 %v2126, %v807
      %v2139 = vadd.f32 %v2127, %v807
      %v2140 = vadd.f32 %v2128, %v807
      %v2141 = vadd.f32 %v2129, %v807
      %v2142 = vadd.f32 %v2130, %v807
      %v2143 = vadd.f32 %v2131, %v807
      %v2144 = vadd.f32 %v2132, %v807
      %v2145 = vadd.f32 %v2133, %v807
      %v2146 = vmax.f32 %v2134, 0.0
      %v2147 = vmax.f32 %v2135, 0.0
      %v2148 = vmax.f32 %v2136, 0.0
      %v2149 = vmax.f32 %v2137, 0.0
      %v2150 = vmax.f32 %v2138, 0.0
      %v2151 = vmax.f32 %v2139, 0.0
      %v2152 = vmax.f32 %v2140, 0.0
      %v2153 = vmax.f32 %v2141, 0.0
      %v2154 = vmax.f32 %v2142, 0.0
      %v2155 = vmax.f32 %v2143, 0.0
      %v2156 = vmax.f32 %v2144, 0.0
      %v2157 = vmax.f32 %v2145, 0.0
      %s2158 = scalar_lea.vmem %s170, 192
      %2159 = vst [vmem:[%s2158] sm:$0xff] %v2146
      %2160 = vst [vmem:[%s2158 + $0x8] sm:$0xff] %v2147
      %2161 = vst [vmem:[%s2158 + $0x10] sm:$0xff] %v2148
      %2162 = vst [vmem:[%s2158 + $0x18] sm:$0xff] %v2149
      %2163 = vst [vmem:[%s2158 + $0x20] sm:$0xff] %v2150
      %2164 = vst [vmem:[%s2158 + $0x28] sm:$0xff] %v2151
      %2165 = vst [vmem:[%s2158 + $0x30] sm:$0xff] %v2152
      %2166 = vst [vmem:[%s2158 + $0x38] sm:$0xff] %v2153
      %2167 = vst [vmem:[%s2158 + $0x40] sm:$0xff] %v2154
      %2168 = vst [vmem:[%s2158 + $0x48] sm:$0xff] %v2155
      %2169 = vst [vmem:[%s2158 + $0x50] sm:$0xff] %v2156
      %2170 = vst [vmem:[%s2158 + $0x58] sm:$0xff] %v2157
      %s2171 = scalar_lea.vmem %s165, 288
      %v2172 = vld [vmem:[%s2171] sm:$0xff]
      %v2173 = vld [vmem:[%s2171 + $0x8] sm:$0xff]
      %v2174 = vld [vmem:[%s2171 + $0x10] sm:$0xff]
      %v2175 = vld [vmem:[%s2171 + $0x18] sm:$0xff]
      %v2176 = vld [vmem:[%s2171 + $0x20] sm:$0xff]
      %v2177 = vld [vmem:[%s2171 + $0x28] sm:$0xff]
      %v2178 = vld [vmem:[%s2171 + $0x30] sm:$0xff]
      %v2179 = vld [vmem:[%s2171 + $0x38] sm:$0xff]
      %v2180 = vld [vmem:[%s2171 + $0x40] sm:$0xff]
      %v2181 = vld [vmem:[%s2171 + $0x48] sm:$0xff]
      %v2182 = vld [vmem:[%s2171 + $0x50] sm:$0xff]
      %v2183 = vld [vmem:[%s2171 + $0x58] sm:$0xff]
      %s2184 = scalar_lea.vmem %s165, 312
      %v2185 = vld [vmem:[%s2184] sm:$0xff]
      %v2186 = vld [vmem:[%s2184 + $0x8] sm:$0xff]
      %v2187 = vld [vmem:[%s2184 + $0x10] sm:$0xff]
      %v2188 = vld [vmem:[%s2184 + $0x18] sm:$0xff]
      %v2189 = vld [vmem:[%s2184 + $0x20] sm:$0xff]
      %v2190 = vld [vmem:[%s2184 + $0x28] sm:$0xff]
      %v2191 = vld [vmem:[%s2184 + $0x30] sm:$0xff]
      %v2192 = vld [vmem:[%s2184 + $0x38] sm:$0xff]
      %v2193 = vld [vmem:[%s2184 + $0x40] sm:$0xff]
      %v2194 = vld [vmem:[%s2184 + $0x48] sm:$0xff]
      %v2195 = vld [vmem:[%s2184 + $0x50] sm:$0xff]
      %v2196 = vld [vmem:[%s2184 + $0x58] sm:$0xff]
      %v2197 = vld [vmem:[%s1] sm:$0xff]
      %v2198 = vld [vmem:[%s1 + $0x8] sm:$0xff]
      %v2199 = vld [vmem:[%s1 + $0x10] sm:$0xff]
      %v2200 = vld [vmem:[%s1 + $0x18] sm:$0xff]
      %v2201 = vld [vmem:[%s1 + $0x20] sm:$0xff]
      %v2202 = vld [vmem:[%s1 + $0x28] sm:$0xff]
      %v2203 = vld [vmem:[%s1 + $0x30] sm:$0xff]
      %v2204 = vld [vmem:[%s1 + $0x38] sm:$0xff]
      %v2205 = vld [vmem:[%s1 + $0x40] sm:$0xff]
      %v2206 = vld [vmem:[%s1 + $0x48] sm:$0xff]
      %v2207 = vld [vmem:[%s1 + $0x50] sm:$0xff]
      %v2208 = vld [vmem:[%s1 + $0x58] sm:$0xff]
      %v2209 = vld [vmem:[%s1 + $0x60] sm:$0xff]
      %v2210 = vld [vmem:[%s1 + $0x68] sm:$0xff]
      %v2211 = vld [vmem:[%s1 + $0x70] sm:$0xff]
      %v2212 = vld [vmem:[%s1 + $0x78] sm:$0xff]
      %v2213 = vld [vmem:[%s213] sm:$0xff]
      %v2214 = vld [vmem:[%s213 + $0x8] sm:$0xff]
      %v2215 = vld [vmem:[%s213 + $0x10] sm:$0xff]
      %v2216 = vld [vmem:[%s213 + $0x18] sm:$0xff]
      %v2217 = vld [vmem:[%s213 + $0x20] sm:$0xff]
      %v2218 = vld [vmem:[%s213 + $0x28] sm:$0xff]
      %v2219 = vld [vmem:[%s213 + $0x30] sm:$0xff]
      %v2220 = vld [vmem:[%s213 + $0x38] sm:$0xff]
      %v2221 = vld [vmem:[%s213 + $0x40] sm:$0xff]
      %v2222 = vld [vmem:[%s213 + $0x48] sm:$0xff]
      %v2223 = vld [vmem:[%s213 + $0x50] sm:$0xff]
      %v2224 = vld [vmem:[%s213 + $0x58] sm:$0xff]
      %v2225 = vld [vmem:[%s213 + $0x60] sm:$0xff]
      %v2226 = vld [vmem:[%s213 + $0x68] sm:$0xff]
      %v2227 = vld [vmem:[%s213 + $0x70] sm:$0xff]
      %v2228 = vld [vmem:[%s213 + $0x78] sm:$0xff]
      %2229 = vmatprep.subr.mxu0 0.0
      %2230 = vmatpush1.msra.mxu0 %v2213
      %2231 = vmatprep.subr.mxu0 0.0
      %2232 = vmatpush1.msra.mxu0 %v2214
      %2233 = vmatprep.subr.mxu0 0.0
      %2234 = vmatpush1.msra.mxu0 %v2215
      %2235 = vmatprep.subr.mxu0 0.0
      %2236 = vmatpush1.msra.mxu0 %v2216
      %2237 = vmatprep.subr.mxu0 0.0
      %2238 = vmatpush1.msra.mxu0 %v2217
      %2239 = vmatprep.subr.mxu0 0.0
      %2240 = vmatpush1.msra.mxu0 %v2218
      %2241 = vmatprep.subr.mxu0 0.0
      %2242 = vmatpush1.msra.mxu0 %v2219
      %2243 = vmatprep.subr.mxu0 0.0
      %2244 = vmatpush1.msra.mxu0 %v2220
      %2245 = vmatprep.subr.mxu0 0.0
      %2246 = vmatpush1.msra.mxu0 %v2221
      %2247 = vmatprep.subr.mxu0 0.0
      %2248 = vmatpush1.msra.mxu0 %v2222
      %2249 = vmatprep.subr.mxu0 0.0
      %2250 = vmatpush1.msra.mxu0 %v2223
      %2251 = vmatprep.subr.mxu0 0.0
      %2252 = vmatpush1.msra.mxu0 %v2224
      %2253 = vmatprep.subr.mxu0 0.0
      %2254 = vmatpush1.msra.mxu0 %v2225
      %2255 = vmatprep.subr.mxu0 0.0
      %2256 = vmatpush1.msra.mxu0 %v2226
      %2257 = vmatprep.subr.mxu0 0.0
      %2258 = vmatpush1.msra.mxu0 %v2227
      %2259 = vmatprep.subr.mxu0 0.0
      %2260 = vmatpush1.msra.mxu0 %v2228
      %2261 = vmatprep.subr.mxu0 0.0
      %2262 = vmatpush1.msra.mxu0 0.0
      %2263 = vmatprep.subr.mxu0 0.0
      %2264 = vmatpush1.msra.mxu0 0.0
      %2265 = vmatprep.subr.mxu0 0.0
      %2266 = vmatpush1.msra.mxu0 0.0
      %2267 = vmatprep.subr.mxu0 0.0
      %2268 = vmatpush1.msra.mxu0 0.0
      %2269 = vmatprep.subr.mxu0 0.0
      %2270 = vmatpush1.msra.mxu0 0.0
      %2271 = vmatprep.subr.mxu0 0.0
      %2272 = vmatpush1.msra.mxu0 0.0
      %2273 = vmatprep.subr.mxu0 0.0
      %2274 = vmatpush1.msra.mxu0 0.0
      %2275 = vmatprep.subr.mxu0 0.0
      %2276 = vmatpush1.msra.mxu0 0.0
      %2277 = vmatprep.subr.mxu0 0.0
      %2278 = vmatpush1.msra.mxu0 0.0
      %2279 = vmatprep.subr.mxu0 0.0
      %2280 = vmatpush1.msra.mxu0 0.0
      %2281 = vmatprep.subr.mxu0 0.0
      %2282 = vmatpush1.msra.mxu0 0.0
      %2283 = vmatprep.subr.mxu0 0.0
      %2284 = vmatpush1.msra.mxu0 0.0
      %2285 = vmatprep.subr.mxu0 0.0
      %2286 = vmatpush1.msra.mxu0 0.0
      %2287 = vmatprep.subr.mxu0 0.0
      %2288 = vmatpush1.msra.mxu0 0.0
      %2289 = vmatprep.subr.mxu0 0.0
      %2290 = vmatpush1.msra.mxu0 0.0
      %2291 = vmatprep.subr.mxu0 0.0
      %2292 = vmatpush1.msra.mxu0 0.0
      %2293 = vmatprep.mubr.f32.mxu0 0.0
      %2294 = vmatmul.mubr.f32.gmra.mrb[0].mxu0 %v2185
      %v2295 = vpop.f32.mrb[0].mxu0
      %v2296 = vadd.f32 0.0, %v2295
      %v2297 = vpop.f32.mrb[0].mxu0
      %2298 = vmatprep.mubr.f32.mxu0 0.0
      %2299 = vmatmul.mubr.f32.gmra.mrb[0].mxu0 %v2186
      %v2300 = vpop.f32.mrb[0].mxu0
      %v2301 = vadd.f32 0.0, %v2300
      %v2302 = vpop.f32.mrb[0].mxu0
      %2303 = vmatprep.mubr.f32.mxu0 0.0
      %2304 = vmatmul.mubr.f32.gmra.mrb[0].mxu0 %v2187
      %v2305 = vpop.f32.mrb[0].mxu0
      %v2306 = vadd.f32 0.0, %v2305
      %v2307 = vpop.f32.mrb[0].mxu0
      %2308 = vmatprep.mubr.f32.mxu0 0.0
      %2309 = vmatmul.mubr.f32.gmra.mrb[0].mxu0 %v2188
      %v2310 = vpop.f32.mrb[0].mxu0
      %v2311 = vadd.f32 0.0, %v2310
      %v2312 = vpop.f32.mrb[0].mxu0
      %2313 = vmatprep.mubr.f32.mxu0 0.0
      %2314 = vmatmul.mubr.f32.gmra.mrb[0].mxu0 %v2189
      %v2315 = vpop.f32.mrb[0].mxu0
      %v2316 = vadd.f32 0.0, %v2315
      %v2317 = vpop.f32.mrb[0].mxu0
      %2318 = vmatprep.mubr.f32.mxu0 0.0
      %2319 = vmatmul.mubr.f32.gmra.mrb[0].mxu0 %v2190
      %v2320 = vpop.f32.mrb[0].mxu0
      %v2321 = vadd.f32 0.0, %v2320
      %v2322 = vpop.f32.mrb[0].mxu0
      %2323 = vmatprep.mubr.f32.mxu0 0.0
      %2324 = vmatmul.mubr.f32.gmra.mrb[0].mxu0 %v2191
      %v2325 = vpop.f32.mrb[0].mxu0
      %v2326 = vadd.f32 0.0, %v2325
      %v2327 = vpop.f32.mrb[0].mxu0
      %2328 = vmatprep.mubr.f32.mxu0 0.0
      %2329 = vmatmul.mubr.f32.gmra.mrb[0].mxu0 %v2192
      %v2330 = vpop.f32.mrb[0].mxu0
      %v2331 = vadd.f32 0.0, %v2330
      %v2332 = vpop.f32.mrb[0].mxu0
      %2333 = vmatprep.mubr.f32.mxu0 0.0
      %2334 = vmatmul.mubr.f32.gmra.mrb[0].mxu0 %v2193
      %v2335 = vpop.f32.mrb[0].mxu0
      %v2336 = vadd.f32 0.0, %v2335
      %v2337 = vpop.f32.mrb[0].mxu0
      %2338 = vmatprep.mubr.f32.mxu0 0.0
      %2339 = vmatmul.mubr.f32.gmra.mrb[0].mxu0 %v2194
      %v2340 = vpop.f32.mrb[0].mxu0
      %v2341 = vadd.f32 0.0, %v2340
      %v2342 = vpop.f32.mrb[0].mxu0
      %2343 = vmatprep.mubr.f32.mxu0 0.0
      %2344 = vmatmul.mubr.f32.gmra.mrb[0].mxu0 %v2195
      %v2345 = vpop.f32.mrb[0].mxu0
      %v2346 = vadd.f32 0.0, %v2345
      %v2347 = vpop.f32.mrb[0].mxu0
      %2348 = vmatprep.mubr.f32.mxu0 0.0
      %2349 = vmatmul.mubr.f32.gmra.mrb[0].mxu0 %v2196
      %v2350 = vpop.f32.mrb[0].mxu0
      %v2351 = vadd.f32 0.0, %v2350
      %v2352 = vpop.f32.mrb[0].mxu0
      %2353 = vdwg.mxu0
      %2354 = vmatprep.subr.mxu0 0.0
      %2355 = vmatpush1.msra.mxu0 %v2197
      %2356 = vmatprep.subr.mxu0 0.0
      %2357 = vmatpush1.msra.mxu0 %v2198
      %2358 = vmatprep.subr.mxu0 0.0
      %2359 = vmatpush1.msra.mxu0 %v2199
      %2360 = vmatprep.subr.mxu0 0.0
      %2361 = vmatpush1.msra.mxu0 %v2200
      %2362 = vmatprep.subr.mxu0 0.0
      %2363 = vmatpush1.msra.mxu0 %v2201
      %2364 = vmatprep.subr.mxu0 0.0
      %2365 = vmatpush1.msra.mxu0 %v2202
      %2366 = vmatprep.subr.mxu0 0.0
      %2367 = vmatpush1.msra.mxu0 %v2203
      %2368 = vmatprep.subr.mxu0 0.0
      %2369 = vmatpush1.msra.mxu0 %v2204
      %2370 = vmatprep.subr.mxu0 0.0
      %2371 = vmatpush1.msra.mxu0 %v2205
      %2372 = vmatprep.subr.mxu0 0.0
      %2373 = vmatpush1.msra.mxu0 %v2206
      %2374 = vmatprep.subr.mxu0 0.0
      %2375 = vmatpush1.msra.mxu0 %v2207
      %2376 = vmatprep.subr.mxu0 0.0
      %2377 = vmatpush1.msra.mxu0 %v2208
      %2378 = vmatprep.subr.mxu0 0.0
      %2379 = vmatpush1.msra.mxu0 %v2209
      %2380 = vmatprep.subr.mxu0 0.0
      %2381 = vmatpush1.msra.mxu0 %v2210
      %2382 = vmatprep.subr.mxu0 0.0
      %2383 = vmatpush1.msra.mxu0 %v2211
      %2384 = vmatprep.subr.mxu0 0.0
      %2385 = vmatpush1.msra.mxu0 %v2212
      %2386 = vmatprep.subr.mxu0 0.0
      %2387 = vmatpush1.msra.mxu0 0.0
      %2388 = vmatprep.subr.mxu0 0.0
      %2389 = vmatpush1.msra.mxu0 0.0
      %2390 = vmatprep.subr.mxu0 0.0
      %2391 = vmatpush1.msra.mxu0 0.0
      %2392 = vmatprep.subr.mxu0 0.0
      %2393 = vmatpush1.msra.mxu0 0.0
      %2394 = vmatprep.subr.mxu0 0.0
      %2395 = vmatpush1.msra.mxu0 0.0
      %2396 = vmatprep.subr.mxu0 0.0
      %2397 = vmatpush1.msra.mxu0 0.0
      %2398 = vmatprep.subr.mxu0 0.0
      %2399 = vmatpush1.msra.mxu0 0.0
      %2400 = vmatprep.subr.mxu0 0.0
      %2401 = vmatpush1.msra.mxu0 0.0
      %2402 = vmatprep.subr.mxu0 0.0
      %2403 = vmatpush1.msra.mxu0 0.0
      %2404 = vmatprep.subr.mxu0 0.0
      %2405 = vmatpush1.msra.mxu0 0.0
      %2406 = vmatprep.subr.mxu0 0.0
      %2407 = vmatpush1.msra.mxu0 0.0
      %2408 = vmatprep.subr.mxu0 0.0
      %2409 = vmatpush1.msra.mxu0 0.0
      %2410 = vmatprep.subr.mxu0 0.0
      %2411 = vmatpush1.msra.mxu0 0.0
      %2412 = vmatprep.subr.mxu0 0.0
      %2413 = vmatpush1.msra.mxu0 0.0
      %2414 = vmatprep.subr.mxu0 0.0
      %2415 = vmatpush1.msra.mxu0 0.0
      %2416 = vmatprep.subr.mxu0 0.0
      %2417 = vmatpush1.msra.mxu0 0.0
      %2418 = vmatprep.mubr.f32.mxu0 0.0
      %2419 = vmatmul.mubr.f32.gmra.mrb[0].mxu0 %v2172
      %v2420 = vpop.f32.mrb[0].mxu0
      %v2421 = vadd.f32 %v2296, %v2420
      %v2422 = vpop.f32.mrb[0].mxu0
      %2423 = vmatprep.mubr.f32.mxu0 0.0
      %2424 = vmatmul.mubr.f32.gmra.mrb[0].mxu0 %v2173
      %v2425 = vpop.f32.mrb[0].mxu0
      %v2426 = vadd.f32 %v2301, %v2425
      %v2427 = vpop.f32.mrb[0].mxu0
      %2428 = vmatprep.mubr.f32.mxu0 0.0
      %2429 = vmatmul.mubr.f32.gmra.mrb[0].mxu0 %v2174
      %v2430 = vpop.f32.mrb[0].mxu0
      %v2431 = vadd.f32 %v2306, %v2430
      %v2432 = vpop.f32.mrb[0].mxu0
      %2433 = vmatprep.mubr.f32.mxu0 0.0
      %2434 = vmatmul.mubr.f32.gmra.mrb[0].mxu0 %v2175
      %v2435 = vpop.f32.mrb[0].mxu0
      %v2436 = vadd.f32 %v2311, %v2435
      %v2437 = vpop.f32.mrb[0].mxu0
      %2438 = vmatprep.mubr.f32.mxu0 0.0
      %2439 = vmatmul.mubr.f32.gmra.mrb[0].mxu0 %v2176
      %v2440 = vpop.f32.mrb[0].mxu0
      %v2441 = vadd.f32 %v2316, %v2440
      %v2442 = vpop.f32.mrb[0].mxu0
      %2443 = vmatprep.mubr.f32.mxu0 0.0
      %2444 = vmatmul.mubr.f32.gmra.mrb[0].mxu0 %v2177
      %v2445 = vpop.f32.mrb[0].mxu0
      %v2446 = vadd.f32 %v2321, %v2445
      %v2447 = vpop.f32.mrb[0].mxu0
      %2448 = vmatprep.mubr.f32.mxu0 0.0
      %2449 = vmatmul.mubr.f32.gmra.mrb[0].mxu0 %v2178
      %v2450 = vpop.f32.mrb[0].mxu0
      %v2451 = vadd.f32 %v2326, %v2450
      %v2452 = vpop.f32.mrb[0].mxu0
      %2453 = vmatprep.mubr.f32.mxu0 0.0
      %2454 = vmatmul.mubr.f32.gmra.mrb[0].mxu0 %v2179
      %v2455 = vpop.f32.mrb[0].mxu0
      %v2456 = vadd.f32 %v2331, %v2455
      %v2457 = vpop.f32.mrb[0].mxu0
      %2458 = vmatprep.mubr.f32.mxu0 0.0
      %2459 = vmatmul.mubr.f32.gmra.mrb[0].mxu0 %v2180
      %v2460 = vpop.f32.mrb[0].mxu0
      %v2461 = vadd.f32 %v2336, %v2460
      %v2462 = vpop.f32.mrb[0].mxu0
      %2463 = vmatprep.mubr.f32.mxu0 0.0
      %2464 = vmatmul.mubr.f32.gmra.mrb[0].mxu0 %v2181
      %v2465 = vpop.f32.mrb[0].mxu0
      %v2466 = vadd.f32 %v2341, %v2465
      %v2467 = vpop.f32.mrb[0].mxu0
      %2468 = vmatprep.mubr.f32.mxu0 0.0
      %2469 = vmatmul.mubr.f32.gmra.mrb[0].mxu0 %v2182
      %v2470 = vpop.f32.mrb[0].mxu0
      %v2471 = vadd.f32 %v2346, %v2470
      %v2472 = vpop.f32.mrb[0].mxu0
      %2473 = vmatprep.mubr.f32.mxu0 0.0
      %2474 = vmatmul.mubr.f32.gmra.mrb[0].mxu0 %v2183
      %v2475 = vpop.f32.mrb[0].mxu0
      %v2476 = vadd.f32 %v2351, %v2475
      %v2477 = vpop.f32.mrb[0].mxu0
      %2478 = vdwg.mxu0
      %v2479 = vld [vmem:[%s480] sm:$0xff]
      %v2480 = vld [vmem:[%s480 + $0x8] sm:$0xff]
      %v2481 = vld [vmem:[%s480 + $0x10] sm:$0xff]
      %v2482 = vld [vmem:[%s480 + $0x18] sm:$0xff]
      %v2483 = vld [vmem:[%s480 + $0x20] sm:$0xff]
      %v2484 = vld [vmem:[%s480 + $0x28] sm:$0xff]
      %v2485 = vld [vmem:[%s480 + $0x30] sm:$0xff]
      %v2486 = vld [vmem:[%s480 + $0x38] sm:$0xff]
      %v2487 = vld [vmem:[%s480 + $0x40] sm:$0xff]
      %v2488 = vld [vmem:[%s480 + $0x48] sm:$0xff]
      %v2489 = vld [vmem:[%s480 + $0x50] sm:$0xff]
      %v2490 = vld [vmem:[%s480 + $0x58] sm:$0xff]
      %v2491 = vld [vmem:[%s480 + $0x60] sm:$0xff]
      %v2492 = vld [vmem:[%s480 + $0x68] sm:$0xff]
      %v2493 = vld [vmem:[%s480 + $0x70] sm:$0xff]
      %v2494 = vld [vmem:[%s480 + $0x78] sm:$0xff]
      %v2495 = vld [vmem:[%s497] sm:$0xff]
      %v2496 = vld [vmem:[%s497 + $0x8] sm:$0xff]
      %v2497 = vld [vmem:[%s497 + $0x10] sm:$0xff]
      %v2498 = vld [vmem:[%s497 + $0x18] sm:$0xff]
      %v2499 = vld [vmem:[%s497 + $0x20] sm:$0xff]
      %v2500 = vld [vmem:[%s497 + $0x28] sm:$0xff]
      %v2501 = vld [vmem:[%s497 + $0x30] sm:$0xff]
      %v2502 = vld [vmem:[%s497 + $0x38] sm:$0xff]
      %v2503 = vld [vmem:[%s497 + $0x40] sm:$0xff]
      %v2504 = vld [vmem:[%s497 + $0x48] sm:$0xff]
      %v2505 = vld [vmem:[%s497 + $0x50] sm:$0xff]
      %v2506 = vld [vmem:[%s497 + $0x58] sm:$0xff]
      %v2507 = vld [vmem:[%s497 + $0x60] sm:$0xff]
      %v2508 = vld [vmem:[%s497 + $0x68] sm:$0xff]
      %v2509 = vld [vmem:[%s497 + $0x70] sm:$0xff]
      %v2510 = vld [vmem:[%s497 + $0x78] sm:$0xff]
      %2511 = vmatprep.subr.mxu0 0.0
      %2512 = vmatpush1.msra.mxu0 %v2495
      %2513 = vmatprep.subr.mxu0 0.0
      %2514 = vmatpush1.msra.mxu0 %v2496
      %2515 = vmatprep.subr.mxu0 0.0
      %2516 = vmatpush1.msra.mxu0 %v2497
      %2517 = vmatprep.subr.mxu0 0.0
      %2518 = vmatpush1.msra.mxu0 %v2498
      %2519 = vmatprep.subr.mxu0 0.0
      %2520 = vmatpush1.msra.mxu0 %v2499
      %2521 = vmatprep.subr.mxu0 0.0
      %2522 = vmatpush1.msra.mxu0 %v2500
      %2523 = vmatprep.subr.mxu0 0.0
      %2524 = vmatpush1.msra.mxu0 %v2501
      %2525 = vmatprep.subr.mxu0 0.0
      %2526 = vmatpush1.msra.mxu0 %v2502
      %2527 = vmatprep.subr.mxu0 0.0
      %2528 = vmatpush1.msra.mxu0 %v2503
      %2529 = vmatprep.subr.mxu0 0.0
      %2530 = vmatpush1.msra.mxu0 %v2504
      %2531 = vmatprep.subr.mxu0 0.0
      %2532 = vmatpush1.msra.mxu0 %v2505
      %2533 = vmatprep.subr.mxu0 0.0
      %2534 = vmatpush1.msra.mxu0 %v2506
      %2535 = vmatprep.subr.mxu0 0.0
      %2536 = vmatpush1.msra.mxu0 %v2507
      %2537 = vmatprep.subr.mxu0 0.0
      %2538 = vmatpush1.msra.mxu0 %v2508
      %2539 = vmatprep.subr.mxu0 0.0
      %2540 = vmatpush1.msra.mxu0 %v2509
      %2541 = vmatprep.subr.mxu0 0.0
      %2542 = vmatpush1.msra.mxu0 %v2510
      %2543 = vmatprep.subr.mxu0 0.0
      %2544 = vmatpush1.msra.mxu0 0.0
      %2545 = vmatprep.subr.mxu0 0.0
      %2546 = vmatpush1.msra.mxu0 0.0
      %2547 = vmatprep.subr.mxu0 0.0
      %2548 = vmatpush1.msra.mxu0 0.0
      %2549 = vmatprep.subr.mxu0 0.0
      %2550 = vmatpush1.msra.mxu0 0.0
      %2551 = vmatprep.subr.mxu0 0.0
      %2552 = vmatpush1.msra.mxu0 0.0
      %2553 = vmatprep.subr.mxu0 0.0
      %2554 = vmatpush1.msra.mxu0 0.0
      %2555 = vmatprep.subr.mxu0 0.0
      %2556 = vmatpush1.msra.mxu0 0.0
      %2557 = vmatprep.subr.mxu0 0.0
      %2558 = vmatpush1.msra.mxu0 0.0
      %2559 = vmatprep.subr.mxu0 0.0
      %2560 = vmatpush1.msra.mxu0 0.0
      %2561 = vmatprep.subr.mxu0 0.0
      %2562 = vmatpush1.msra.mxu0 0.0
      %2563 = vmatprep.subr.mxu0 0.0
      %2564 = vmatpush1.msra.mxu0 0.0
      %2565 = vmatprep.subr.mxu0 0.0
      %2566 = vmatpush1.msra.mxu0 0.0
      %2567 = vmatprep.subr.mxu0 0.0
      %2568 = vmatpush1.msra.mxu0 0.0
      %2569 = vmatprep.subr.mxu0 0.0
      %2570 = vmatpush1.msra.mxu0 0.0
      %2571 = vmatprep.subr.mxu0 0.0
      %2572 = vmatpush1.msra.mxu0 0.0
      %2573 = vmatprep.subr.mxu0 0.0
      %2574 = vmatpush1.msra.mxu0 0.0
      %2575 = vmatprep.mubr.f32.mxu0 0.0
      %2576 = vmatmul.mubr.f32.gmra.mrb[0].mxu0 %v2185
      %v2577 = vpop.f32.mrb[0].mxu0
      %v2578 = vadd.f32 0.0, %v2577
      %v2579 = vpop.f32.mrb[0].mxu0
      %2580 = vmatprep.mubr.f32.mxu0 0.0
      %2581 = vmatmul.mubr.f32.gmra.mrb[0].mxu0 %v2186
      %v2582 = vpop.f32.mrb[0].mxu0
      %v2583 = vadd.f32 0.0, %v2582
      %v2584 = vpop.f32.mrb[0].mxu0
      %2585 = vmatprep.mubr.f32.mxu0 0.0
      %2586 = vmatmul.mubr.f32.gmra.mrb[0].mxu0 %v2187
      %v2587 = vpop.f32.mrb[0].mxu0
      %v2588 = vadd.f32 0.0, %v2587
      %v2589 = vpop.f32.mrb[0].mxu0
      %2590 = vmatprep.mubr.f32.mxu0 0.0
      %2591 = vmatmul.mubr.f32.gmra.mrb[0].mxu0 %v2188
      %v2592 = vpop.f32.mrb[0].mxu0
      %v2593 = vadd.f32 0.0, %v2592
      %v2594 = vpop.f32.mrb[0].mxu0
      %2595 = vmatprep.mubr.f32.mxu0 0.0
      %2596 = vmatmul.mubr.f32.gmra.mrb[0].mxu0 %v2189
      %v2597 = vpop.f32.mrb[0].mxu0
      %v2598 = vadd.f32 0.0, %v2597
      %v2599 = vpop.f32.mrb[0].mxu0
      %2600 = vmatprep.mubr.f32.mxu0 0.0
      %2601 = vmatmul.mubr.f32.gmra.mrb[0].mxu0 %v2190
      %v2602 = vpop.f32.mrb[0].mxu0
      %v2603 = vadd.f32 0.0, %v2602
      %v2604 = vpop.f32.mrb[0].mxu0
      %2605 = vmatprep.mubr.f32.mxu0 0.0
      %2606 = vmatmul.mubr.f32.gmra.mrb[0].mxu0 %v2191
      %v2607 = vpop.f32.mrb[0].mxu0
      %v2608 = vadd.f32 0.0, %v2607
      %v2609 = vpop.f32.mrb[0].mxu0
      %2610 = vmatprep.mubr.f32.mxu0 0.0
      %2611 = vmatmul.mubr.f32.gmra.mrb[0].mxu0 %v2192
      %v2612 = vpop.f32.mrb[0].mxu0
      %v2613 = vadd.f32 0.0, %v2612
      %v2614 = vpop.f32.mrb[0].mxu0
      %2615 = vmatprep.mubr.f32.mxu0 0.0
      %2616 = vmatmul.mubr.f32.gmra.mrb[0].mxu0 %v2193
      %v2617 = vpop.f32.mrb[0].mxu0
      %v2618 = vadd.f32 0.0, %v2617
      %v2619 = vpop.f32.mrb[0].mxu0
      %2620 = vmatprep.mubr.f32.mxu0 0.0
      %2621 = vmatmul.mubr.f32.gmra.mrb[0].mxu0 %v2194
      %v2622 = vpop.f32.mrb[0].mxu0
      %v2623 = vadd.f32 0.0, %v2622
      %v2624 = vpop.f32.mrb[0].mxu0
      %2625 = vmatprep.mubr.f32.mxu0 0.0
      %2626 = vmatmul.mubr.f32.gmra.mrb[0].mxu0 %v2195
      %v2627 = vpop.f32.mrb[0].mxu0
      %v2628 = vadd.f32 0.0, %v2627
      %v2629 = vpop.f32.mrb[0].mxu0
      %2630 = vmatprep.mubr.f32.mxu0 0.0
      %2631 = vmatmul.mubr.f32.gmra.mrb[0].mxu0 %v2196
      %v2632 = vpop.f32.mrb[0].mxu0
      %v2633 = vadd.f32 0.0, %v2632
      %v2634 = vpop.f32.mrb[0].mxu0
      %2635 = vdwg.mxu0
      %2636 = vmatprep.subr.mxu0 0.0
      %2637 = vmatpush1.msra.mxu0 %v2479
      %2638 = vmatprep.subr.mxu0 0.0
      %2639 = vmatpush1.msra.mxu0 %v2480
      %2640 = vmatprep.subr.mxu0 0.0
      %2641 = vmatpush1.msra.mxu0 %v2481
      %2642 = vmatprep.subr.mxu0 0.0
      %2643 = vmatpush1.msra.mxu0 %v2482
      %2644 = vmatprep.subr.mxu0 0.0
      %2645 = vmatpush1.msra.mxu0 %v2483
      %2646 = vmatprep.subr.mxu0 0.0
      %2647 = vmatpush1.msra.mxu0 %v2484
      %2648 = vmatprep.subr.mxu0 0.0
      %2649 = vmatpush1.msra.mxu0 %v2485
      %2650 = vmatprep.subr.mxu0 0.0
      %2651 = vmatpush1.msra.mxu0 %v2486
      %2652 = vmatprep.subr.mxu0 0.0
      %2653 = vmatpush1.msra.mxu0 %v2487
      %2654 = vmatprep.subr.mxu0 0.0
      %2655 = vmatpush1.msra.mxu0 %v2488
      %2656 = vmatprep.subr.mxu0 0.0
      %2657 = vmatpush1.msra.mxu0 %v2489
      %2658 = vmatprep.subr.mxu0 0.0
      %2659 = vmatpush1.msra.mxu0 %v2490
      %2660 = vmatprep.subr.mxu0 0.0
      %2661 = vmatpush1.msra.mxu0 %v2491
      %2662 = vmatprep.subr.mxu0 0.0
      %2663 = vmatpush1.msra.mxu0 %v2492
      %2664 = vmatprep.subr.mxu0 0.0
      %2665 = vmatpush1.msra.mxu0 %v2493
      %2666 = vmatprep.subr.mxu0 0.0
      %2667 = vmatpush1.msra.mxu0 %v2494
      %2668 = vmatprep.subr.mxu0 0.0
      %2669 = vmatpush1.msra.mxu0 0.0
      %2670 = vmatprep.subr.mxu0 0.0
      %2671 = vmatpush1.msra.mxu0 0.0
      %2672 = vmatprep.subr.mxu0 0.0
      %2673 = vmatpush1.msra.mxu0 0.0
      %2674 = vmatprep.subr.mxu0 0.0
      %2675 = vmatpush1.msra.mxu0 0.0
      %2676 = vmatprep.subr.mxu0 0.0
      %2677 = vmatpush1.msra.mxu0 0.0
      %2678 = vmatprep.subr.mxu0 0.0
      %2679 = vmatpush1.msra.mxu0 0.0
      %2680 = vmatprep.subr.mxu0 0.0
      %2681 = vmatpush1.msra.mxu0 0.0
      %2682 = vmatprep.subr.mxu0 0.0
      %2683 = vmatpush1.msra.mxu0 0.0
      %2684 = vmatprep.subr.mxu0 0.0
      %2685 = vmatpush1.msra.mxu0 0.0
      %2686 = vmatprep.subr.mxu0 0.0
      %2687 = vmatpush1.msra.mxu0 0.0
      %2688 = vmatprep.subr.mxu0 0.0
      %2689 = vmatpush1.msra.mxu0 0.0
      %2690 = vmatprep.subr.mxu0 0.0
      %2691 = vmatpush1.msra.mxu0 0.0
      %2692 = vmatprep.subr.mxu0 0.0
      %2693 = vmatpush1.msra.mxu0 0.0
      %2694 = vmatprep.subr.mxu0 0.0
      %2695 = vmatpush1.msra.mxu0 0.0
      %2696 = vmatprep.subr.mxu0 0.0
      %2697 = vmatpush1.msra.mxu0 0.0
      %2698 = vmatprep.subr.mxu0 0.0
      %2699 = vmatpush1.msra.mxu0 0.0
      %2700 = vmatprep.mubr.f32.mxu0 0.0
      %2701 = vmatmul.mubr.f32.gmra.mrb[0].mxu0 %v2172
      %v2702 = vpop.f32.mrb[0].mxu0
      %v2703 = vadd.f32 %v2578, %v2702
      %v2704 = vpop.f32.mrb[0].mxu0
      %2705 = vmatprep.mubr.f32.mxu0 0.0
      %2706 = vmatmul.mubr.f32.gmra.mrb[0].mxu0 %v2173
      %v2707 = vpop.f32.mrb[0].mxu0
      %v2708 = vadd.f32 %v2583, %v2707
      %v2709 = vpop.f32.mrb[0].mxu0
      %2710 = vmatprep.mubr.f32.mxu0 0.0
      %2711 = vmatmul.mubr.f32.gmra.mrb[0].mxu0 %v2174
      %v2712 = vpop.f32.mrb[0].mxu0
      %v2713 = vadd.f32 %v2588, %v2712
      %v2714 = vpop.f32.mrb[0].mxu0
      %2715 = vmatprep.mubr.f32.mxu0 0.0
      %2716 = vmatmul.mubr.f32.gmra.mrb[0].mxu0 %v2175
      %v2717 = vpop.f32.mrb[0].mxu0
      %v2718 = vadd.f32 %v2593, %v2717
      %v2719 = vpop.f32.mrb[0].mxu0
      %2720 = vmatprep.mubr.f32.mxu0 0.0
      %2721 = vmatmul.mubr.f32.gmra.mrb[0].mxu0 %v2176
      %v2722 = vpop.f32.mrb[0].mxu0
      %v2723 = vadd.f32 %v2598, %v2722
      %v2724 = vpop.f32.mrb[0].mxu0
      %2725 = vmatprep.mubr.f32.mxu0 0.0
      %2726 = vmatmul.mubr.f32.gmra.mrb[0].mxu0 %v2177
      %v2727 = vpop.f32.mrb[0].mxu0
      %v2728 = vadd.f32 %v2603, %v2727
      %v2729 = vpop.f32.mrb[0].mxu0
      %2730 = vmatprep.mubr.f32.mxu0 0.0
      %2731 = vmatmul.mubr.f32.gmra.mrb[0].mxu0 %v2178
      %v2732 = vpop.f32.mrb[0].mxu0
      %v2733 = vadd.f32 %v2608, %v2732
      %v2734 = vpop.f32.mrb[0].mxu0
      %2735 = vmatprep.mubr.f32.mxu0 0.0
      %2736 = vmatmul.mubr.f32.gmra.mrb[0].mxu0 %v2179
      %v2737 = vpop.f32.mrb[0].mxu0
      %v2738 = vadd.f32 %v2613, %v2737
      %v2739 = vpop.f32.mrb[0].mxu0
      %2740 = vmatprep.mubr.f32.mxu0 0.0
      %2741 = vmatmul.mubr.f32.gmra.mrb[0].mxu0 %v2180
      %v2742 = vpop.f32.mrb[0].mxu0
      %v2743 = vadd.f32 %v2618, %v2742
      %v2744 = vpop.f32.mrb[0].mxu0
      %2745 = vmatprep.mubr.f32.mxu0 0.0
      %2746 = vmatmul.mubr.f32.gmra.mrb[0].mxu0 %v2181
      %v2747 = vpop.f32.mrb[0].mxu0
      %v2748 = vadd.f32 %v2623, %v2747
      %v2749 = vpop.f32.mrb[0].mxu0
      %2750 = vmatprep.mubr.f32.mxu0 0.0
      %2751 = vmatmul.mubr.f32.gmra.mrb[0].mxu0 %v2182
      %v2752 = vpop.f32.mrb[0].mxu0
      %v2753 = vadd.f32 %v2628, %v2752
      %v2754 = vpop.f32.mrb[0].mxu0
      %2755 = vmatprep.mubr.f32.mxu0 0.0
      %2756 = vmatmul.mubr.f32.gmra.mrb[0].mxu0 %v2183
      %v2757 = vpop.f32.mrb[0].mxu0
      %v2758 = vadd.f32 %v2633, %v2757
      %v2759 = vpop.f32.mrb[0].mxu0
      %2760 = vdwg.mxu0
      %v2761 = vrot.slane %v2703, 1
      %v2762 = vrot.slane %v2708, 1
      %v2763 = vrot.slane %v2713, 1
      %v2764 = vrot.slane %v2718, 1
      %v2765 = vrot.slane %v2723, 1
      %v2766 = vrot.slane %v2728, 1
      %v2767 = vrot.slane %v2733, 1
      %v2768 = vrot.slane %v2738, 1
      %v2769 = vrot.slane %v2743, 1
      %v2770 = vrot.slane %v2748, 1
      %v2771 = vrot.slane %v2753, 1
      %v2772 = vrot.slane %v2758, 1
      %v2773 = vsel %vm778, %v2771, %v2772
      %v2774 = vsel %vm778, %v2770, %v2771
      %v2775 = vsel %vm778, %v2769, %v2770
      %v2776 = vsel %vm778, %v2768, %v2769
      %v2777 = vsel %vm778, %v2767, %v2768
      %v2778 = vsel %vm778, %v2766, %v2767
      %v2779 = vsel %vm778, %v2765, %v2766
      %v2780 = vsel %vm778, %v2764, %v2765
      %v2781 = vsel %vm778, %v2763, %v2764
      %v2782 = vsel %vm778, %v2762, %v2763
      %v2783 = vsel %vm778, %v2761, %v2762
      %v2784 = vsel %vm778, %v2772, %v2761
      %v2785 = vadd.f32 %v2421, %v2783
      %v2786 = vadd.f32 %v2426, %v2782
      %v2787 = vadd.f32 %v2431, %v2781
      %v2788 = vadd.f32 %v2436, %v2780
      %v2789 = vadd.f32 %v2441, %v2779
      %v2790 = vadd.f32 %v2446, %v2778
      %v2791 = vadd.f32 %v2451, %v2777
      %v2792 = vadd.f32 %v2456, %v2776
      %v2793 = vadd.f32 %v2461, %v2775
      %v2794 = vadd.f32 %v2466, %v2774
      %v2795 = vadd.f32 %v2471, %v2773
      %v2796 = vadd.f32 %v2476, %v2784
      %v2797 = vadd.f32 %v2785, %v807
      %v2798 = vadd.f32 %v2786, %v807
      %v2799 = vadd.f32 %v2787, %v807
      %v2800 = vadd.f32 %v2788, %v807
      %v2801 = vadd.f32 %v2789, %v807
      %v2802 = vadd.f32 %v2790, %v807
      %v2803 = vadd.f32 %v2791, %v807
      %v2804 = vadd.f32 %v2792, %v807
      %v2805 = vadd.f32 %v2793, %v807
      %v2806 = vadd.f32 %v2794, %v807
      %v2807 = vadd.f32 %v2795, %v807
      %v2808 = vadd.f32 %v2796, %v807
      %v2809 = vmax.f32 %v2797, 0.0
      %v2810 = vmax.f32 %v2798, 0.0
      %v2811 = vmax.f32 %v2799, 0.0
      %v2812 = vmax.f32 %v2800, 0.0
      %v2813 = vmax.f32 %v2801, 0.0
      %v2814 = vmax.f32 %v2802, 0.0
      %v2815 = vmax.f32 %v2803, 0.0
      %v2816 = vmax.f32 %v2804, 0.0
      %v2817 = vmax.f32 %v2805, 0.0
      %v2818 = vmax.f32 %v2806, 0.0
      %v2819 = vmax.f32 %v2807, 0.0
      %v2820 = vmax.f32 %v2808, 0.0
      %s2821 = scalar_lea.vmem %s170, 288
      %2822 = vst [vmem:[%s2821] sm:$0xff] %v2809
      %2823 = vst [vmem:[%s2821 + $0x8] sm:$0xff] %v2810
      %2824 = vst [vmem:[%s2821 + $0x10] sm:$0xff] %v2811
      %2825 = vst [vmem:[%s2821 + $0x18] sm:$0xff] %v2812
      %2826 = vst [vmem:[%s2821 + $0x20] sm:$0xff] %v2813
      %2827 = vst [vmem:[%s2821 + $0x28] sm:$0xff] %v2814
      %2828 = vst [vmem:[%s2821 + $0x30] sm:$0xff] %v2815
      %2829 = vst [vmem:[%s2821 + $0x38] sm:$0xff] %v2816
      %2830 = vst [vmem:[%s2821 + $0x40] sm:$0xff] %v2817
      %2831 = vst [vmem:[%s2821 + $0x48] sm:$0xff] %v2818
      %2832 = vst [vmem:[%s2821 + $0x50] sm:$0xff] %v2819
      %2833 = vst [vmem:[%s2821 + $0x58] sm:$0xff] %v2820
      %p2834 = scmp.lt.s32.totalorder %s14, 1
      %s2835 = scalar_select %p2834, %s14, 1
      %s2836 = smul.addr %s2835, 48
      %s2837 = smul.addr %s2836, 8
      %s2838 = scalar_lea.vmem %s3, %s2837
      // Predicated region
      $region33: #{random_projection_forward.3} parent=31 // pred_check
        %p2839 = pneg %p100
      $region34: #{random_projection_forward.3} parent=31 // pred_check_branch
        %2841 = sbr.rel (%p2839) target = $region36
      $region35: #{random_projection_forward.3} parent=31 // pred_region
        _
      $region36: #{random_projection_forward.3} parent=31 // pred_fallthru
        _
    $region32: #{random_projection_forward.3} parent=5 // pred_fallthru
      _
    %p2842 = scmp.le.s32.totalorder 2, %s9
    // Predicated region
    $region37: #{random_projection_forward.3} parent=5 // pred_check
      %p2843 = pneg %p2842
    $region38: #{random_projection_forward.3} parent=5 // pred_check_branch
      %2845 = sbr.rel (%p2843) target = $region40
    $region39: #{random_projection_forward.3} parent=5 // pred_region
      %s2846 = ssub.s32 %s9, 2
      // Predicated region
      $region41: #{random_projection_forward.3} parent=39 // pred_check
        %p2847 = pneg %p106
      $region42: #{random_projection_forward.3} parent=39 // pred_check_branch
        %2849 = sbr.rel (%p2847) target = $region44
      $region43: #{random_projection_forward.3} parent=39 // pred_region
        %p2850 = scmp.lt.s32.totalorder %s15, 1
        %s2851 = scalar_select %p2850, %s15, 1
        %s2852 = smul.addr %s2851, 48
        %s2853 = smul.addr %s2852, 8
        %s2854 = scalar_lea.vmem %s3, %s2853
      $region44: #{random_projection_forward.3} parent=39 // pred_fallthru
        _
    $region40: #{random_projection_forward.3} parent=5 // pred_fallthru
      _
  $region6: #{random_projection_forward.3} parent=0 // loop_footer
    %s13 = sadd.s32 1, %s9
  $region7: #{random_projection_forward.3} parent=0 // loop_footer_branch
    %8 = sbr.rel target = $region3
  $region8: #{random_projection_forward.3} parent=0 // loop_exit
    _

// kernel: random_projection_forward.4
$region0: #{random_projection_forward.4}
  #allocation0 [shape = 'u32[]', space=smem, size = 0x4, offset = 0x4, fixed_abs, tag = 'smem constant byte address 0x4 - core index']
  #allocation1 [shape = 'u32[144,128]{1,0:T(1,128)}', space=vmem, size = 0x12000, scoped, tag = 'internal scratch']
  %s0 = inlined_call_operand.vmem [shape: f32[2,9,16,128], index: 0, kind: input, shape index: {}]
  %s1 = inlined_call_operand.vmem [shape: f32[4,128,128], index: 1, kind: input, shape index: {}]
  %s2 = inlined_call_operand.vmem [shape: f32[1,128], index: 2, kind: input, shape index: {}]
  %s3 = inlined_call_operand.vmem [shape: f32[2,8,16,128], index: 3, kind: output, shape index: {}]
  %s4 = sld [smem:[#allocation0]]
  $region45: #{random_projection_forward.4} parent=0
    _
  %s6 = ssub.s32 1, %s4
  %s7 = scalar_select 0, %s6, %s4
  loop: start=0, step=1, limit=4
  $region2: #{random_projection_forward.4} parent=0 // loop_pre_header
    _
  $region3: #{random_projection_forward.4} parent=0 // loop_header
    %s9 = sphi 0, %s13
    %p10 = scmp.ge.s32.totalorder %s9, 4
    %s19 = sphi 0, %s21
    %s22 = sphi 0, %s19
    %s23 = sphi 0, %s22
    %s39 = sphi 0, %s23
    %s43 = sphi 0, %s43
    %s45 = sphi 0, %s43
    %s46 = sphi 0, %s45
    %s60 = sphi 0, %s46
    %s64 = sphi 0, %s64
    %s66 = sphi 0, %s64
    %s67 = sphi 0, %s66
    %s81 = sphi 0, %s67
    %s87 = sphi 0, %s89
    %s90 = sphi 0, %s87
    %s91 = sphi 0, %s90
    %s107 = sphi 0, %s91
  $region4: #{random_projection_forward.4} parent=0 // loop_header_branch
    %12 = sbr.rel (%p10) target = $region8
  $region5: #{random_projection_forward.4} parent=0 // loop_body
    %s14 = ssub.s32 %s9, 1
    %s15 = ssub.s32 %s9, 2
    %s16 = sadd.s32 %s9, 1
    %s17 = ssub.s32 %s9, %s16
    %p18 = scmp.eq.s32.totalorder %s17, 0
    %s20 = sadd.s32 %s19, 1
    %s21 = scalar_select %p18, %s19, %s20
    %p24 = pneg %p18
    %p25 = scmp.eq.s32.totalorder %s9, 1
    %p26 = por %p24, %p25
    %p27 = scmp.ne.s32.totalorder %s19, %s22
    %p28 = scmp.eq.s32.totalorder %s9, 0
    %p29 = por %p27, %p28
    %p30 = scmp.ne.s32.totalorder %s19, %s22
    %p31 = scmp.eq.s32.totalorder %s14, 1
    %p32 = por %p30, %p31
    %p33 = scmp.ne.s32.totalorder %s22, %s23
    %p34 = scmp.eq.s32.totalorder %s14, 0
    %p35 = por %p33, %p34
    %p36 = scmp.ne.s32.totalorder %s22, %s23
    %p37 = scmp.eq.s32.totalorder %s15, 1
    %p38 = por %p36, %p37
    %p40 = scmp.ne.s32.totalorder %s23, %s39
    %p41 = scmp.eq.s32.totalorder %s15, 0
    %p42 = por %p40, %p41
    %s44 = sadd.s32 %s43, 1
    %p47 = scmp.eq.s32.totalorder %s9, 1
    %p48 = scmp.ne.s32.totalorder %s43, %s45
    %p49 = scmp.eq.s32.totalorder %s9, 0
    %p50 = por %p48, %p49
    %p51 = scmp.ne.s32.totalorder %s43, %s45
    %p52 = scmp.eq.s32.totalorder %s14, 1
    %p53 = por %p51, %p52
    %p54 = scmp.ne.s32.totalorder %s45, %s46
    %p55 = scmp.eq.s32.totalorder %s14, 0
    %p56 = por %p54, %p55
    %p57 = scmp.ne.s32.totalorder %s45, %s46
    %p58 = scmp.eq.s32.totalorder %s15, 1
    %p59 = por %p57, %p58
    %p61 = scmp.ne.s32.totalorder %s46, %s60
    %p62 = scmp.eq.s32.totalorder %s15, 0
    %p63 = por %p61, %p62
    %s65 = sadd.s32 %s64, 1
    %p68 = scmp.eq.s32.totalorder %s9, 1
    %p69 = scmp.ne.s32.totalorder %s64, %s66
    %p70 = scmp.eq.s32.totalorder %s9, 0
    %p71 = por %p69, %p70
    %p72 = scmp.ne.s32.totalorder %s64, %s66
    %p73 = scmp.eq.s32.totalorder %s14, 1
    %p74 = por %p72, %p73
    %p75 = scmp.ne.s32.totalorder %s66, %s67
    %p76 = scmp.eq.s32.totalorder %s14, 0
    %p77 = por %p75, %p76
    %p78 = scmp.ne.s32.totalorder %s66, %s67
    %p79 = scmp.eq.s32.totalorder %s15, 1
    %p80 = por %p78, %p79
    %p82 = scmp.ne.s32.totalorder %s67, %s81
    %p83 = scmp.eq.s32.totalorder %s15, 0
    %p84 = por %p82, %p83
    %s85 = ssub.s32 %s9, %s16
    %p86 = scmp.eq.s32.totalorder %s85, 0
    %s88 = sadd.s32 %s87, 1
    %s89 = scalar_select %p86, %s87, %s88
    %p92 = pneg %p86
    %p93 = scmp.eq.s32.totalorder %s9, 1
    %p94 = por %p92, %p93
    %p95 = scmp.ne.s32.totalorder %s87, %s90
    %p96 = scmp.eq.s32.totalorder %s9, 0
    %p97 = por %p95, %p96
    %p98 = scmp.ne.s32.totalorder %s87, %s90
    %p99 = scmp.eq.s32.totalorder %s14, 1
    %p100 = por %p98, %p99
    %p101 = scmp.ne.s32.totalorder %s90, %s91
    %p102 = scmp.eq.s32.totalorder %s14, 0
    %p103 = por %p101, %p102
    %p104 = scmp.ne.s32.totalorder %s90, %s91
    %p105 = scmp.eq.s32.totalorder %s15, 1
    %p106 = por %p104, %p105
    %p108 = scmp.ne.s32.totalorder %s91, %s107
    %p109 = scmp.eq.s32.totalorder %s15, 0
    %p110 = por %p108, %p109
    %p111 = scmp.le.s32.totalorder 1, %s9
    %p112 = scmp.lt.s32.totalorder %s9, 3
    %p113 = pnand %p111, %p112
    %p114 = pneg %p113
    // Predicated region
    $region9: #{random_projection_forward.4} parent=5 // pred_check
      _
    $region10: #{random_projection_forward.4} parent=5 // pred_check_branch
      %116 = sbr.rel (%p113) target = $region12
    $region11: #{random_projection_forward.4} parent=5 // pred_region
      %s117 = ssub.s32 %s9, 1
      // Predicated region
      $region13: #{random_projection_forward.4} parent=11 // pred_check
        %p118 = pneg %p56
      $region14: #{random_projection_forward.4} parent=11 // pred_check_branch
        %120 = sbr.rel (%p118) target = $region16
      $region15: #{random_projection_forward.4} parent=11 // pred_region
        _
      $region16: #{random_projection_forward.4} parent=11 // pred_fallthru
        _
      // Predicated region
      $region17: #{random_projection_forward.4} parent=11 // pred_check
        %p121 = pneg %p77
      $region18: #{random_projection_forward.4} parent=11 // pred_check_branch
        %123 = sbr.rel (%p121) target = $region20
      $region19: #{random_projection_forward.4} parent=11 // pred_region
        _
      $region20: #{random_projection_forward.4} parent=11 // pred_fallthru
        _
    $region12: #{random_projection_forward.4} parent=5 // pred_fallthru
      _
    %p124 = scmp.lt.s32.totalorder %s9, 2
    // Predicated region
    $region21: #{random_projection_forward.4} parent=5 // pred_check
      %p125 = pneg %p124
    $region22: #{random_projection_forward.4} parent=5 // pred_check_branch
      %127 = sbr.rel (%p125) target = $region24
    $region23: #{random_projection_forward.4} parent=5 // pred_region
      // Predicated region
      $region25: #{random_projection_forward.4} parent=23 // pred_check
        %p128 = pneg %p29
      $region26: #{random_projection_forward.4} parent=23 // pred_check_branch
        %130 = sbr.rel (%p128) target = $region28
      $region27: #{random_projection_forward.4} parent=23 // pred_region
        %p131 = scmp.lt.s32.totalorder %s9, 1
        %s132 = scalar_select %p131, %s9, 1
        %s133 = smul.addr %s132, 18
        %s134 = smul.addr %s133, 8
        %s135 = scalar_lea.vmem %s0, %s134
      $region28: #{random_projection_forward.4} parent=23 // pred_fallthru
        _
    $region24: #{random_projection_forward.4} parent=5 // pred_fallthru
      _
    %p136 = scmp.le.s32.totalorder 1, %s9
    %p137 = scmp.lt.s32.totalorder %s9, 3
    %p138 = pnand %p136, %p137
    %p139 = pneg %p138
    // Predicated region
    $region29: #{random_projection_forward.4} parent=5 // pred_check
      _
    $region30: #{random_projection_forward.4} parent=5 // pred_check_branch
      %141 = sbr.rel (%p138) target = $region32
    $region31: #{random_projection_forward.4} parent=5 // pred_region
      %s142 = ssub.s32 %s9, 1
      %p143 = scmp.lt.s32.totalorder %s14, 1
      %s144 = scalar_select %p143, %s14, 1
      %s145 = smul.addr %s144, 18
      %s146 = smul.addr %s145, 8
      %s147 = scalar_lea.vmem %s0, %s146
      %p148 = pneg %p35
      %p149 = pneg %p32
      %p150 = pneg %p56
      %p151 = pneg %p53
      %p152 = pneg %p77
      %p153 = pneg %p74
      %p154 = pneg %p103
      %p155 = pneg %p100
      %p156 = scmp.lt.s32.totalorder %s14, 1
      %s157 = scalar_select %p156, %s14, 1
      %s158 = smul.addr %s157, 16
      %s159 = smul.addr %s158, 8
      %s160 = scalar_lea.vmem %s3, %s159
      %p161 = scmp.lt.s32.totalorder %s14, 1
      %s162 = scalar_select %p161, %s14, 1
      %s163 = smul.addr %s162, 18
      %s164 = smul.addr %s163, 8
      %s165 = scalar_lea.vmem %s0, %s164
      %p166 = scmp.lt.s32.totalorder %s14, 1
      %s167 = scalar_select %p166, %s14, 1
      %s168 = smul.addr %s167, 16
      %s169 = smul.addr %s168, 8
      %s170 = scalar_lea.vmem %s3, %s169
      %v171 = vld [vmem:[%s2] sm:$0x1]
      %v172 = vld [vmem:[%s165] sm:$0xff]
      %v173 = vld [vmem:[%s165 + $0x8] sm:$0xff]
      %v174 = vld [vmem:[%s165 + $0x10] sm:$0xff]
      %v175 = vld [vmem:[%s165 + $0x18] sm:$0xff]
      %v176 = vld [vmem:[%s165 + $0x20] sm:$0xff]
      %v177 = vld [vmem:[%s165 + $0x28] sm:$0xff]
      %v178 = vld [vmem:[%s165 + $0x30] sm:$0xff]
      %v179 = vld [vmem:[%s165 + $0x38] sm:$0xff]
      %v180 = vld [vmem:[%s165 + $0x40] sm:$0xff]
      %v181 = vld [vmem:[%s165 + $0x48] sm:$0xff]
      %v182 = vld [vmem:[%s165 + $0x50] sm:$0xff]
      %v183 = vld [vmem:[%s165 + $0x58] sm:$0xff]
      %v184 = vld [vmem:[%s165 + $0x60] sm:$0xff]
      %v185 = vld [vmem:[%s165 + $0x68] sm:$0xff]
      %v186 = vld [vmem:[%s165 + $0x70] sm:$0xff]
      %v187 = vld [vmem:[%s165 + $0x78] sm:$0xff]
      %s188 = scalar_lea.vmem %s165, 16
      %v189 = vld [vmem:[%s188] sm:$0xff]
      %v190 = vld [vmem:[%s188 + $0x8] sm:$0xff]
      %v191 = vld [vmem:[%s188 + $0x10] sm:$0xff]
      %v192 = vld [vmem:[%s188 + $0x18] sm:$0xff]
      %v193 = vld [vmem:[%s188 + $0x20] sm:$0xff]
      %v194 = vld [vmem:[%s188 + $0x28] sm:$0xff]
      %v195 = vld [vmem:[%s188 + $0x30] sm:$0xff]
      %v196 = vld [vmem:[%s188 + $0x38] sm:$0xff]
      %v197 = vld [vmem:[%s188 + $0x40] sm:$0xff]
      %v198 = vld [vmem:[%s188 + $0x48] sm:$0xff]
      %v199 = vld [vmem:[%s188 + $0x50] sm:$0xff]
      %v200 = vld [vmem:[%s188 + $0x58] sm:$0xff]
      %v201 = vld [vmem:[%s188 + $0x60] sm:$0xff]
      %v202 = vld [vmem:[%s188 + $0x68] sm:$0xff]
      %v203 = vld [vmem:[%s188 + $0x70] sm:$0xff]
      %v204 = vld [vmem:[%s188 + $0x78] sm:$0xff]
      %v205 = vld [vmem:[%s1] sm:$0xff]
      %v206 = vld [vmem:[%s1 + $0x8] sm:$0xff]
      %v207 = vld [vmem:[%s1 + $0x10] sm:$0xff]
      %v208 = vld [vmem:[%s1 + $0x18] sm:$0xff]
      %v209 = vld [vmem:[%s1 + $0x20] sm:$0xff]
      %v210 = vld [vmem:[%s1 + $0x28] sm:$0xff]
      %v211 = vld [vmem:[%s1 + $0x30] sm:$0xff]
      %v212 = vld [vmem:[%s1 + $0x38] sm:$0xff]
      %v213 = vld [vmem:[%s1 + $0x40] sm:$0xff]
      %v214 = vld [vmem:[%s1 + $0x48] sm:$0xff]
      %v215 = vld [vmem:[%s1 + $0x50] sm:$0xff]
      %v216 = vld [vmem:[%s1 + $0x58] sm:$0xff]
      %v217 = vld [vmem:[%s1 + $0x60] sm:$0xff]
      %v218 = vld [vmem:[%s1 + $0x68] sm:$0xff]
      %v219 = vld [vmem:[%s1 + $0x70] sm:$0xff]
      %v220 = vld [vmem:[%s1 + $0x78] sm:$0xff]
      %s221 = scalar_lea.vmem %s1, 256
      %v222 = vld [vmem:[%s221] sm:$0xff]
      %v223 = vld [vmem:[%s221 + $0x8] sm:$0xff]
      %v224 = vld [vmem:[%s221 + $0x10] sm:$0xff]
      %v225 = vld [vmem:[%s221 + $0x18] sm:$0xff]
      %v226 = vld [vmem:[%s221 + $0x20] sm:$0xff]
      %v227 = vld [vmem:[%s221 + $0x28] sm:$0xff]
      %v228 = vld [vmem:[%s221 + $0x30] sm:$0xff]
      %v229 = vld [vmem:[%s221 + $0x38] sm:$0xff]
      %v230 = vld [vmem:[%s221 + $0x40] sm:$0xff]
      %v231 = vld [vmem:[%s221 + $0x48] sm:$0xff]
      %v232 = vld [vmem:[%s221 + $0x50] sm:$0xff]
      %v233 = vld [vmem:[%s221 + $0x58] sm:$0xff]
      %v234 = vld [vmem:[%s221 + $0x60] sm:$0xff]
      %v235 = vld [vmem:[%s221 + $0x68] sm:$0xff]
      %v236 = vld [vmem:[%s221 + $0x70] sm:$0xff]
      %v237 = vld [vmem:[%s221 + $0x78] sm:$0xff]
      %238 = vmatprep.subr.mxu0 0.0
      %239 = vmatpush1.msra.mxu0 %v222
      %240 = vmatprep.subr.mxu0 0.0
      %241 = vmatpush1.msra.mxu0 %v223
      %242 = vmatprep.subr.mxu0 0.0
      %243 = vmatpush1.msra.mxu0 %v224
      %244 = vmatprep.subr.mxu0 0.0
      %245 = vmatpush1.msra.mxu0 %v225
      %246 = vmatprep.subr.mxu0 0.0
      %247 = vmatpush1.msra.mxu0 %v226
      %248 = vmatprep.subr.mxu0 0.0
      %249 = vmatpush1.msra.mxu0 %v227
      %250 = vmatprep.subr.mxu0 0.0
      %251 = vmatpush1.msra.mxu0 %v228
      %252 = vmatprep.subr.mxu0 0.0
      %253 = vmatpush1.msra.mxu0 %v229
      %254 = vmatprep.subr.mxu0 0.0
      %255 = vmatpush1.msra.mxu0 %v230
      %256 = vmatprep.subr.mxu0 0.0
      %257 = vmatpush1.msra.mxu0 %v231
      %258 = vmatprep.subr.mxu0 0.0
      %259 = vmatpush1.msra.mxu0 %v232
      %260 = vmatprep.subr.mxu0 0.0
      %261 = vmatpush1.msra.mxu0 %v233
      %262 = vmatprep.subr.mxu0 0.0
      %263 = vmatpush1.msra.mxu0 %v234
      %264 = vmatprep.subr.mxu0 0.0
      %265 = vmatpush1.msra.mxu0 %v235
      %266 = vmatprep.subr.mxu0 0.0
      %267 = vmatpush1.msra.mxu0 %v236
      %268 = vmatprep.subr.mxu0 0.0
      %269 = vmatpush1.msra.mxu0 %v237
      %270 = vmatprep.subr.mxu0 0.0
      %271 = vmatpush1.msra.mxu0 0.0
      %272 = vmatprep.subr.mxu0 0.0
      %273 = vmatpush1.msra.mxu0 0.0
      %274 = vmatprep.subr.mxu0 0.0
      %275 = vmatpush1.msra.mxu0 0.0
      %276 = vmatprep.subr.mxu0 0.0
      %277 = vmatpush1.msra.mxu0 0.0
      %278 = vmatprep.subr.mxu0 0.0
      %279 = vmatpush1.msra.mxu0 0.0
      %280 = vmatprep.subr.mxu0 0.0
      %281 = vmatpush1.msra.mxu0 0.0
      %282 = vmatprep.subr.mxu0 0.0
      %283 = vmatpush1.msra.mxu0 0.0
      %284 = vmatprep.subr.mxu0 0.0
      %285 = vmatpush1.msra.mxu0 0.0
      %286 = vmatprep.subr.mxu0 0.0
      %287 = vmatpush1.msra.mxu0 0.0
      %288 = vmatprep.subr.mxu0 0.0
      %289 = vmatpush1.msra.mxu0 0.0
      %290 = vmatprep.subr.mxu0 0.0
      %291 = vmatpush1.msra.mxu0 0.0
      %292 = vmatprep.subr.mxu0 0.0
      %293 = vmatpush1.msra.mxu0 0.0
      %294 = vmatprep.subr.mxu0 0.0
      %295 = vmatpush1.msra.mxu0 0.0
      %296 = vmatprep.subr.mxu0 0.0
      %297 = vmatpush1.msra.mxu0 0.0
      %298 = vmatprep.subr.mxu0 0.0
      %299 = vmatpush1.msra.mxu0 0.0
      %300 = vmatprep.subr.mxu0 0.0
      %301 = vmatpush1.msra.mxu0 0.0
      %302 = vmatprep.mubr.f32.mxu0 0.0
      %303 = vmatmul.mubr.f32.gmra.mrb[0].mxu0 %v189
      %v304 = vpop.f32.mrb[0].mxu0
      %v305 = vadd.f32 0.0, %v304
      %v306 = vpop.f32.mrb[0].mxu0
      %307 = vmatprep.mubr.f32.mxu0 0.0
      %308 = vmatmul.mubr.f32.gmra.mrb[0].mxu0 %v190
      %v309 = vpop.f32.mrb[0].mxu0
      %v310 = vadd.f32 0.0, %v309
      %v311 = vpop.f32.mrb[0].mxu0
      %312 = vmatprep.mubr.f32.mxu0 0.0
      %313 = vmatmul.mubr.f32.gmra.mrb[0].mxu0 %v191
      %v314 = vpop.f32.mrb[0].mxu0
      %v315 = vadd.f32 0.0, %v314
      %v316 = vpop.f32.mrb[0].mxu0
      %317 = vmatprep.mubr.f32.mxu0 0.0
      %318 = vmatmul.mubr.f32.gmra.mrb[0].mxu0 %v192
      %v319 = vpop.f32.mrb[0].mxu0
      %v320 = vadd.f32 0.0, %v319
      %v321 = vpop.f32.mrb[0].mxu0
      %322 = vmatprep.mubr.f32.mxu0 0.0
      %323 = vmatmul.mubr.f32.gmra.mrb[0].mxu0 %v193
      %v324 = vpop.f32.mrb[0].mxu0
      %v325 = vadd.f32 0.0, %v324
      %v326 = vpop.f32.mrb[0].mxu0
      %327 = vmatprep.mubr.f32.mxu0 0.0
      %328 = vmatmul.mubr.f32.gmra.mrb[0].mxu0 %v194
      %v329 = vpop.f32.mrb[0].mxu0
      %v330 = vadd.f32 0.0, %v329
      %v331 = vpop.f32.mrb[0].mxu0
      %332 = vmatprep.mubr.f32.mxu0 0.0
      %333 = vmatmul.mubr.f32.gmra.mrb[0].mxu0 %v195
      %v334 = vpop.f32.mrb[0].mxu0
      %v335 = vadd.f32 0.0, %v334
      %v336 = vpop.f32.mrb[0].mxu0
      %337 = vmatprep.mubr.f32.mxu0 0.0
      %338 = vmatmul.mubr.f32.gmra.mrb[0].mxu0 %v196
      %v339 = vpop.f32.mrb[0].mxu0
      %v340 = vadd.f32 0.0, %v339
      %v341 = vpop.f32.mrb[0].mxu0
      %342 = vmatprep.mubr.f32.mxu0 0.0
      %343 = vmatmul.mubr.f32.gmra.mrb[0].mxu0 %v197
      %v344 = vpop.f32.mrb[0].mxu0
      %v345 = vadd.f32 0.0, %v344
      %v346 = vpop.f32.mrb[0].mxu0
      %347 = vmatprep.mubr.f32.mxu0 0.0
      %348 = vmatmul.mubr.f32.gmra.mrb[0].mxu0 %v198
      %v349 = vpop.f32.mrb[0].mxu0
      %v350 = vadd.f32 0.0, %v349
      %v351 = vpop.f32.mrb[0].mxu0
      %352 = vmatprep.mubr.f32.mxu0 0.0
      %353 = vmatmul.mubr.f32.gmra.mrb[0].mxu0 %v199
      %v354 = vpop.f32.mrb[0].mxu0
      %v355 = vadd.f32 0.0, %v354
      %v356 = vpop.f32.mrb[0].mxu0
      %357 = vmatprep.mubr.f32.mxu0 0.0
      %358 = vmatmul.mubr.f32.gmra.mrb[0].mxu0 %v200
      %v359 = vpop.f32.mrb[0].mxu0
      %v360 = vadd.f32 0.0, %v359
      %v361 = vpop.f32.mrb[0].mxu0
      %362 = vmatprep.mubr.f32.mxu0 0.0
      %363 = vmatmul.mubr.f32.gmra.mrb[0].mxu0 %v201
      %v364 = vpop.f32.mrb[0].mxu0
      %v365 = vadd.f32 0.0, %v364
      %v366 = vpop.f32.mrb[0].mxu0
      %367 = vmatprep.mubr.f32.mxu0 0.0
      %368 = vmatmul.mubr.f32.gmra.mrb[0].mxu0 %v202
      %v369 = vpop.f32.mrb[0].mxu0
      %v370 = vadd.f32 0.0, %v369
      %v371 = vpop.f32.mrb[0].mxu0
      %372 = vmatprep.mubr.f32.mxu0 0.0
      %373 = vmatmul.mubr.f32.gmra.mrb[0].mxu0 %v203
      %v374 = vpop.f32.mrb[0].mxu0
      %v375 = vadd.f32 0.0, %v374
      %v376 = vpop.f32.mrb[0].mxu0
      %377 = vmatprep.mubr.f32.mxu0 0.0
      %378 = vmatmul.mubr.f32.gmra.mrb[0].mxu0 %v204
      %v379 = vpop.f32.mrb[0].mxu0
      %v380 = vadd.f32 0.0, %v379
      %v381 = vpop.f32.mrb[0].mxu0
      %382 = vdwg.mxu0
      %383 = vmatprep.subr.mxu0 0.0
      %384 = vmatpush1.msra.mxu0 %v205
      %385 = vmatprep.subr.mxu0 0.0
      %386 = vmatpush1.msra.mxu0 %v206
      %387 = vmatprep.subr.mxu0 0.0
      %388 = vmatpush1.msra.mxu0 %v207
      %389 = vmatprep.subr.mxu0 0.0
      %390 = vmatpush1.msra.mxu0 %v208
      %391 = vmatprep.subr.mxu0 0.0
      %392 = vmatpush1.msra.mxu0 %v209
      %393 = vmatprep.subr.mxu0 0.0
      %394 = vmatpush1.msra.mxu0 %v210
      %395 = vmatprep.subr.mxu0 0.0
      %396 = vmatpush1.msra.mxu0 %v211
      %397 = vmatprep.subr.mxu0 0.0
      %398 = vmatpush1.msra.mxu0 %v212
      %399 = vmatprep.subr.mxu0 0.0
      %400 = vmatpush1.msra.mxu0 %v213
      %401 = vmatprep.subr.mxu0 0.0
      %402 = vmatpush1.msra.mxu0 %v214
      %403 = vmatprep.subr.mxu0 0.0
      %404 = vmatpush1.msra.mxu0 %v215
      %405 = vmatprep.subr.mxu0 0.0
      %406 = vmatpush1.msra.mxu0 %v216
      %407 = vmatprep.subr.mxu0 0.0
      %408 = vmatpush1.msra.mxu0 %v217
      %409 = vmatprep.subr.mxu0 0.0
      %410 = vmatpush1.msra.mxu0 %v218
      %411 = vmatprep.subr.mxu0 0.0
      %412 = vmatpush1.msra.mxu0 %v219
      %413 = vmatprep.subr.mxu0 0.0
      %414 = vmatpush1.msra.mxu0 %v220
      %415 = vmatprep.subr.mxu0 0.0
      %416 = vmatpush1.msra.mxu0 0.0
      %417 = vmatprep.subr.mxu0 0.0
      %418 = vmatpush1.msra.mxu0 0.0
      %419 = vmatprep.subr.mxu0 0.0
      %420 = vmatpush1.msra.mxu0 0.0
      %421 = vmatprep.subr.mxu0 0.0
      %422 = vmatpush1.msra.mxu0 0.0
      %423 = vmatprep.subr.mxu0 0.0
      %424 = vmatpush1.msra.mxu0 0.0
      %425 = vmatprep.subr.mxu0 0.0
      %426 = vmatpush1.msra.mxu0 0.0
      %427 = vmatprep.subr.mxu0 0.0
      %428 = vmatpush1.msra.mxu0 0.0
      %429 = vmatprep.subr.mxu0 0.0
      %430 = vmatpush1.msra.mxu0 0.0
      %431 = vmatprep.subr.mxu0 0.0
      %432 = vmatpush1.msra.mxu0 0.0
      %433 = vmatprep.subr.mxu0 0.0
      %434 = vmatpush1.msra.mxu0 0.0
      %435 = vmatprep.subr.mxu0 0.0
      %436 = vmatpush1.msra.mxu0 0.0
      %437 = vmatprep.subr.mxu0 0.0
      %438 = vmatpush1.msra.mxu0 0.0
      %439 = vmatprep.subr.mxu0 0.0
      %440 = vmatpush1.msra.mxu0 0.0
      %441 = vmatprep.subr.mxu0 0.0
      %442 = vmatpush1.msra.mxu0 0.0
      %443 = vmatprep.subr.mxu0 0.0
      %444 = vmatpush1.msra.mxu0 0.0
      %445 = vmatprep.subr.mxu0 0.0
      %446 = vmatpush1.msra.mxu0 0.0
      %447 = vmatprep.mubr.f32.mxu0 0.0
      %448 = vmatmul.mubr.f32.gmra.mrb[0].mxu0 %v172
      %v449 = vpop.f32.mrb[0].mxu0
      %v450 = vadd.f32 %v305, %v449
      %v451 = vpop.f32.mrb[0].mxu0
      %452 = vmatprep.mubr.f32.mxu0 0.0
      %453 = vmatmul.mubr.f32.gmra.mrb[0].mxu0 %v173
      %v454 = vpop.f32.mrb[0].mxu0
      %v455 = vadd.f32 %v310, %v454
      %v456 = vpop.f32.mrb[0].mxu0
      %457 = vmatprep.mubr.f32.mxu0 0.0
      %458 = vmatmul.mubr.f32.gmra.mrb[0].mxu0 %v174
      %v459 = vpop.f32.mrb[0].mxu0
      %v460 = vadd.f32 %v315, %v459
      %v461 = vpop.f32.mrb[0].mxu0
      %462 = vmatprep.mubr.f32.mxu0 0.0
      %463 = vmatmul.mubr.f32.gmra.mrb[0].mxu0 %v175
      %v464 = vpop.f32.mrb[0].mxu0
      %v465 = vadd.f32 %v320, %v464
      %v466 = vpop.f32.mrb[0].mxu0
      %467 = vmatprep.mubr.f32.mxu0 0.0
      %468 = vmatmul.mubr.f32.gmra.mrb[0].mxu0 %v176
      %v469 = vpop.f32.mrb[0].mxu0
      %v470 = vadd.f32 %v325, %v469
      %v471 = vpop.f32.mrb[0].mxu0
      %472 = vmatprep.mubr.f32.mxu0 0.0
      %473 = vmatmul.mubr.f32.gmra.mrb[0].mxu0 %v177
      %v474 = vpop.f32.mrb[0].mxu0
      %v475 = vadd.f32 %v330, %v474
      %v476 = vpop.f32.mrb[0].mxu0
      %477 = vmatprep.mubr.f32.mxu0 0.0
      %478 = vmatmul.mubr.f32.gmra.mrb[0].mxu0 %v178
      %v479 = vpop.f32.mrb[0].mxu0
      %v480 = vadd.f32 %v335, %v479
      %v481 = vpop.f32.mrb[0].mxu0
      %482 = vmatprep.mubr.f32.mxu0 0.0
      %483 = vmatmul.mubr.f32.gmra.mrb[0].mxu0 %v179
      %v484 = vpop.f32.mrb[0].mxu0
      %v485 = vadd.f32 %v340, %v484
      %v486 = vpop.f32.mrb[0].mxu0
      %487 = vmatprep.mubr.f32.mxu0 0.0
      %488 = vmatmul.mubr.f32.gmra.mrb[0].mxu0 %v180
      %v489 = vpop.f32.mrb[0].mxu0
      %v490 = vadd.f32 %v345, %v489
      %v491 = vpop.f32.mrb[0].mxu0
      %492 = vmatprep.mubr.f32.mxu0 0.0
      %493 = vmatmul.mubr.f32.gmra.mrb[0].mxu0 %v181
      %v494 = vpop.f32.mrb[0].mxu0
      %v495 = vadd.f32 %v350, %v494
      %v496 = vpop.f32.mrb[0].mxu0
      %497 = vmatprep.mubr.f32.mxu0 0.0
      %498 = vmatmul.mubr.f32.gmra.mrb[0].mxu0 %v182
      %v499 = vpop.f32.mrb[0].mxu0
      %v500 = vadd.f32 %v355, %v499
      %v501 = vpop.f32.mrb[0].mxu0
      %502 = vmatprep.mubr.f32.mxu0 0.0
      %503 = vmatmul.mubr.f32.gmra.mrb[0].mxu0 %v183
      %v504 = vpop.f32.mrb[0].mxu0
      %v505 = vadd.f32 %v360, %v504
      %v506 = vpop.f32.mrb[0].mxu0
      %507 = vmatprep.mubr.f32.mxu0 0.0
      %508 = vmatmul.mubr.f32.gmra.mrb[0].mxu0 %v184
      %v509 = vpop.f32.mrb[0].mxu0
      %v510 = vadd.f32 %v365, %v509
      %v511 = vpop.f32.mrb[0].mxu0
      %512 = vmatprep.mubr.f32.mxu0 0.0
      %513 = vmatmul.mubr.f32.gmra.mrb[0].mxu0 %v185
      %v514 = vpop.f32.mrb[0].mxu0
      %v515 = vadd.f32 %v370, %v514
      %v516 = vpop.f32.mrb[0].mxu0
      %517 = vmatprep.mubr.f32.mxu0 0.0
      %518 = vmatmul.mubr.f32.gmra.mrb[0].mxu0 %v186
      %v519 = vpop.f32.mrb[0].mxu0
      %v520 = vadd.f32 %v375, %v519
      %v521 = vpop.f32.mrb[0].mxu0
      %522 = vmatprep.mubr.f32.mxu0 0.0
      %523 = vmatmul.mubr.f32.gmra.mrb[0].mxu0 %v187
      %v524 = vpop.f32.mrb[0].mxu0
      %v525 = vadd.f32 %v380, %v524
      %v526 = vpop.f32.mrb[0].mxu0
      %527 = vdwg.mxu0
      %s528 = scalar_lea.vmem %s1, 128
      %v529 = vld [vmem:[%s528] sm:$0xff]
      %v530 = vld [vmem:[%s528 + $0x8] sm:$0xff]
      %v531 = vld [vmem:[%s528 + $0x10] sm:$0xff]
      %v532 = vld [vmem:[%s528 + $0x18] sm:$0xff]
      %v533 = vld [vmem:[%s528 + $0x20] sm:$0xff]
      %v534 = vld [vmem:[%s528 + $0x28] sm:$0xff]
      %v535 = vld [vmem:[%s528 + $0x30] sm:$0xff]
      %v536 = vld [vmem:[%s528 + $0x38] sm:$0xff]
      %v537 = vld [vmem:[%s528 + $0x40] sm:$0xff]
      %v538 = vld [vmem:[%s528 + $0x48] sm:$0xff]
      %v539 = vld [vmem:[%s528 + $0x50] sm:$0xff]
      %v540 = vld [vmem:[%s528 + $0x58] sm:$0xff]
      %v541 = vld [vmem:[%s528 + $0x60] sm:$0xff]
      %v542 = vld [vmem:[%s528 + $0x68] sm:$0xff]
      %v543 = vld [vmem:[%s528 + $0x70] sm:$0xff]
      %v544 = vld [vmem:[%s528 + $0x78] sm:$0xff]
      %s545 = scalar_lea.vmem %s1, 384
      %v546 = vld [vmem:[%s545] sm:$0xff]
      %v547 = vld [vmem:[%s545 + $0x8] sm:$0xff]
      %v548 = vld [vmem:[%s545 + $0x10] sm:$0xff]
      %v549 = vld [vmem:[%s545 + $0x18] sm:$0xff]
      %v550 = vld [vmem:[%s545 + $0x20] sm:$0xff]
      %v551 = vld [vmem:[%s545 + $0x28] sm:$0xff]
      %v552 = vld [vmem:[%s545 + $0x30] sm:$0xff]
      %v553 = vld [vmem:[%s545 + $0x38] sm:$0xff]
      %v554 = vld [vmem:[%s545 + $0x40] sm:$0xff]
      %v555 = vld [vmem:[%s545 + $0x48] sm:$0xff]
      %v556 = vld [vmem:[%s545 + $0x50] sm:$0xff]
      %v557 = vld [vmem:[%s545 + $0x58] sm:$0xff]
      %v558 = vld [vmem:[%s545 + $0x60] sm:$0xff]
      %v559 = vld [vmem:[%s545 + $0x68] sm:$0xff]
      %v560 = vld [vmem:[%s545 + $0x70] sm:$0xff]
      %v561 = vld [vmem:[%s545 + $0x78] sm:$0xff]
      %562 = vmatprep.subr.mxu0 0.0
      %563 = vmatpush1.msra.mxu0 %v546
      %564 = vmatprep.subr.mxu0 0.0
      %565 = vmatpush1.msra.mxu0 %v547
      %566 = vmatprep.subr.mxu0 0.0
      %567 = vmatpush1.msra.mxu0 %v548
      %568 = vmatprep.subr.mxu0 0.0
      %569 = vmatpush1.msra.mxu0 %v549
      %570 = vmatprep.subr.mxu0 0.0
      %571 = vmatpush1.msra.mxu0 %v550
      %572 = vmatprep.subr.mxu0 0.0
      %573 = vmatpush1.msra.mxu0 %v551
      %574 = vmatprep.subr.mxu0 0.0
      %575 = vmatpush1.msra.mxu0 %v552
      %576 = vmatprep.subr.mxu0 0.0
      %577 = vmatpush1.msra.mxu0 %v553
      %578 = vmatprep.subr.mxu0 0.0
      %579 = vmatpush1.msra.mxu0 %v554
      %580 = vmatprep.subr.mxu0 0.0
      %581 = vmatpush1.msra.mxu0 %v555
      %582 = vmatprep.subr.mxu0 0.0
      %583 = vmatpush1.msra.mxu0 %v556
      %584 = vmatprep.subr.mxu0 0.0
      %585 = vmatpush1.msra.mxu0 %v557
      %586 = vmatprep.subr.mxu0 0.0
      %587 = vmatpush1.msra.mxu0 %v558
      %588 = vmatprep.subr.mxu0 0.0
      %589 = vmatpush1.msra.mxu0 %v559
      %590 = vmatprep.subr.mxu0 0.0
      %591 = vmatpush1.msra.mxu0 %v560
      %592 = vmatprep.subr.mxu0 0.0
      %593 = vmatpush1.msra.mxu0 %v561
      %594 = vmatprep.subr.mxu0 0.0
      %595 = vmatpush1.msra.mxu0 0.0
      %596 = vmatprep.subr.mxu0 0.0
      %597 = vmatpush1.msra.mxu0 0.0
      %598 = vmatprep.subr.mxu0 0.0
      %599 = vmatpush1.msra.mxu0 0.0
      %600 = vmatprep.subr.mxu0 0.0
      %601 = vmatpush1.msra.mxu0 0.0
      %602 = vmatprep.subr.mxu0 0.0
      %603 = vmatpush1.msra.mxu0 0.0
      %604 = vmatprep.subr.mxu0 0.0
      %605 = vmatpush1.msra.mxu0 0.0
      %606 = vmatprep.subr.mxu0 0.0
      %607 = vmatpush1.msra.mxu0 0.0
      %608 = vmatprep.subr.mxu0 0.0
      %609 = vmatpush1.msra.mxu0 0.0
      %610 = vmatprep.subr.mxu0 0.0
      %611 = vmatpush1.msra.mxu0 0.0
      %612 = vmatprep.subr.mxu0 0.0
      %613 = vmatpush1.msra.mxu0 0.0
      %614 = vmatprep.subr.mxu0 0.0
      %615 = vmatpush1.msra.mxu0 0.0
      %616 = vmatprep.subr.mxu0 0.0
      %617 = vmatpush1.msra.mxu0 0.0
      %618 = vmatprep.subr.mxu0 0.0
      %619 = vmatpush1.msra.mxu0 0.0
      %620 = vmatprep.subr.mxu0 0.0
      %621 = vmatpush1.msra.mxu0 0.0
      %622 = vmatprep.subr.mxu0 0.0
      %623 = vmatpush1.msra.mxu0 0.0
      %624 = vmatprep.subr.mxu0 0.0
      %625 = vmatpush1.msra.mxu0 0.0
      %626 = vmatprep.mubr.f32.mxu0 0.0
      %627 = vmatmul.mubr.f32.gmra.mrb[0].mxu0 %v189
      %v628 = vpop.f32.mrb[0].mxu0
      %v629 = vadd.f32 0.0, %v628
      %v630 = vpop.f32.mrb[0].mxu0
      %631 = vmatprep.mubr.f32.mxu0 0.0
      %632 = vmatmul.mubr.f32.gmra.mrb[0].mxu0 %v190
      %v633 = vpop.f32.mrb[0].mxu0
      %v634 = vadd.f32 0.0, %v633
      %v635 = vpop.f32.mrb[0].mxu0
      %636 = vmatprep.mubr.f32.mxu0 0.0
      %637 = vmatmul.mubr.f32.gmra.mrb[0].mxu0 %v191
      %v638 = vpop.f32.mrb[0].mxu0
      %v639 = vadd.f32 0.0, %v638
      %v640 = vpop.f32.mrb[0].mxu0
      %641 = vmatprep.mubr.f32.mxu0 0.0
      %642 = vmatmul.mubr.f32.gmra.mrb[0].mxu0 %v192
      %v643 = vpop.f32.mrb[0].mxu0
      %v644 = vadd.f32 0.0, %v643
      %v645 = vpop.f32.mrb[0].mxu0
      %646 = vmatprep.mubr.f32.mxu0 0.0
      %647 = vmatmul.mubr.f32.gmra.mrb[0].mxu0 %v193
      %v648 = vpop.f32.mrb[0].mxu0
      %v649 = vadd.f32 0.0, %v648
      %v650 = vpop.f32.mrb[0].mxu0
      %651 = vmatprep.mubr.f32.mxu0 0.0
      %652 = vmatmul.mubr.f32.gmra.mrb[0].mxu0 %v194
      %v653 = vpop.f32.mrb[0].mxu0
      %v654 = vadd.f32 0.0, %v653
      %v655 = vpop.f32.mrb[0].mxu0
      %656 = vmatprep.mubr.f32.mxu0 0.0
      %657 = vmatmul.mubr.f32.gmra.mrb[0].mxu0 %v195
      %v658 = vpop.f32.mrb[0].mxu0
      %v659 = vadd.f32 0.0, %v658
      %v660 = vpop.f32.mrb[0].mxu0
      %661 = vmatprep.mubr.f32.mxu0 0.0
      %662 = vmatmul.mubr.f32.gmra.mrb[0].mxu0 %v196
      %v663 = vpop.f32.mrb[0].mxu0
      %v664 = vadd.f32 0.0, %v663
      %v665 = vpop.f32.mrb[0].mxu0
      %666 = vmatprep.mubr.f32.mxu0 0.0
      %667 = vmatmul.mubr.f32.gmra.mrb[0].mxu0 %v197
      %v668 = vpop.f32.mrb[0].mxu0
      %v669 = vadd.f32 0.0, %v668
      %v670 = vpop.f32.mrb[0].mxu0
      %671 = vmatprep.mubr.f32.mxu0 0.0
      %672 = vmatmul.mubr.f32.gmra.mrb[0].mxu0 %v198
      %v673 = vpop.f32.mrb[0].mxu0
      %v674 = vadd.f32 0.0, %v673
      %v675 = vpop.f32.mrb[0].mxu0
      %676 = vmatprep.mubr.f32.mxu0 0.0
      %677 = vmatmul.mubr.f32.gmra.mrb[0].mxu0 %v199
      %v678 = vpop.f32.mrb[0].mxu0
      %v679 = vadd.f32 0.0, %v678
      %v680 = vpop.f32.mrb[0].mxu0
      %681 = vmatprep.mubr.f32.mxu0 0.0
      %682 = vmatmul.mubr.f32.gmra.mrb[0].mxu0 %v200
      %v683 = vpop.f32.mrb[0].mxu0
      %v684 = vadd.f32 0.0, %v683
      %v685 = vpop.f32.mrb[0].mxu0
      %686 = vmatprep.mubr.f32.mxu0 0.0
      %687 = vmatmul.mubr.f32.gmra.mrb[0].mxu0 %v201
      %v688 = vpop.f32.mrb[0].mxu0
      %v689 = vadd.f32 0.0, %v688
      %v690 = vpop.f32.mrb[0].mxu0
      %691 = vmatprep.mubr.f32.mxu0 0.0
      %692 = vmatmul.mubr.f32.gmra.mrb[0].mxu0 %v202
      %v693 = vpop.f32.mrb[0].mxu0
      %v694 = vadd.f32 0.0, %v693
      %v695 = vpop.f32.mrb[0].mxu0
      %696 = vmatprep.mubr.f32.mxu0 0.0
      %697 = vmatmul.mubr.f32.gmra.mrb[0].mxu0 %v203
      %v698 = vpop.f32.mrb[0].mxu0
      %v699 = vadd.f32 0.0, %v698
      %v700 = vpop.f32.mrb[0].mxu0
      %701 = vmatprep.mubr.f32.mxu0 0.0
      %702 = vmatmul.mubr.f32.gmra.mrb[0].mxu0 %v204
      %v703 = vpop.f32.mrb[0].mxu0
      %v704 = vadd.f32 0.0, %v703
      %v705 = vpop.f32.mrb[0].mxu0
      %706 = vdwg.mxu0
      %707 = vmatprep.subr.mxu0 0.0
      %708 = vmatpush1.msra.mxu0 %v529
      %709 = vmatprep.subr.mxu0 0.0
      %710 = vmatpush1.msra.mxu0 %v530
      %711 = vmatprep.subr.mxu0 0.0
      %712 = vmatpush1.msra.mxu0 %v531
      %713 = vmatprep.subr.mxu0 0.0
      %714 = vmatpush1.msra.mxu0 %v532
      %715 = vmatprep.subr.mxu0 0.0
      %716 = vmatpush1.msra.mxu0 %v533
      %717 = vmatprep.subr.mxu0 0.0
      %718 = vmatpush1.msra.mxu0 %v534
      %719 = vmatprep.subr.mxu0 0.0
      %720 = vmatpush1.msra.mxu0 %v535
      %721 = vmatprep.subr.mxu0 0.0
      %722 = vmatpush1.msra.mxu0 %v536
      %723 = vmatprep.subr.mxu0 0.0
      %724 = vmatpush1.msra.mxu0 %v537
      %725 = vmatprep.subr.mxu0 0.0
      %726 = vmatpush1.msra.mxu0 %v538
      %727 = vmatprep.subr.mxu0 0.0
      %728 = vmatpush1.msra.mxu0 %v539
      %729 = vmatprep.subr.mxu0 0.0
      %730 = vmatpush1.msra.mxu0 %v540
      %731 = vmatprep.subr.mxu0 0.0
      %732 = vmatpush1.msra.mxu0 %v541
      %733 = vmatprep.subr.mxu0 0.0
      %734 = vmatpush1.msra.mxu0 %v542
      %735 = vmatprep.subr.mxu0 0.0
      %736 = vmatpush1.msra.mxu0 %v543
      %737 = vmatprep.subr.mxu0 0.0
      %738 = vmatpush1.msra.mxu0 %v544
      %739 = vmatprep.subr.mxu0 0.0
      %740 = vmatpush1.msra.mxu0 0.0
      %741 = vmatprep.subr.mxu0 0.0
      %742 = vmatpush1.msra.mxu0 0.0
      %743 = vmatprep.subr.mxu0 0.0
      %744 = vmatpush1.msra.mxu0 0.0
      %745 = vmatprep.subr.mxu0 0.0
      %746 = vmatpush1.msra.mxu0 0.0
      %747 = vmatprep.subr.mxu0 0.0
      %748 = vmatpush1.msra.mxu0 0.0
      %749 = vmatprep.subr.mxu0 0.0
      %750 = vmatpush1.msra.mxu0 0.0
      %751 = vmatprep.subr.mxu0 0.0
      %752 = vmatpush1.msra.mxu0 0.0
      %753 = vmatprep.subr.mxu0 0.0
      %754 = vmatpush1.msra.mxu0 0.0
      %755 = vmatprep.subr.mxu0 0.0
      %756 = vmatpush1.msra.mxu0 0.0
      %757 = vmatprep.subr.mxu0 0.0
      %758 = vmatpush1.msra.mxu0 0.0
      %759 = vmatprep.subr.mxu0 0.0
      %760 = vmatpush1.msra.mxu0 0.0
      %761 = vmatprep.subr.mxu0 0.0
      %762 = vmatpush1.msra.mxu0 0.0
      %763 = vmatprep.subr.mxu0 0.0
      %764 = vmatpush1.msra.mxu0 0.0
      %765 = vmatprep.subr.mxu0 0.0
      %766 = vmatpush1.msra.mxu0 0.0
      %767 = vmatprep.subr.mxu0 0.0
      %768 = vmatpush1.msra.mxu0 0.0
      %769 = vmatprep.subr.mxu0 0.0
      %770 = vmatpush1.msra.mxu0 0.0
      %771 = vmatprep.mubr.f32.mxu0 0.0
      %772 = vmatmul.mubr.f32.gmra.mrb[0].mxu0 %v172
      %v773 = vpop.f32.mrb[0].mxu0
      %v774 = vadd.f32 %v629, %v773
      %v775 = vpop.f32.mrb[0].mxu0
      %776 = vmatprep.mubr.f32.mxu0 0.0
      %777 = vmatmul.mubr.f32.gmra.mrb[0].mxu0 %v173
      %v778 = vpop.f32.mrb[0].mxu0
      %v779 = vadd.f32 %v634, %v778
      %v780 = vpop.f32.mrb[0].mxu0
      %781 = vmatprep.mubr.f32.mxu0 0.0
      %782 = vmatmul.mubr.f32.gmra.mrb[0].mxu0 %v174
      %v783 = vpop.f32.mrb[0].mxu0
      %v784 = vadd.f32 %v639, %v783
      %v785 = vpop.f32.mrb[0].mxu0
      %786 = vmatprep.mubr.f32.mxu0 0.0
      %787 = vmatmul.mubr.f32.gmra.mrb[0].mxu0 %v175
      %v788 = vpop.f32.mrb[0].mxu0
      %v789 = vadd.f32 %v644, %v788
      %v790 = vpop.f32.mrb[0].mxu0
      %791 = vmatprep.mubr.f32.mxu0 0.0
      %792 = vmatmul.mubr.f32.gmra.mrb[0].mxu0 %v176
      %v793 = vpop.f32.mrb[0].mxu0
      %v794 = vadd.f32 %v649, %v793
      %v795 = vpop.f32.mrb[0].mxu0
      %796 = vmatprep.mubr.f32.mxu0 0.0
      %797 = vmatmul.mubr.f32.gmra.mrb[0].mxu0 %v177
      %v798 = vpop.f32.mrb[0].mxu0
      %v799 = vadd.f32 %v654, %v798
      %v800 = vpop.f32.mrb[0].mxu0
      %801 = vmatprep.mubr.f32.mxu0 0.0
      %802 = vmatmul.mubr.f32.gmra.mrb[0].mxu0 %v178
      %v803 = vpop.f32.mrb[0].mxu0
      %v804 = vadd.f32 %v659, %v803
      %v805 = vpop.f32.mrb[0].mxu0
      %806 = vmatprep.mubr.f32.mxu0 0.0
      %807 = vmatmul.mubr.f32.gmra.mrb[0].mxu0 %v179
      %v808 = vpop.f32.mrb[0].mxu0
      %v809 = vadd.f32 %v664, %v808
      %v810 = vpop.f32.mrb[0].mxu0
      %811 = vmatprep.mubr.f32.mxu0 0.0
      %812 = vmatmul.mubr.f32.gmra.mrb[0].mxu0 %v180
      %v813 = vpop.f32.mrb[0].mxu0
      %v814 = vadd.f32 %v669, %v813
      %v815 = vpop.f32.mrb[0].mxu0
      %816 = vmatprep.mubr.f32.mxu0 0.0
      %817 = vmatmul.mubr.f32.gmra.mrb[0].mxu0 %v181
      %v818 = vpop.f32.mrb[0].mxu0
      %v819 = vadd.f32 %v674, %v818
      %v820 = vpop.f32.mrb[0].mxu0
      %821 = vmatprep.mubr.f32.mxu0 0.0
      %822 = vmatmul.mubr.f32.gmra.mrb[0].mxu0 %v182
      %v823 = vpop.f32.mrb[0].mxu0
      %v824 = vadd.f32 %v679, %v823
      %v825 = vpop.f32.mrb[0].mxu0
      %826 = vmatprep.mubr.f32.mxu0 0.0
      %827 = vmatmul.mubr.f32.gmra.mrb[0].mxu0 %v183
      %v828 = vpop.f32.mrb[0].mxu0
      %v829 = vadd.f32 %v684, %v828
      %v830 = vpop.f32.mrb[0].mxu0
      %831 = vmatprep.mubr.f32.mxu0 0.0
      %832 = vmatmul.mubr.f32.gmra.mrb[0].mxu0 %v184
      %v833 = vpop.f32.mrb[0].mxu0
      %v834 = vadd.f32 %v689, %v833
      %v835 = vpop.f32.mrb[0].mxu0
      %836 = vmatprep.mubr.f32.mxu0 0.0
      %837 = vmatmul.mubr.f32.gmra.mrb[0].mxu0 %v185
      %v838 = vpop.f32.mrb[0].mxu0
      %v839 = vadd.f32 %v694, %v838
      %v840 = vpop.f32.mrb[0].mxu0
      %841 = vmatprep.mubr.f32.mxu0 0.0
      %842 = vmatmul.mubr.f32.gmra.mrb[0].mxu0 %v186
      %v843 = vpop.f32.mrb[0].mxu0
      %v844 = vadd.f32 %v699, %v843
      %v845 = vpop.f32.mrb[0].mxu0
      %846 = vmatprep.mubr.f32.mxu0 0.0
      %847 = vmatmul.mubr.f32.gmra.mrb[0].mxu0 %v187
      %v848 = vpop.f32.mrb[0].mxu0
      %v849 = vadd.f32 %v704, %v848
      %v850 = vpop.f32.mrb[0].mxu0
      %851 = vdwg.mxu0
      %v852 = vrot.slane %v774, 1
      %v853 = vrot.slane %v779, 1
      %v854 = vrot.slane %v784, 1
      %v855 = vrot.slane %v789, 1
      %v856 = vrot.slane %v794, 1
      %v857 = vrot.slane %v799, 1
      %v858 = vrot.slane %v804, 1
      %v859 = vrot.slane %v809, 1
      %v860 = vrot.slane %v814, 1
      %v861 = vrot.slane %v819, 1
      %v862 = vrot.slane %v824, 1
      %v863 = vrot.slane %v829, 1
      %v864 = vrot.slane %v834, 1
      %v865 = vrot.slane %v839, 1
      %v866 = vrot.slane %v844, 1
      %v867 = vrot.slane %v849, 1
      %v868 = vlaneseq
      %v869 = vshrl.u32 %v868, 7
      %vm870 = vcmp.lt.s32.totalorder %v869, 7
      %v871 = vsel %vm870, %v866, %v867
      %v872 = vsel %vm870, %v865, %v866
      %v873 = vsel %vm870, %v864, %v865
      %v874 = vsel %vm870, %v863, %v864
      %v875 = vsel %vm870, %v862, %v863
      %v876 = vsel %vm870, %v861, %v862
      %v877 = vsel %vm870, %v860, %v861
      %v878 = vsel %vm870, %v859, %v860
      %v879 = vsel %vm870, %v858, %v859
      %v880 = vsel %vm870, %v857, %v858
      %v881 = vsel %vm870, %v856, %v857
      %v882 = vsel %vm870, %v855, %v856
      %v883 = vsel %vm870, %v854, %v855
      %v884 = vsel %vm870, %v853, %v854
      %v885 = vsel %vm870, %v852, %v853
      %v886 = vsel %vm870, %v867, %v852
      %v887 = vadd.f32 %v450, %v885
      %v888 = vadd.f32 %v455, %v884
      %v889 = vadd.f32 %v460, %v883
      %v890 = vadd.f32 %v465, %v882
      %v891 = vadd.f32 %v470, %v881
      %v892 = vadd.f32 %v475, %v880
      %v893 = vadd.f32 %v480, %v879
      %v894 = vadd.f32 %v485, %v878
      %v895 = vadd.f32 %v490, %v877
      %v896 = vadd.f32 %v495, %v876
      %v897 = vadd.f32 %v500, %v875
      %v898 = vadd.f32 %v505, %v874
      %v899 = vadd.f32 %v510, %v873
      %v900 = vadd.f32 %v515, %v872
      %v901 = vadd.f32 %v520, %v871
      %v902 = vadd.f32 %v525, %v886
      %v904 = vlaneseq
      %v905 = vshrl.u32 %v904, 7
      %v906 = vsub.s32 0, %v905
      %v907 = vrot.slane %v171, %v906
      %v909 = vadd.f32 %v887, %v907
      %v910 = vadd.f32 %v888, %v907
      %v911 = vadd.f32 %v889, %v907
      %v912 = vadd.f32 %v890, %v907
      %v913 = vadd.f32 %v891, %v907
      %v914 = vadd.f32 %v892, %v907
      %v915 = vadd.f32 %v893, %v907
      %v916 = vadd.f32 %v894, %v907
      %v917 = vadd.f32 %v895, %v907
      %v918 = vadd.f32 %v896, %v907
      %v919 = vadd.f32 %v897, %v907
      %v920 = vadd.f32 %v898, %v907
      %v921 = vadd.f32 %v899, %v907
      %v922 = vadd.f32 %v900, %v907
      %v923 = vadd.f32 %v901, %v907
      %v924 = vadd.f32 %v902, %v907
      %v925 = vmax.f32 %v909, 0.0
      %v926 = vmax.f32 %v910, 0.0
      %v927 = vmax.f32 %v911, 0.0
      %v928 = vmax.f32 %v912, 0.0
      %v929 = vmax.f32 %v913, 0.0
      %v930 = vmax.f32 %v914, 0.0
      %v931 = vmax.f32 %v915, 0.0
      %v932 = vmax.f32 %v916, 0.0
      %v933 = vmax.f32 %v917, 0.0
      %v934 = vmax.f32 %v918, 0.0
      %v935 = vmax.f32 %v919, 0.0
      %v936 = vmax.f32 %v920, 0.0
      %v937 = vmax.f32 %v921, 0.0
      %v938 = vmax.f32 %v922, 0.0
      %v939 = vmax.f32 %v923, 0.0
      %v940 = vmax.f32 %v924, 0.0
      %941 = vst [vmem:[%s170] sm:$0xff] %v925
      %942 = vst [vmem:[%s170 + $0x8] sm:$0xff] %v926
      %943 = vst [vmem:[%s170 + $0x10] sm:$0xff] %v927
      %944 = vst [vmem:[%s170 + $0x18] sm:$0xff] %v928
      %945 = vst [vmem:[%s170 + $0x20] sm:$0xff] %v929
      %946 = vst [vmem:[%s170 + $0x28] sm:$0xff] %v930
      %947 = vst [vmem:[%s170 + $0x30] sm:$0xff] %v931
      %948 = vst [vmem:[%s170 + $0x38] sm:$0xff] %v932
      %949 = vst [vmem:[%s170 + $0x40] sm:$0xff] %v933
      %950 = vst [vmem:[%s170 + $0x48] sm:$0xff] %v934
      %951 = vst [vmem:[%s170 + $0x50] sm:$0xff] %v935
      %952 = vst [vmem:[%s170 + $0x58] sm:$0xff] %v936
      %953 = vst [vmem:[%s170 + $0x60] sm:$0xff] %v937
      %954 = vst [vmem:[%s170 + $0x68] sm:$0xff] %v938
      %955 = vst [vmem:[%s170 + $0x70] sm:$0xff] %v939
      %956 = vst [vmem:[%s170 + $0x78] sm:$0xff] %v940
      %p957 = scmp.lt.s32.totalorder %s14, 1
      %s958 = scalar_select %p957, %s14, 1
      %s959 = smul.addr %s958, 16
      %s960 = smul.addr %s959, 8
      %s961 = scalar_lea.vmem %s3, %s960
      // Predicated region
      $region33: #{random_projection_forward.4} parent=31 // pred_check
        %p962 = pneg %p100
      $region34: #{random_projection_forward.4} parent=31 // pred_check_branch
        %964 = sbr.rel (%p962) target = $region36
      $region35: #{random_projection_forward.4} parent=31 // pred_region
        _
      $region36: #{random_projection_forward.4} parent=31 // pred_fallthru
        _
    $region32: #{random_projection_forward.4} parent=5 // pred_fallthru
      _
    %p965 = scmp.le.s32.totalorder 2, %s9
    // Predicated region
    $region37: #{random_projection_forward.4} parent=5 // pred_check
      %p966 = pneg %p965
    $region38: #{random_projection_forward.4} parent=5 // pred_check_branch
      %968 = sbr.rel (%p966) target = $region40
    $region39: #{random_projection_forward.4} parent=5 // pred_region
      %s969 = ssub.s32 %s9, 2
      // Predicated region
      $region41: #{random_projection_forward.4} parent=39 // pred_check
        %p970 = pneg %p106
      $region42: #{random_projection_forward.4} parent=39 // pred_check_branch
        %972 = sbr.rel (%p970) target = $region44
      $region43: #{random_projection_forward.4} parent=39 // pred_region
        %p973 = scmp.lt.s32.totalorder %s15, 1
        %s974 = scalar_select %p973, %s15, 1
        %s975 = smul.addr %s974, 16
        %s976 = smul.addr %s975, 8
        %s977 = scalar_lea.vmem %s3, %s976
      $region44: #{random_projection_forward.4} parent=39 // pred_fallthru
        _
    $region40: #{random_projection_forward.4} parent=5 // pred_fallthru
      _
  $region6: #{random_projection_forward.4} parent=0 // loop_footer
    %s13 = sadd.s32 1, %s9
  $region7: #{random_projection_forward.4} parent=0 // loop_footer_branch
    %8 = sbr.rel target = $region3
  $region8: #{random_projection_forward.4} parent=0 // loop_exit
    _

// kernel: random_projection_forward.5
$region0: #{random_projection_forward.5}
  #allocation0 [shape = 'u32[]', space=smem, size = 0x4, offset = 0x4, fixed_abs, tag = 'smem constant byte address 0x4 - core index']
  #allocation1 [shape = 'u32[144,128]{1,0:T(1,128)}', space=vmem, size = 0x12000, scoped, tag = 'internal scratch']
  %s0 = inlined_call_operand.vmem [shape: f32[2,5,8,128], index: 0, kind: input, shape index: {}]
  %s1 = inlined_call_operand.vmem [shape: f32[4,128,128], index: 1, kind: input, shape index: {}]
  %s2 = inlined_call_operand.vmem [shape: f32[1,128], index: 2, kind: input, shape index: {}]
  %s3 = inlined_call_operand.vmem [shape: f32[2,4,8,128], index: 3, kind: output, shape index: {}]
  %s4 = sld [smem:[#allocation0]]
  $region45: #{random_projection_forward.5} parent=0
    _
  %s6 = ssub.s32 1, %s4
  %s7 = scalar_select 0, %s6, %s4
  loop: start=0, step=1, limit=4
  $region2: #{random_projection_forward.5} parent=0 // loop_pre_header
    _
  $region3: #{random_projection_forward.5} parent=0 // loop_header
    %s9 = sphi 0, %s13
    %p10 = scmp.ge.s32.totalorder %s9, 4
    %s19 = sphi 0, %s21
    %s22 = sphi 0, %s19
    %s23 = sphi 0, %s22
    %s39 = sphi 0, %s23
    %s43 = sphi 0, %s43
    %s45 = sphi 0, %s43
    %s46 = sphi 0, %s45
    %s60 = sphi 0, %s46
    %s64 = sphi 0, %s64
    %s66 = sphi 0, %s64
    %s67 = sphi 0, %s66
    %s81 = sphi 0, %s67
    %s87 = sphi 0, %s89
    %s90 = sphi 0, %s87
    %s91 = sphi 0, %s90
    %s107 = sphi 0, %s91
  $region4: #{random_projection_forward.5} parent=0 // loop_header_branch
    %12 = sbr.rel (%p10) target = $region8
  $region5: #{random_projection_forward.5} parent=0 // loop_body
    %s14 = ssub.s32 %s9, 1
    %s15 = ssub.s32 %s9, 2
    %s16 = sadd.s32 %s9, 1
    %s17 = ssub.s32 %s9, %s16
    %p18 = scmp.eq.s32.totalorder %s17, 0
    %s20 = sadd.s32 %s19, 1
    %s21 = scalar_select %p18, %s19, %s20
    %p24 = pneg %p18
    %p25 = scmp.eq.s32.totalorder %s9, 1
    %p26 = por %p24, %p25
    %p27 = scmp.ne.s32.totalorder %s19, %s22
    %p28 = scmp.eq.s32.totalorder %s9, 0
    %p29 = por %p27, %p28
    %p30 = scmp.ne.s32.totalorder %s19, %s22
    %p31 = scmp.eq.s32.totalorder %s14, 1
    %p32 = por %p30, %p31
    %p33 = scmp.ne.s32.totalorder %s22, %s23
    %p34 = scmp.eq.s32.totalorder %s14, 0
    %p35 = por %p33, %p34
    %p36 = scmp.ne.s32.totalorder %s22, %s23
    %p37 = scmp.eq.s32.totalorder %s15, 1
    %p38 = por %p36, %p37
    %p40 = scmp.ne.s32.totalorder %s23, %s39
    %p41 = scmp.eq.s32.totalorder %s15, 0
    %p42 = por %p40, %p41
    %s44 = sadd.s32 %s43, 1
    %p47 = scmp.eq.s32.totalorder %s9, 1
    %p48 = scmp.ne.s32.totalorder %s43, %s45
    %p49 = scmp.eq.s32.totalorder %s9, 0
    %p50 = por %p48, %p49
    %p51 = scmp.ne.s32.totalorder %s43, %s45
    %p52 = scmp.eq.s32.totalorder %s14, 1
    %p53 = por %p51, %p52
    %p54 = scmp.ne.s32.totalorder %s45, %s46
    %p55 = scmp.eq.s32.totalorder %s14, 0
    %p56 = por %p54, %p55
    %p57 = scmp.ne.s32.totalorder %s45, %s46
    %p58 = scmp.eq.s32.totalorder %s15, 1
    %p59 = por %p57, %p58
    %p61 = scmp.ne.s32.totalorder %s46, %s60
    %p62 = scmp.eq.s32.totalorder %s15, 0
    %p63 = por %p61, %p62
    %s65 = sadd.s32 %s64, 1
    %p68 = scmp.eq.s32.totalorder %s9, 1
    %p69 = scmp.ne.s32.totalorder %s64, %s66
    %p70 = scmp.eq.s32.totalorder %s9, 0
    %p71 = por %p69, %p70
    %p72 = scmp.ne.s32.totalorder %s64, %s66
    %p73 = scmp.eq.s32.totalorder %s14, 1
    %p74 = por %p72, %p73
    %p75 = scmp.ne.s32.totalorder %s66, %s67
    %p76 = scmp.eq.s32.totalorder %s14, 0
    %p77 = por %p75, %p76
    %p78 = scmp.ne.s32.totalorder %s66, %s67
    %p79 = scmp.eq.s32.totalorder %s15, 1
    %p80 = por %p78, %p79
    %p82 = scmp.ne.s32.totalorder %s67, %s81
    %p83 = scmp.eq.s32.totalorder %s15, 0
    %p84 = por %p82, %p83
    %s85 = ssub.s32 %s9, %s16
    %p86 = scmp.eq.s32.totalorder %s85, 0
    %s88 = sadd.s32 %s87, 1
    %s89 = scalar_select %p86, %s87, %s88
    %p92 = pneg %p86
    %p93 = scmp.eq.s32.totalorder %s9, 1
    %p94 = por %p92, %p93
    %p95 = scmp.ne.s32.totalorder %s87, %s90
    %p96 = scmp.eq.s32.totalorder %s9, 0
    %p97 = por %p95, %p96
    %p98 = scmp.ne.s32.totalorder %s87, %s90
    %p99 = scmp.eq.s32.totalorder %s14, 1
    %p100 = por %p98, %p99
    %p101 = scmp.ne.s32.totalorder %s90, %s91
    %p102 = scmp.eq.s32.totalorder %s14, 0
    %p103 = por %p101, %p102
    %p104 = scmp.ne.s32.totalorder %s90, %s91
    %p105 = scmp.eq.s32.totalorder %s15, 1
    %p106 = por %p104, %p105
    %p108 = scmp.ne.s32.totalorder %s91, %s107
    %p109 = scmp.eq.s32.totalorder %s15, 0
    %p110 = por %p108, %p109
    %p111 = scmp.le.s32.totalorder 1, %s9
    %p112 = scmp.lt.s32.totalorder %s9, 3
    %p113 = pnand %p111, %p112
    %p114 = pneg %p113
    // Predicated region
    $region9: #{random_projection_forward.5} parent=5 // pred_check
      _
    $region10: #{random_projection_forward.5} parent=5 // pred_check_branch
      %116 = sbr.rel (%p113) target = $region12
    $region11: #{random_projection_forward.5} parent=5 // pred_region
      %s117 = ssub.s32 %s9, 1
      // Predicated region
      $region13: #{random_projection_forward.5} parent=11 // pred_check
        %p118 = pneg %p56
      $region14: #{random_projection_forward.5} parent=11 // pred_check_branch
        %120 = sbr.rel (%p118) target = $region16
      $region15: #{random_projection_forward.5} parent=11 // pred_region
        _
      $region16: #{random_projection_forward.5} parent=11 // pred_fallthru
        _
      // Predicated region
      $region17: #{random_projection_forward.5} parent=11 // pred_check
        %p121 = pneg %p77
      $region18: #{random_projection_forward.5} parent=11 // pred_check_branch
        %123 = sbr.rel (%p121) target = $region20
      $region19: #{random_projection_forward.5} parent=11 // pred_region
        _
      $region20: #{random_projection_forward.5} parent=11 // pred_fallthru
        _
    $region12: #{random_projection_forward.5} parent=5 // pred_fallthru
      _
    %p124 = scmp.lt.s32.totalorder %s9, 2
    // Predicated region
    $region21: #{random_projection_forward.5} parent=5 // pred_check
      %p125 = pneg %p124
    $region22: #{random_projection_forward.5} parent=5 // pred_check_branch
      %127 = sbr.rel (%p125) target = $region24
    $region23: #{random_projection_forward.5} parent=5 // pred_region
      // Predicated region
      $region25: #{random_projection_forward.5} parent=23 // pred_check
        %p128 = pneg %p29
      $region26: #{random_projection_forward.5} parent=23 // pred_check_branch
        %130 = sbr.rel (%p128) target = $region28
      $region27: #{random_projection_forward.5} parent=23 // pred_region
        %p131 = scmp.lt.s32.totalorder %s9, 1
        %s132 = scalar_select %p131, %s9, 1
        %s133 = smul.addr %s132, 5
        %s134 = smul.addr %s133, 8
        %s135 = scalar_lea.vmem %s0, %s134
      $region28: #{random_projection_forward.5} parent=23 // pred_fallthru
        _
    $region24: #{random_projection_forward.5} parent=5 // pred_fallthru
      _
    %p136 = scmp.le.s32.totalorder 1, %s9
    %p137 = scmp.lt.s32.totalorder %s9, 3
    %p138 = pnand %p136, %p137
    %p139 = pneg %p138
    // Predicated region
    $region29: #{random_projection_forward.5} parent=5 // pred_check
      _
    $region30: #{random_projection_forward.5} parent=5 // pred_check_branch
      %141 = sbr.rel (%p138) target = $region32
    $region31: #{random_projection_forward.5} parent=5 // pred_region
      %s142 = ssub.s32 %s9, 1
      %p143 = scmp.lt.s32.totalorder %s14, 1
      %s144 = scalar_select %p143, %s14, 1
      %s145 = smul.addr %s144, 5
      %s146 = smul.addr %s145, 8
      %s147 = scalar_lea.vmem %s0, %s146
      %p148 = pneg %p35
      %p149 = pneg %p32
      %p150 = pneg %p56
      %p151 = pneg %p53
      %p152 = pneg %p77
      %p153 = pneg %p74
      %p154 = pneg %p103
      %p155 = pneg %p100
      %p156 = scmp.lt.s32.totalorder %s14, 1
      %s157 = scalar_select %p156, %s14, 1
      %s158 = smul.addr %s157, 4
      %s159 = smul.addr %s158, 8
      %s160 = scalar_lea.vmem %s3, %s159
      %p161 = scmp.lt.s32.totalorder %s14, 1
      %s162 = scalar_select %p161, %s14, 1
      %s163 = smul.addr %s162, 5
      %s164 = smul.addr %s163, 8
      %s165 = scalar_lea.vmem %s0, %s164
      %p166 = scmp.lt.s32.totalorder %s14, 1
      %s167 = scalar_select %p166, %s14, 1
      %s168 = smul.addr %s167, 4
      %s169 = smul.addr %s168, 8
      %s170 = scalar_lea.vmem %s3, %s169
      %v171 = vld [vmem:[%s2] sm:$0x1]
      %v172 = vld [vmem:[%s165] sm:$0xff]
      %v173 = vld [vmem:[%s165 + $0x8] sm:$0xff]
      %v174 = vld [vmem:[%s165 + $0x10] sm:$0xff]
      %v175 = vld [vmem:[%s165 + $0x18] sm:$0xff]
      %s176 = scalar_lea.vmem %s165, 8
      %v177 = vld [vmem:[%s176] sm:$0xff]
      %v178 = vld [vmem:[%s176 + $0x8] sm:$0xff]
      %v179 = vld [vmem:[%s176 + $0x10] sm:$0xff]
      %v180 = vld [vmem:[%s176 + $0x18] sm:$0xff]
      %v181 = vld [vmem:[%s1] sm:$0xff]
      %v182 = vld [vmem:[%s1 + $0x8] sm:$0xff]
      %v183 = vld [vmem:[%s1 + $0x10] sm:$0xff]
      %v184 = vld [vmem:[%s1 + $0x18] sm:$0xff]
      %v185 = vld [vmem:[%s1 + $0x20] sm:$0xff]
      %v186 = vld [vmem:[%s1 + $0x28] sm:$0xff]
      %v187 = vld [vmem:[%s1 + $0x30] sm:$0xff]
      %v188 = vld [vmem:[%s1 + $0x38] sm:$0xff]
      %v189 = vld [vmem:[%s1 + $0x40] sm:$0xff]
      %v190 = vld [vmem:[%s1 + $0x48] sm:$0xff]
      %v191 = vld [vmem:[%s1 + $0x50] sm:$0xff]
      %v192 = vld [vmem:[%s1 + $0x58] sm:$0xff]
      %v193 = vld [vmem:[%s1 + $0x60] sm:$0xff]
      %v194 = vld [vmem:[%s1 + $0x68] sm:$0xff]
      %v195 = vld [vmem:[%s1 + $0x70] sm:$0xff]
      %v196 = vld [vmem:[%s1 + $0x78] sm:$0xff]
      %s197 = scalar_lea.vmem %s1, 256
      %v198 = vld [vmem:[%s197] sm:$0xff]
      %v199 = vld [vmem:[%s197 + $0x8] sm:$0xff]
      %v200 = vld [vmem:[%s197 + $0x10] sm:$0xff]
      %v201 = vld [vmem:[%s197 + $0x18] sm:$0xff]
      %v202 = vld [vmem:[%s197 + $0x20] sm:$0xff]
      %v203 = vld [vmem:[%s197 + $0x28] sm:$0xff]
      %v204 = vld [vmem:[%s197 + $0x30] sm:$0xff]
      %v205 = vld [vmem:[%s197 + $0x38] sm:$0xff]
      %v206 = vld [vmem:[%s197 + $0x40] sm:$0xff]
      %v207 = vld [vmem:[%s197 + $0x48] sm:$0xff]
      %v208 = vld [vmem:[%s197 + $0x50] sm:$0xff]
      %v209 = vld [vmem:[%s197 + $0x58] sm:$0xff]
      %v210 = vld [vmem:[%s197 + $0x60] sm:$0xff]
      %v211 = vld [vmem:[%s197 + $0x68] sm:$0xff]
      %v212 = vld [vmem:[%s197 + $0x70] sm:$0xff]
      %v213 = vld [vmem:[%s197 + $0x78] sm:$0xff]
      %214 = vmatprep.subr.mxu0 0.0
      %215 = vmatpush1.msra.mxu0 %v198
      %216 = vmatprep.subr.mxu0 0.0
      %217 = vmatpush1.msra.mxu0 %v199
      %218 = vmatprep.subr.mxu0 0.0
      %219 = vmatpush1.msra.mxu0 %v200
      %220 = vmatprep.subr.mxu0 0.0
      %221 = vmatpush1.msra.mxu0 %v201
      %222 = vmatprep.subr.mxu0 0.0
      %223 = vmatpush1.msra.mxu0 %v202
      %224 = vmatprep.subr.mxu0 0.0
      %225 = vmatpush1.msra.mxu0 %v203
      %226 = vmatprep.subr.mxu0 0.0
      %227 = vmatpush1.msra.mxu0 %v204
      %228 = vmatprep.subr.mxu0 0.0
      %229 = vmatpush1.msra.mxu0 %v205
      %230 = vmatprep.subr.mxu0 0.0
      %231 = vmatpush1.msra.mxu0 %v206
      %232 = vmatprep.subr.mxu0 0.0
      %233 = vmatpush1.msra.mxu0 %v207
      %234 = vmatprep.subr.mxu0 0.0
      %235 = vmatpush1.msra.mxu0 %v208
      %236 = vmatprep.subr.mxu0 0.0
      %237 = vmatpush1.msra.mxu0 %v209
      %238 = vmatprep.subr.mxu0 0.0
      %239 = vmatpush1.msra.mxu0 %v210
      %240 = vmatprep.subr.mxu0 0.0
      %241 = vmatpush1.msra.mxu0 %v211
      %242 = vmatprep.subr.mxu0 0.0
      %243 = vmatpush1.msra.mxu0 %v212
      %244 = vmatprep.subr.mxu0 0.0
      %245 = vmatpush1.msra.mxu0 %v213
      %246 = vmatprep.subr.mxu0 0.0
      %247 = vmatpush1.msra.mxu0 0.0
      %248 = vmatprep.subr.mxu0 0.0
      %249 = vmatpush1.msra.mxu0 0.0
      %250 = vmatprep.subr.mxu0 0.0
      %251 = vmatpush1.msra.mxu0 0.0
      %252 = vmatprep.subr.mxu0 0.0
      %253 = vmatpush1.msra.mxu0 0.0
      %254 = vmatprep.subr.mxu0 0.0
      %255 = vmatpush1.msra.mxu0 0.0
      %256 = vmatprep.subr.mxu0 0.0
      %257 = vmatpush1.msra.mxu0 0.0
      %258 = vmatprep.subr.mxu0 0.0
      %259 = vmatpush1.msra.mxu0 0.0
      %260 = vmatprep.subr.mxu0 0.0
      %261 = vmatpush1.msra.mxu0 0.0
      %262 = vmatprep.subr.mxu0 0.0
      %263 = vmatpush1.msra.mxu0 0.0
      %264 = vmatprep.subr.mxu0 0.0
      %265 = vmatpush1.msra.mxu0 0.0
      %266 = vmatprep.subr.mxu0 0.0
      %267 = vmatpush1.msra.mxu0 0.0
      %268 = vmatprep.subr.mxu0 0.0
      %269 = vmatpush1.msra.mxu0 0.0
      %270 = vmatprep.subr.mxu0 0.0
      %271 = vmatpush1.msra.mxu0 0.0
      %272 = vmatprep.subr.mxu0 0.0
      %273 = vmatpush1.msra.mxu0 0.0
      %274 = vmatprep.subr.mxu0 0.0
      %275 = vmatpush1.msra.mxu0 0.0
      %276 = vmatprep.subr.mxu0 0.0
      %277 = vmatpush1.msra.mxu0 0.0
      %278 = vmatprep.mubr.f32.mxu0 0.0
      %279 = vmatmul.mubr.f32.gmra.mrb[0].mxu0 %v177
      %v280 = vpop.f32.mrb[0].mxu0
      %v281 = vadd.f32 0.0, %v280
      %v282 = vpop.f32.mrb[0].mxu0
      %283 = vmatprep.mubr.f32.mxu0 0.0
      %284 = vmatmul.mubr.f32.gmra.mrb[0].mxu0 %v178
      %v285 = vpop.f32.mrb[0].mxu0
      %v286 = vadd.f32 0.0, %v285
      %v287 = vpop.f32.mrb[0].mxu0
      %288 = vmatprep.mubr.f32.mxu0 0.0
      %289 = vmatmul.mubr.f32.gmra.mrb[0].mxu0 %v179
      %v290 = vpop.f32.mrb[0].mxu0
      %v291 = vadd.f32 0.0, %v290
      %v292 = vpop.f32.mrb[0].mxu0
      %293 = vmatprep.mubr.f32.mxu0 0.0
      %294 = vmatmul.mubr.f32.gmra.mrb[0].mxu0 %v180
      %v295 = vpop.f32.mrb[0].mxu0
      %v296 = vadd.f32 0.0, %v295
      %v297 = vpop.f32.mrb[0].mxu0
      %298 = vdwg.mxu0
      %299 = vmatprep.subr.mxu0 0.0
      %300 = vmatpush1.msra.mxu0 %v181
      %301 = vmatprep.subr.mxu0 0.0
      %302 = vmatpush1.msra.mxu0 %v182
      %303 = vmatprep.subr.mxu0 0.0
      %304 = vmatpush1.msra.mxu0 %v183
      %305 = vmatprep.subr.mxu0 0.0
      %306 = vmatpush1.msra.mxu0 %v184
      %307 = vmatprep.subr.mxu0 0.0
      %308 = vmatpush1.msra.mxu0 %v185
      %309 = vmatprep.subr.mxu0 0.0
      %310 = vmatpush1.msra.mxu0 %v186
      %311 = vmatprep.subr.mxu0 0.0
      %312 = vmatpush1.msra.mxu0 %v187
      %313 = vmatprep.subr.mxu0 0.0
      %314 = vmatpush1.msra.mxu0 %v188
      %315 = vmatprep.subr.mxu0 0.0
      %316 = vmatpush1.msra.mxu0 %v189
      %317 = vmatprep.subr.mxu0 0.0
      %318 = vmatpush1.msra.mxu0 %v190
      %319 = vmatprep.subr.mxu0 0.0
      %320 = vmatpush1.msra.mxu0 %v191
      %321 = vmatprep.subr.mxu0 0.0
      %322 = vmatpush1.msra.mxu0 %v192
      %323 = vmatprep.subr.mxu0 0.0
      %324 = vmatpush1.msra.mxu0 %v193
      %325 = vmatprep.subr.mxu0 0.0
      %326 = vmatpush1.msra.mxu0 %v194
      %327 = vmatprep.subr.mxu0 0.0
      %328 = vmatpush1.msra.mxu0 %v195
      %329 = vmatprep.subr.mxu0 0.0
      %330 = vmatpush1.msra.mxu0 %v196
      %331 = vmatprep.subr.mxu0 0.0
      %332 = vmatpush1.msra.mxu0 0.0
      %333 = vmatprep.subr.mxu0 0.0
      %334 = vmatpush1.msra.mxu0 0.0
      %335 = vmatprep.subr.mxu0 0.0
      %336 = vmatpush1.msra.mxu0 0.0
      %337 = vmatprep.subr.mxu0 0.0
      %338 = vmatpush1.msra.mxu0 0.0
      %339 = vmatprep.subr.mxu0 0.0
      %340 = vmatpush1.msra.mxu0 0.0
      %341 = vmatprep.subr.mxu0 0.0
      %342 = vmatpush1.msra.mxu0 0.0
      %343 = vmatprep.subr.mxu0 0.0
      %344 = vmatpush1.msra.mxu0 0.0
      %345 = vmatprep.subr.mxu0 0.0
      %346 = vmatpush1.msra.mxu0 0.0
      %347 = vmatprep.subr.mxu0 0.0
      %348 = vmatpush1.msra.mxu0 0.0
      %349 = vmatprep.subr.mxu0 0.0
      %350 = vmatpush1.msra.mxu0 0.0
      %351 = vmatprep.subr.mxu0 0.0
      %352 = vmatpush1.msra.mxu0 0.0
      %353 = vmatprep.subr.mxu0 0.0
      %354 = vmatpush1.msra.mxu0 0.0
      %355 = vmatprep.subr.mxu0 0.0
      %356 = vmatpush1.msra.mxu0 0.0
      %357 = vmatprep.subr.mxu0 0.0
      %358 = vmatpush1.msra.mxu0 0.0
      %359 = vmatprep.subr.mxu0 0.0
      %360 = vmatpush1.msra.mxu0 0.0
      %361 = vmatprep.subr.mxu0 0.0
      %362 = vmatpush1.msra.mxu0 0.0
      %363 = vmatprep.mubr.f32.mxu0 0.0
      %364 = vmatmul.mubr.f32.gmra.mrb[0].mxu0 %v172
      %v365 = vpop.f32.mrb[0].mxu0
      %v366 = vadd.f32 %v281, %v365
      %v367 = vpop.f32.mrb[0].mxu0
      %368 = vmatprep.mubr.f32.mxu0 0.0
      %369 = vmatmul.mubr.f32.gmra.mrb[0].mxu0 %v173
      %v370 = vpop.f32.mrb[0].mxu0
      %v371 = vadd.f32 %v286, %v370
      %v372 = vpop.f32.mrb[0].mxu0
      %373 = vmatprep.mubr.f32.mxu0 0.0
      %374 = vmatmul.mubr.f32.gmra.mrb[0].mxu0 %v174
      %v375 = vpop.f32.mrb[0].mxu0
      %v376 = vadd.f32 %v291, %v375
      %v377 = vpop.f32.mrb[0].mxu0
      %378 = vmatprep.mubr.f32.mxu0 0.0
      %379 = vmatmul.mubr.f32.gmra.mrb[0].mxu0 %v175
      %v380 = vpop.f32.mrb[0].mxu0
      %v381 = vadd.f32 %v296, %v380
      %v382 = vpop.f32.mrb[0].mxu0
      %383 = vdwg.mxu0
      %s384 = scalar_lea.vmem %s1, 128
      %v385 = vld [vmem:[%s384] sm:$0xff]
      %v386 = vld [vmem:[%s384 + $0x8] sm:$0xff]
      %v387 = vld [vmem:[%s384 + $0x10] sm:$0xff]
      %v388 = vld [vmem:[%s384 + $0x18] sm:$0xff]
      %v389 = vld [vmem:[%s384 + $0x20] sm:$0xff]
      %v390 = vld [vmem:[%s384 + $0x28] sm:$0xff]
      %v391 = vld [vmem:[%s384 + $0x30] sm:$0xff]
      %v392 = vld [vmem:[%s384 + $0x38] sm:$0xff]
      %v393 = vld [vmem:[%s384 + $0x40] sm:$0xff]
      %v394 = vld [vmem:[%s384 + $0x48] sm:$0xff]
      %v395 = vld [vmem:[%s384 + $0x50] sm:$0xff]
      %v396 = vld [vmem:[%s384 + $0x58] sm:$0xff]
      %v397 = vld [vmem:[%s384 + $0x60] sm:$0xff]
      %v398 = vld [vmem:[%s384 + $0x68] sm:$0xff]
      %v399 = vld [vmem:[%s384 + $0x70] sm:$0xff]
      %v400 = vld [vmem:[%s384 + $0x78] sm:$0xff]
      %s401 = scalar_lea.vmem %s1, 384
      %v402 = vld [vmem:[%s401] sm:$0xff]
      %v403 = vld [vmem:[%s401 + $0x8] sm:$0xff]
      %v404 = vld [vmem:[%s401 + $0x10] sm:$0xff]
      %v405 = vld [vmem:[%s401 + $0x18] sm:$0xff]
      %v406 = vld [vmem:[%s401 + $0x20] sm:$0xff]
      %v407 = vld [vmem:[%s401 + $0x28] sm:$0xff]
      %v408 = vld [vmem:[%s401 + $0x30] sm:$0xff]
      %v409 = vld [vmem:[%s401 + $0x38] sm:$0xff]
      %v410 = vld [vmem:[%s401 + $0x40] sm:$0xff]
      %v411 = vld [vmem:[%s401 + $0x48] sm:$0xff]
      %v412 = vld [vmem:[%s401 + $0x50] sm:$0xff]
      %v413 = vld [vmem:[%s401 + $0x58] sm:$0xff]
      %v414 = vld [vmem:[%s401 + $0x60] sm:$0xff]
      %v415 = vld [vmem:[%s401 + $0x68] sm:$0xff]
      %v416 = vld [vmem:[%s401 + $0x70] sm:$0xff]
      %v417 = vld [vmem:[%s401 + $0x78] sm:$0xff]
      %418 = vmatprep.subr.mxu0 0.0
      %419 = vmatpush1.msra.mxu0 %v402
      %420 = vmatprep.subr.mxu0 0.0
      %421 = vmatpush1.msra.mxu0 %v403
      %422 = vmatprep.subr.mxu0 0.0
      %423 = vmatpush1.msra.mxu0 %v404
      %424 = vmatprep.subr.mxu0 0.0
      %425 = vmatpush1.msra.mxu0 %v405
      %426 = vmatprep.subr.mxu0 0.0
      %427 = vmatpush1.msra.mxu0 %v406
      %428 = vmatprep.subr.mxu0 0.0
      %429 = vmatpush1.msra.mxu0 %v407
      %430 = vmatprep.subr.mxu0 0.0
      %431 = vmatpush1.msra.mxu0 %v408
      %432 = vmatprep.subr.mxu0 0.0
      %433 = vmatpush1.msra.mxu0 %v409
      %434 = vmatprep.subr.mxu0 0.0
      %435 = vmatpush1.msra.mxu0 %v410
      %436 = vmatprep.subr.mxu0 0.0
      %437 = vmatpush1.msra.mxu0 %v411
      %438 = vmatprep.subr.mxu0 0.0
      %439 = vmatpush1.msra.mxu0 %v412
      %440 = vmatprep.subr.mxu0 0.0
      %441 = vmatpush1.msra.mxu0 %v413
      %442 = vmatprep.subr.mxu0 0.0
      %443 = vmatpush1.msra.mxu0 %v414
      %444 = vmatprep.subr.mxu0 0.0
      %445 = vmatpush1.msra.mxu0 %v415
      %446 = vmatprep.subr.mxu0 0.0
      %447 = vmatpush1.msra.mxu0 %v416
      %448 = vmatprep.subr.mxu0 0.0
      %449 = vmatpush1.msra.mxu0 %v417
      %450 = vmatprep.subr.mxu0 0.0
      %451 = vmatpush1.msra.mxu0 0.0
      %452 = vmatprep.subr.mxu0 0.0
      %453 = vmatpush1.msra.mxu0 0.0
      %454 = vmatprep.subr.mxu0 0.0
      %455 = vmatpush1.msra.mxu0 0.0
      %456 = vmatprep.subr.mxu0 0.0
      %457 = vmatpush1.msra.mxu0 0.0
      %458 = vmatprep.subr.mxu0 0.0
      %459 = vmatpush1.msra.mxu0 0.0
      %460 = vmatprep.subr.mxu0 0.0
      %461 = vmatpush1.msra.mxu0 0.0
      %462 = vmatprep.subr.mxu0 0.0
      %463 = vmatpush1.msra.mxu0 0.0
      %464 = vmatprep.subr.mxu0 0.0
      %465 = vmatpush1.msra.mxu0 0.0
      %466 = vmatprep.subr.mxu0 0.0
      %467 = vmatpush1.msra.mxu0 0.0
      %468 = vmatprep.subr.mxu0 0.0
      %469 = vmatpush1.msra.mxu0 0.0
      %470 = vmatprep.subr.mxu0 0.0
      %471 = vmatpush1.msra.mxu0 0.0
      %472 = vmatprep.subr.mxu0 0.0
      %473 = vmatpush1.msra.mxu0 0.0
      %474 = vmatprep.subr.mxu0 0.0
      %475 = vmatpush1.msra.mxu0 0.0
      %476 = vmatprep.subr.mxu0 0.0
      %477 = vmatpush1.msra.mxu0 0.0
      %478 = vmatprep.subr.mxu0 0.0
      %479 = vmatpush1.msra.mxu0 0.0
      %480 = vmatprep.subr.mxu0 0.0
      %481 = vmatpush1.msra.mxu0 0.0
      %482 = vmatprep.mubr.f32.mxu0 0.0
      %483 = vmatmul.mubr.f32.gmra.mrb[0].mxu0 %v177
      %v484 = vpop.f32.mrb[0].mxu0
      %v485 = vadd.f32 0.0, %v484
      %v486 = vpop.f32.mrb[0].mxu0
      %487 = vmatprep.mubr.f32.mxu0 0.0
      %488 = vmatmul.mubr.f32.gmra.mrb[0].mxu0 %v178
      %v489 = vpop.f32.mrb[0].mxu0
      %v490 = vadd.f32 0.0, %v489
      %v491 = vpop.f32.mrb[0].mxu0
      %492 = vmatprep.mubr.f32.mxu0 0.0
      %493 = vmatmul.mubr.f32.gmra.mrb[0].mxu0 %v179
      %v494 = vpop.f32.mrb[0].mxu0
      %v495 = vadd.f32 0.0, %v494
      %v496 = vpop.f32.mrb[0].mxu0
      %497 = vmatprep.mubr.f32.mxu0 0.0
      %498 = vmatmul.mubr.f32.gmra.mrb[0].mxu0 %v180
      %v499 = vpop.f32.mrb[0].mxu0
      %v500 = vadd.f32 0.0, %v499
      %v501 = vpop.f32.mrb[0].mxu0
      %502 = vdwg.mxu0
      %503 = vmatprep.subr.mxu0 0.0
      %504 = vmatpush1.msra.mxu0 %v385
      %505 = vmatprep.subr.mxu0 0.0
      %506 = vmatpush1.msra.mxu0 %v386
      %507 = vmatprep.subr.mxu0 0.0
      %508 = vmatpush1.msra.mxu0 %v387
      %509 = vmatprep.subr.mxu0 0.0
      %510 = vmatpush1.msra.mxu0 %v388
      %511 = vmatprep.subr.mxu0 0.0
      %512 = vmatpush1.msra.mxu0 %v389
      %513 = vmatprep.subr.mxu0 0.0
      %514 = vmatpush1.msra.mxu0 %v390
      %515 = vmatprep.subr.mxu0 0.0
      %516 = vmatpush1.msra.mxu0 %v391
      %517 = vmatprep.subr.mxu0 0.0
      %518 = vmatpush1.msra.mxu0 %v392
      %519 = vmatprep.subr.mxu0 0.0
      %520 = vmatpush1.msra.mxu0 %v393
      %521 = vmatprep.subr.mxu0 0.0
      %522 = vmatpush1.msra.mxu0 %v394
      %523 = vmatprep.subr.mxu0 0.0
      %524 = vmatpush1.msra.mxu0 %v395
      %525 = vmatprep.subr.mxu0 0.0
      %526 = vmatpush1.msra.mxu0 %v396
      %527 = vmatprep.subr.mxu0 0.0
      %528 = vmatpush1.msra.mxu0 %v397
      %529 = vmatprep.subr.mxu0 0.0
      %530 = vmatpush1.msra.mxu0 %v398
      %531 = vmatprep.subr.mxu0 0.0
      %532 = vmatpush1.msra.mxu0 %v399
      %533 = vmatprep.subr.mxu0 0.0
      %534 = vmatpush1.msra.mxu0 %v400
      %535 = vmatprep.subr.mxu0 0.0
      %536 = vmatpush1.msra.mxu0 0.0
      %537 = vmatprep.subr.mxu0 0.0
      %538 = vmatpush1.msra.mxu0 0.0
      %539 = vmatprep.subr.mxu0 0.0
      %540 = vmatpush1.msra.mxu0 0.0
      %541 = vmatprep.subr.mxu0 0.0
      %542 = vmatpush1.msra.mxu0 0.0
      %543 = vmatprep.subr.mxu0 0.0
      %544 = vmatpush1.msra.mxu0 0.0
      %545 = vmatprep.subr.mxu0 0.0
      %546 = vmatpush1.msra.mxu0 0.0
      %547 = vmatprep.subr.mxu0 0.0
      %548 = vmatpush1.msra.mxu0 0.0
      %549 = vmatprep.subr.mxu0 0.0
      %550 = vmatpush1.msra.mxu0 0.0
      %551 = vmatprep.subr.mxu0 0.0
      %552 = vmatpush1.msra.mxu0 0.0
      %553 = vmatprep.subr.mxu0 0.0
      %554 = vmatpush1.msra.mxu0 0.0
      %555 = vmatprep.subr.mxu0 0.0
      %556 = vmatpush1.msra.mxu0 0.0
      %557 = vmatprep.subr.mxu0 0.0
      %558 = vmatpush1.msra.mxu0 0.0
      %559 = vmatprep.subr.mxu0 0.0
      %560 = vmatpush1.msra.mxu0 0.0
      %561 = vmatprep.subr.mxu0 0.0
      %562 = vmatpush1.msra.mxu0 0.0
      %563 = vmatprep.subr.mxu0 0.0
      %564 = vmatpush1.msra.mxu0 0.0
      %565 = vmatprep.subr.mxu0 0.0
      %566 = vmatpush1.msra.mxu0 0.0
      %567 = vmatprep.mubr.f32.mxu0 0.0
      %568 = vmatmul.mubr.f32.gmra.mrb[0].mxu0 %v172
      %v569 = vpop.f32.mrb[0].mxu0
      %v570 = vadd.f32 %v485, %v569
      %v571 = vpop.f32.mrb[0].mxu0
      %572 = vmatprep.mubr.f32.mxu0 0.0
      %573 = vmatmul.mubr.f32.gmra.mrb[0].mxu0 %v173
      %v574 = vpop.f32.mrb[0].mxu0
      %v575 = vadd.f32 %v490, %v574
      %v576 = vpop.f32.mrb[0].mxu0
      %577 = vmatprep.mubr.f32.mxu0 0.0
      %578 = vmatmul.mubr.f32.gmra.mrb[0].mxu0 %v174
      %v579 = vpop.f32.mrb[0].mxu0
      %v580 = vadd.f32 %v495, %v579
      %v581 = vpop.f32.mrb[0].mxu0
      %582 = vmatprep.mubr.f32.mxu0 0.0
      %583 = vmatmul.mubr.f32.gmra.mrb[0].mxu0 %v175
      %v584 = vpop.f32.mrb[0].mxu0
      %v585 = vadd.f32 %v500, %v584
      %v586 = vpop.f32.mrb[0].mxu0
      %587 = vdwg.mxu0
      %v588 = vrot.slane %v570, 1
      %v589 = vrot.slane %v575, 1
      %v590 = vrot.slane %v580, 1
      %v591 = vrot.slane %v585, 1
      %v592 = vlaneseq
      %v593 = vshrl.u32 %v592, 7
      %vm594 = vcmp.lt.s32.totalorder %v593, 7
      %v595 = vsel %vm594, %v590, %v591
      %v596 = vsel %vm594, %v589, %v590
      %v597 = vsel %vm594, %v588, %v589
      %v598 = vsel %vm594, %v591, %v588
      %v599 = vadd.f32 %v366, %v597
      %v600 = vadd.f32 %v371, %v596
      %v601 = vadd.f32 %v376, %v595
      %v602 = vadd.f32 %v381, %v598
      %v604 = vlaneseq
      %v605 = vshrl.u32 %v604, 7
      %v606 = vsub.s32 0, %v605
      %v607 = vrot.slane %v171, %v606
      %v609 = vadd.f32 %v599, %v607
      %v610 = vadd.f32 %v600, %v607
      %v611 = vadd.f32 %v601, %v607
      %v612 = vadd.f32 %v602, %v607
      %v613 = vmax.f32 %v609, 0.0
      %v614 = vmax.f32 %v610, 0.0
      %v615 = vmax.f32 %v611, 0.0
      %v616 = vmax.f32 %v612, 0.0
      %617 = vst [vmem:[%s170] sm:$0xff] %v613
      %618 = vst [vmem:[%s170 + $0x8] sm:$0xff] %v614
      %619 = vst [vmem:[%s170 + $0x10] sm:$0xff] %v615
      %620 = vst [vmem:[%s170 + $0x18] sm:$0xff] %v616
      %p621 = scmp.lt.s32.totalorder %s14, 1
      %s622 = scalar_select %p621, %s14, 1
      %s623 = smul.addr %s622, 4
      %s624 = smul.addr %s623, 8
      %s625 = scalar_lea.vmem %s3, %s624
      // Predicated region
      $region33: #{random_projection_forward.5} parent=31 // pred_check
        %p626 = pneg %p100
      $region34: #{random_projection_forward.5} parent=31 // pred_check_branch
        %628 = sbr.rel (%p626) target = $region36
      $region35: #{random_projection_forward.5} parent=31 // pred_region
        _
      $region36: #{random_projection_forward.5} parent=31 // pred_fallthru
        _
    $region32: #{random_projection_forward.5} parent=5 // pred_fallthru
      _
    %p629 = scmp.le.s32.totalorder 2, %s9
    // Predicated region
    $region37: #{random_projection_forward.5} parent=5 // pred_check
      %p630 = pneg %p629
    $region38: #{random_projection_forward.5} parent=5 // pred_check_branch
      %632 = sbr.rel (%p630) target = $region40
    $region39: #{random_projection_forward.5} parent=5 // pred_region
      %s633 = ssub.s32 %s9, 2
      // Predicated region
      $region41: #{random_projection_forward.5} parent=39 // pred_check
        %p634 = pneg %p106
      $region42: #{random_projection_forward.5} parent=39 // pred_check_branch
        %636 = sbr.rel (%p634) target = $region44
      $region43: #{random_projection_forward.5} parent=39 // pred_region
        %p637 = scmp.lt.s32.totalorder %s15, 1
        %s638 = scalar_select %p637, %s15, 1
        %s639 = smul.addr %s638, 4
        %s640 = smul.addr %s639, 8
        %s641 = scalar_lea.vmem %s3, %s640
      $region44: #{random_projection_forward.5} parent=39 // pred_fallthru
        _
    $region40: #{random_projection_forward.5} parent=5 // pred_fallthru
      _
  $region6: #{random_projection_forward.5} parent=0 // loop_footer
    %s13 = sadd.s32 1, %s9
  $region7: #{random_projection_forward.5} parent=0 // loop_footer_branch
    %8 = sbr.rel target = $region3
  $region8: #{random_projection_forward.5} parent=0 // loop_exit
    _

</llo_original>
